<compile_context>
chip_gen: v6e
topology: v6e:2x2x1
jax: 0.10.0
libtpu: 0.0.40
codegen_flags: <defaults>
</compile_context>

<pallas_src>
import jax
import jax.numpy as jnp
import numpy as np
from jax import lax
from jax.experimental import pallas as pl
from jax.experimental.pallas import tpu as pltpu

GP = 128  # one lane group: padded per-gate / per-direction feature width


def sequential_lstm(x, w_ih, w_hh, b_ih, b_hh):
    """Equivalent of SequentialLSTM.forward (batch_first=True, bidirectional=True).

    x:            (B, T, I)
    w_ih / w_hh:  (2, 4H, I) / (2, 4H, H)   PyTorch weight_ih_l0 / weight_hh_l0 layout
    b_ih / b_hh:  (2, 4H)                   gate order i, f, g, o; dir 0 = fwd, 1 = reverse
    returns:      (B, T, 2H)
    """
    B, T, I = x.shape
    H = w_hh.shape[-1]
    assert H <= GP
    f32 = jnp.float32
    Bp = ((B + 7) // 8) * 8            # fill f32 sublanes; aligned per-step row blocks

    # ---- wrapper-side repacking (plain XLA) ---------------------------------
    x_tbi = jnp.transpose(x, (1, 0, 2)).astype(f32)          # (T, B, I) time-major
    x_tbi = jnp.pad(x_tbi, ((0, 0), (0, Bp - B), (0, 0)))    # (T, Bp, I)
    x_flat = x_tbi.reshape(T * Bp, I)                        # row block s = timestep s

    def pack_in(w, b_sum):
        # (4H, I), (4H,) -> (I, 4*GP), (1, 4*GP); gate blocks [i|f|g|o], each padded to 128 lanes
        w_t = jnp.transpose(w, (1, 0)).reshape(I, 4, H).astype(f32)
        w_p = jnp.pad(w_t, ((0, 0), (0, 0), (0, GP - H))).reshape(I, 4 * GP)
        b_p = jnp.pad(b_sum.reshape(4, H).astype(f32),
                      ((0, 0), (0, GP - H))).reshape(1, 4 * GP)
        return w_p, b_p

    wi_f, bias_f = pack_in(w_ih[0], b_ih[0] + b_hh[0])
    wi_b, bias_b = pack_in(w_ih[1], b_ih[1] + b_hh[1])

    def pack_rec(w):
        # (4H, H) -> (GP, 4*GP): rows 0:H carry h, pad rows/lanes are zero
        w_t = jnp.transpose(w, (1, 0)).reshape(H, 4, H).astype(f32)
        return jnp.pad(w_t, ((0, GP - H), (0, 0), (0, GP - H))).reshape(GP, 4 * GP)

    w_rec_f = pack_rec(w_hh[0])
    w_rec_b = pack_rec(w_hh[1])

    # ---- kernel --------------------------------------------------------------
    def kernel(x_ref, wif_ref, wib_ref, wrf_ref, wrb_ref, bf_ref, bb_ref,
               out_f_ref, out_b_ref, xgf_ref, xgb_ref):
        # Hoisted input projection (all timesteps, both directions), bias folded in.
        # Pad lanes get pre-activation 0 -> sigmoid=0.5 / tanh=0 -> h,c pad lanes stay 0.
        xgf_ref[...] = (jnp.dot(x_ref[...], wif_ref[...],
                                preferred_element_type=jnp.float32) + bf_ref[...])
        xgb_ref[...] = (jnp.dot(x_ref[...], wib_ref[...],
                                preferred_element_type=jnp.float32) + bb_ref[...])
        w_f = wrf_ref[...]                                    # (GP, 4*GP), loaded once
        w_b = wrb_ref[...]

        def cell(pre, c):                                     # pre: (Bp, 4*GP), lane-group aligned slices
            i = jax.nn.sigmoid(pre[:, 0 * GP:1 * GP])
            f = jax.nn.sigmoid(pre[:, 1 * GP:2 * GP])
            g = jnp.tanh(pre[:, 2 * GP:3 * GP])
            o = jax.nn.sigmoid(pre[:, 3 * GP:4 * GP])
            c = f * c + i * g
            h = o * jnp.tanh(c)
            return h, c

        def step(s, carry):
            h_f, c_f, h_b, c_b = carry                        # each (Bp, GP); lanes 0:H live
            row_f = pl.multiple_of(s * Bp, Bp)                # fwd reads/writes time s
            row_b = pl.multiple_of((T - 1 - s) * Bp, Bp)      # bwd reads/writes time T-1-s
            pre_f = xgf_ref[pl.ds(row_f, Bp), :] + jnp.dot(
                h_f, w_f, preferred_element_type=jnp.float32)
            pre_b = xgb_ref[pl.ds(row_b, Bp), :] + jnp.dot(
                h_b, w_b, preferred_element_type=jnp.float32)
            h_f, c_f = cell(pre_f, c_f)
            h_b, c_b = cell(pre_b, c_b)
            out_f_ref[pl.ds(row_f, Bp), :] = h_f              # full 128-lane, 8-sublane store
            out_b_ref[pl.ds(row_b, Bp), :] = h_b              # written at un-reversed time
            return h_f, c_f, h_b, c_b

        z = jnp.zeros((Bp, GP), jnp.float32)
        lax.fori_loop(0, T, step, (z, z, z, z), unroll=True)  # T=8: full unroll is fine

    out_f, out_b = pl.pallas_call(
        kernel,
        out_shape=(jax.ShapeDtypeStruct((T * Bp, GP), f32),
                   jax.ShapeDtypeStruct((T * Bp, GP), f32)),
        in_specs=[pl.BlockSpec(memory_space=pltpu.MemorySpace.VMEM)] * 7,
        out_specs=(pl.BlockSpec(memory_space=pltpu.MemorySpace.VMEM),
                   pl.BlockSpec(memory_space=pltpu.MemorySpace.VMEM)),
        scratch_shapes=[pltpu.VMEM((T * Bp, 4 * GP), jnp.float32),
                        pltpu.VMEM((T * Bp, 4 * GP), jnp.float32)],
    )(x_flat, wi_f, wi_b, w_rec_f, w_rec_b, bias_f, bias_b)

    out_f = out_f.reshape(T, Bp, GP)[:, :B, :H]               # strip batch / lane padding
    out_b = out_b.reshape(T, Bp, GP)[:, :B, :H]
    out = jnp.concatenate([out_f, out_b], axis=-1)            # (T, B, 2H)
    return jnp.transpose(out, (1, 0, 2))                      # (B, T, 2H)


def lstm_reference(x, w_ih, w_hh, b_ih, b_hh):
    """Pure-JAX reference implementing PyTorch's bidirectional LSTM semantics."""
    B, T, I = x.shape
    H = w_hh.shape[-1]

    def run(d, xs):
        def step(carry, x_t):
            h, c = carry
            gates = x_t @ w_ih[d].T + h @ w_hh[d].T + b_ih[d] + b_hh[d]
            i, f, g, o = jnp.split(gates, 4, axis=-1)
            i = jax.nn.sigmoid(i)
            f = jax.nn.sigmoid(f)
            g = jnp.tanh(g)
            o = jax.nn.sigmoid(o)
            c = f * c + i * g
            h = o * jnp.tanh(c)
            return (h, c), h

        init = (jnp.zeros((B, H), jnp.float32), jnp.zeros((B, H), jnp.float32))
        _, hs = lax.scan(step, init, xs)   # (T, B, H)
        return hs

    xs = jnp.transpose(x, (1, 0, 2))
    h_fwd = run(0, xs)
    h_bwd = run(1, xs[::-1])[::-1]
    out = jnp.concatenate([h_fwd, h_bwd], axis=-1)
    return jnp.transpose(out, (1, 0, 2))


if __name__ == "__main__":
    # SequentialLSTM(in_channels=8, out_channels=32, bidirectional=True)
    #   -> nn.LSTM(input_size=8, hidden_size=16, batch_first=True, bidirectional=True)
    B, T, IN_CH, OUT_CH = 2, 8, 8, 32
    H = OUT_CH // 2

    key = jax.random.PRNGKey(0)
    ks = jax.random.split(key, 9)
    bound = float(1.0 / (H ** 0.5))

    def u(k, shape):
        return jax.random.uniform(k, shape, jnp.float32, -bound, bound)

    # PyTorch parameter shapes: weight_ih_l0[_reverse] (4H, I), weight_hh_l0[_reverse] (4H, H),
    # bias_ih_l0[_reverse] (4H,), bias_hh_l0[_reverse] (4H,); gate order i, f, g, o.
    w_ih = jnp.stack([u(ks[0], (4 * H, IN_CH)), u(ks[1], (4 * H, IN_CH))])
    w_hh = jnp.stack([u(ks[2], (4 * H, H)), u(ks[3], (4 * H, H))])
    b_ih = jnp.stack([u(ks[4], (4 * H,)), u(ks[5], (4 * H,))])
    b_hh = jnp.stack([u(ks[6], (4 * H,)), u(ks[7], (4 * H,))])
    x = jax.random.normal(ks[8], (B, T, IN_CH), jnp.float32)

    out = sequential_lstm(x, w_ih, w_hh, b_ih, b_hh)
    out = jax.block_until_ready(out)
    assert out.shape == (B, T, OUT_CH)

    ref = lstm_reference(x, w_ih, w_hh, b_ih, b_hh)
    np.testing.assert_allclose(np.asarray(out), np.asarray(ref), rtol=1e-4, atol=1e-4)
    print("KERNEL_OK")
</pallas_src>

<mosaic_0001>
module attributes {stable_mosaic.version = 11 : i64} {
  func.func @kernel(%arg0: memref<64x8xf32, #tpu.memory_space<vmem>>, %arg1: memref<8x512xf32, #tpu.memory_space<vmem>>, %arg2: memref<8x512xf32, #tpu.memory_space<vmem>>, %arg3: memref<128x512xf32, #tpu.memory_space<vmem>>, %arg4: memref<128x512xf32, #tpu.memory_space<vmem>>, %arg5: memref<1x512xf32, #tpu.memory_space<vmem>>, %arg6: memref<1x512xf32, #tpu.memory_space<vmem>>, %arg7: memref<64x128xf32, #tpu.memory_space<vmem>>, %arg8: memref<64x128xf32, #tpu.memory_space<vmem>>, %arg9: memref<64x512xf32, #tpu.memory_space<vmem>>, %arg10: memref<64x512xf32, #tpu.memory_space<vmem>>) attributes {dimension_semantics = [], scalar_prefetch = 0 : i64, scratch_operands = 2 : i64, tpu.core_type = #tpu.core_type<tc>} {
    %c0 = arith.constant 0 : index
    %c0_0 = arith.constant 0 : index
    %0 = vector.load %arg0[%c0, %c0_0] : memref<64x8xf32, #tpu.memory_space<vmem>>, vector<64x8xf32>
    %c0_1 = arith.constant 0 : index
    %c0_2 = arith.constant 0 : index
    %1 = vector.load %arg1[%c0_1, %c0_2] : memref<8x512xf32, #tpu.memory_space<vmem>>, vector<8x512xf32>
    %cst = arith.constant dense<0.000000e+00> : vector<64x512xf32>
    %2 = tpu.matmul %0, %1, %cst {dimension_numbers = #tpu.dot_dimension_numbers<[1], [0], [0], [1], [0, 0, 1, 1], [], []>} : vector<64x8xf32>, vector<8x512xf32>, vector<64x512xf32> -> vector<64x512xf32>
    %c0_3 = arith.constant 0 : index
    %c0_4 = arith.constant 0 : index
    %3 = vector.load %arg5[%c0_3, %c0_4] : memref<1x512xf32, #tpu.memory_space<vmem>>, vector<1x512xf32>
    %4 = vector.broadcast %3 : vector<1x512xf32> to vector<64x512xf32>
    %5 = arith.addf %2, %4 : vector<64x512xf32>
    %c0_5 = arith.constant 0 : index
    %c0_6 = arith.constant 0 : index
    %6 = vector.load %arg9[%c0_5, %c0_6] : memref<64x512xf32, #tpu.memory_space<vmem>>, vector<64x512xf32>
    tpu.vector_store %arg9[%c0_5, %c0_6], %5 {strides = array<i32>} : memref<64x512xf32, #tpu.memory_space<vmem>>, vector<64x512xf32>,
    %c0_7 = arith.constant 0 : index
    %c0_8 = arith.constant 0 : index
    %7 = vector.load %arg0[%c0_7, %c0_8] : memref<64x8xf32, #tpu.memory_space<vmem>>, vector<64x8xf32>
    %c0_9 = arith.constant 0 : index
    %c0_10 = arith.constant 0 : index
    %8 = vector.load %arg2[%c0_9, %c0_10] : memref<8x512xf32, #tpu.memory_space<vmem>>, vector<8x512xf32>
    %cst_11 = arith.constant dense<0.000000e+00> : vector<64x512xf32>
    %9 = tpu.matmul %7, %8, %cst_11 {dimension_numbers = #tpu.dot_dimension_numbers<[1], [0], [0], [1], [0, 0, 1, 1], [], []>} : vector<64x8xf32>, vector<8x512xf32>, vector<64x512xf32> -> vector<64x512xf32>
    %c0_12 = arith.constant 0 : index
    %c0_13 = arith.constant 0 : index
    %10 = vector.load %arg6[%c0_12, %c0_13] : memref<1x512xf32, #tpu.memory_space<vmem>>, vector<1x512xf32>
    %11 = vector.broadcast %10 : vector<1x512xf32> to vector<64x512xf32>
    %12 = arith.addf %9, %11 : vector<64x512xf32>
    %c0_14 = arith.constant 0 : index
    %c0_15 = arith.constant 0 : index
    %13 = vector.load %arg10[%c0_14, %c0_15] : memref<64x512xf32, #tpu.memory_space<vmem>>, vector<64x512xf32>
    tpu.vector_store %arg10[%c0_14, %c0_15], %12 {strides = array<i32>} : memref<64x512xf32, #tpu.memory_space<vmem>>, vector<64x512xf32>,
    %c0_16 = arith.constant 0 : index
    %c0_17 = arith.constant 0 : index
    %14 = vector.load %arg3[%c0_16, %c0_17] : memref<128x512xf32, #tpu.memory_space<vmem>>, vector<128x512xf32>
    %c0_18 = arith.constant 0 : index
    %c0_19 = arith.constant 0 : index
    %15 = vector.load %arg4[%c0_18, %c0_19] : memref<128x512xf32, #tpu.memory_space<vmem>>, vector<128x512xf32>
    %cst_20 = arith.constant 0.000000e+00 : f32
    %16 = vector.broadcast %cst_20 : f32 to vector<8x128xf32>
    %c0_i32 = arith.constant 0 : i32
    %c8_i32 = arith.constant 8 : i32
    %17 = arith.muli %c0_i32, %c8_i32 : i32
    %18 = tpu.assume_multiple %17, 8 : i32
    %c7_i32 = arith.constant 7 : i32
    %19 = arith.subi %c7_i32, %c0_i32 : i32
    %c8_i32_21 = arith.constant 8 : i32
    %20 = arith.muli %19, %c8_i32_21 : i32
    %21 = tpu.assume_multiple %20, 8 : i32
    %22 = arith.index_cast %18 : i32 to index
    %c0_22 = arith.constant 0 : index
    %23 = vector.load %arg9[%22, %c0_22] : memref<64x512xf32, #tpu.memory_space<vmem>>, vector<8x512xf32>
    %cst_23 = arith.constant dense<0.000000e+00> : vector<8x512xf32>
    %24 = tpu.matmul %16, %14, %cst_23 {dimension_numbers = #tpu.dot_dimension_numbers<[1], [0], [0], [1], [0, 0, 1, 1], [], []>} : vector<8x128xf32>, vector<128x512xf32>, vector<8x512xf32> -> vector<8x512xf32>
    %25 = arith.addf %23, %24 : vector<8x512xf32>
    %26 = arith.index_cast %21 : i32 to index
    %c0_24 = arith.constant 0 : index
    %27 = vector.load %arg10[%26, %c0_24] : memref<64x512xf32, #tpu.memory_space<vmem>>, vector<8x512xf32>
    %cst_25 = arith.constant dense<0.000000e+00> : vector<8x512xf32>
    %28 = tpu.matmul %16, %15, %cst_25 {dimension_numbers = #tpu.dot_dimension_numbers<[1], [0], [0], [1], [0, 0, 1, 1], [], []>} : vector<8x128xf32>, vector<128x512xf32>, vector<8x512xf32> -> vector<8x512xf32>
    %29 = arith.addf %27, %28 : vector<8x512xf32>
    %30 = vector.extract_strided_slice %25 {offsets = [0, 0], sizes = [8, 128], strides = [1, 1]} : vector<8x512xf32> to vector<8x128xf32>
    %31 = arith.negf %30 : vector<8x128xf32>
    %32 = math.exp %31 : vector<8x128xf32>
    %cst_26 = arith.constant 1.000000e+00 : f32
    %33 = vector.broadcast %cst_26 : f32 to vector<8x128xf32>
    %34 = arith.addf %33, %32 : vector<8x128xf32>
    %35 = arith.divf %33, %34 : vector<8x128xf32>
    %36 = vector.extract_strided_slice %25 {offsets = [0, 128], sizes = [8, 128], strides = [1, 1]} : vector<8x512xf32> to vector<8x128xf32>
    %37 = arith.negf %36 : vector<8x128xf32>
    %38 = math.exp %37 : vector<8x128xf32>
    %cst_27 = arith.constant 1.000000e+00 : f32
    %39 = vector.broadcast %cst_27 : f32 to vector<8x128xf32>
    %40 = arith.addf %39, %38 : vector<8x128xf32>
    %41 = arith.divf %39, %40 : vector<8x128xf32>
    %42 = vector.extract_strided_slice %25 {offsets = [0, 256], sizes = [8, 128], strides = [1, 1]} : vector<8x512xf32> to vector<8x128xf32>
    %43 = math.tanh %42 : vector<8x128xf32>
    %44 = vector.extract_strided_slice %25 {offsets = [0, 384], sizes = [8, 128], strides = [1, 1]} : vector<8x512xf32> to vector<8x128xf32>
    %45 = arith.negf %44 : vector<8x128xf32>
    %46 = math.exp %45 : vector<8x128xf32>
    %cst_28 = arith.constant 1.000000e+00 : f32
    %47 = vector.broadcast %cst_28 : f32 to vector<8x128xf32>
    %48 = arith.addf %47, %46 : vector<8x128xf32>
    %49 = arith.divf %47, %48 : vector<8x128xf32>
    %50 = arith.mulf %41, %16 : vector<8x128xf32>
    %51 = arith.mulf %35, %43 : vector<8x128xf32>
    %52 = arith.addf %50, %51 : vector<8x128xf32>
    %53 = math.tanh %52 : vector<8x128xf32>
    %54 = arith.mulf %49, %53 : vector<8x128xf32>
    %55 = vector.extract_strided_slice %29 {offsets = [0, 0], sizes = [8, 128], strides = [1, 1]} : vector<8x512xf32> to vector<8x128xf32>
    %56 = arith.negf %55 : vector<8x128xf32>
    %57 = math.exp %56 : vector<8x128xf32>
    %cst_29 = arith.constant 1.000000e+00 : f32
    %58 = vector.broadcast %cst_29 : f32 to vector<8x128xf32>
    %59 = arith.addf %58, %57 : vector<8x128xf32>
    %60 = arith.divf %58, %59 : vector<8x128xf32>
    %61 = vector.extract_strided_slice %29 {offsets = [0, 128], sizes = [8, 128], strides = [1, 1]} : vector<8x512xf32> to vector<8x128xf32>
    %62 = arith.negf %61 : vector<8x128xf32>
    %63 = math.exp %62 : vector<8x128xf32>
    %cst_30 = arith.constant 1.000000e+00 : f32
    %64 = vector.broadcast %cst_30 : f32 to vector<8x128xf32>
    %65 = arith.addf %64, %63 : vector<8x128xf32>
    %66 = arith.divf %64, %65 : vector<8x128xf32>
    %67 = vector.extract_strided_slice %29 {offsets = [0, 256], sizes = [8, 128], strides = [1, 1]} : vector<8x512xf32> to vector<8x128xf32>
    %68 = math.tanh %67 : vector<8x128xf32>
    %69 = vector.extract_strided_slice %29 {offsets = [0, 384], sizes = [8, 128], strides = [1, 1]} : vector<8x512xf32> to vector<8x128xf32>
    %70 = arith.negf %69 : vector<8x128xf32>
    %71 = math.exp %70 : vector<8x128xf32>
    %cst_31 = arith.constant 1.000000e+00 : f32
    %72 = vector.broadcast %cst_31 : f32 to vector<8x128xf32>
    %73 = arith.addf %72, %71 : vector<8x128xf32>
    %74 = arith.divf %72, %73 : vector<8x128xf32>
    %75 = arith.mulf %66, %16 : vector<8x128xf32>
    %76 = arith.mulf %60, %68 : vector<8x128xf32>
    %77 = arith.addf %75, %76 : vector<8x128xf32>
    %78 = math.tanh %77 : vector<8x128xf32>
    %79 = arith.mulf %74, %78 : vector<8x128xf32>
    %80 = arith.index_cast %18 : i32 to index
    %c0_32 = arith.constant 0 : index
    %81 = vector.load %arg7[%80, %c0_32] : memref<64x128xf32, #tpu.memory_space<vmem>>, vector<8x128xf32>
    tpu.vector_store %arg7[%80, %c0_32], %54 {strides = array<i32>} : memref<64x128xf32, #tpu.memory_space<vmem>>, vector<8x128xf32>,
    %82 = arith.index_cast %21 : i32 to index
    %c0_33 = arith.constant 0 : index
    %83 = vector.load %arg8[%82, %c0_33] : memref<64x128xf32, #tpu.memory_space<vmem>>, vector<8x128xf32>
    tpu.vector_store %arg8[%82, %c0_33], %79 {strides = array<i32>} : memref<64x128xf32, #tpu.memory_space<vmem>>, vector<8x128xf32>,
    %c1_i32 = arith.constant 1 : i32
    %c8_i32_34 = arith.constant 8 : i32
    %84 = arith.muli %c1_i32, %c8_i32_34 : i32
    %85 = tpu.assume_multiple %84, 8 : i32
    %c7_i32_35 = arith.constant 7 : i32
    %86 = arith.subi %c7_i32_35, %c1_i32 : i32
    %c8_i32_36 = arith.constant 8 : i32
    %87 = arith.muli %86, %c8_i32_36 : i32
    %88 = tpu.assume_multiple %87, 8 : i32
    %89 = arith.index_cast %85 : i32 to index
    %c0_37 = arith.constant 0 : index
    %90 = vector.load %arg9[%89, %c0_37] : memref<64x512xf32, #tpu.memory_space<vmem>>, vector<8x512xf32>
    %cst_38 = arith.constant dense<0.000000e+00> : vector<8x512xf32>
    %91 = tpu.matmul %54, %14, %cst_38 {dimension_numbers = #tpu.dot_dimension_numbers<[1], [0], [0], [1], [0, 0, 1, 1], [], []>} : vector<8x128xf32>, vector<128x512xf32>, vector<8x512xf32> -> vector<8x512xf32>
    %92 = arith.addf %90, %91 : vector<8x512xf32>
    %93 = arith.index_cast %88 : i32 to index
    %c0_39 = arith.constant 0 : index
    %94 = vector.load %arg10[%93, %c0_39] : memref<64x512xf32, #tpu.memory_space<vmem>>, vector<8x512xf32>
    %cst_40 = arith.constant dense<0.000000e+00> : vector<8x512xf32>
    %95 = tpu.matmul %79, %15, %cst_40 {dimension_numbers = #tpu.dot_dimension_numbers<[1], [0], [0], [1], [0, 0, 1, 1], [], []>} : vector<8x128xf32>, vector<128x512xf32>, vector<8x512xf32> -> vector<8x512xf32>
    %96 = arith.addf %94, %95 : vector<8x512xf32>
    %97 = vector.extract_strided_slice %92 {offsets = [0, 0], sizes = [8, 128], strides = [1, 1]} : vector<8x512xf32> to vector<8x128xf32>
    %98 = arith.negf %97 : vector<8x128xf32>
    %99 = math.exp %98 : vector<8x128xf32>
    %cst_41 = arith.constant 1.000000e+00 : f32
    %100 = vector.broadcast %cst_41 : f32 to vector<8x128xf32>
    %101 = arith.addf %100, %99 : vector<8x128xf32>
    %102 = arith.divf %100, %101 : vector<8x128xf32>
    %103 = vector.extract_strided_slice %92 {offsets = [0, 128], sizes = [8, 128], strides = [1, 1]} : vector<8x512xf32> to vector<8x128xf32>
    %104 = arith.negf %103 : vector<8x128xf32>
    %105 = math.exp %104 : vector<8x128xf32>
    %cst_42 = arith.constant 1.000000e+00 : f32
    %106 = vector.broadcast %cst_42 : f32 to vector<8x128xf32>
    %107 = arith.addf %106, %105 : vector<8x128xf32>
    %108 = arith.divf %106, %107 : vector<8x128xf32>
    %109 = vector.extract_strided_slice %92 {offsets = [0, 256], sizes = [8, 128], strides = [1, 1]} : vector<8x512xf32> to vector<8x128xf32>
    %110 = math.tanh %109 : vector<8x128xf32>
    %111 = vector.extract_strided_slice %92 {offsets = [0, 384], sizes = [8, 128], strides = [1, 1]} : vector<8x512xf32> to vector<8x128xf32>
    %112 = arith.negf %111 : vector<8x128xf32>
    %113 = math.exp %112 : vector<8x128xf32>
    %cst_43 = arith.constant 1.000000e+00 : f32
    %114 = vector.broadcast %cst_43 : f32 to vector<8x128xf32>
    %115 = arith.addf %114, %113 : vector<8x128xf32>
    %116 = arith.divf %114, %115 : vector<8x128xf32>
    %117 = arith.mulf %108, %52 : vector<8x128xf32>
    %118 = arith.mulf %102, %110 : vector<8x128xf32>
    %119 = arith.addf %117, %118 : vector<8x128xf32>
    %120 = math.tanh %119 : vector<8x128xf32>
    %121 = arith.mulf %116, %120 : vector<8x128xf32>
    %122 = vector.extract_strided_slice %96 {offsets = [0, 0], sizes = [8, 128], strides = [1, 1]} : vector<8x512xf32> to vector<8x128xf32>
    %123 = arith.negf %122 : vector<8x128xf32>
    %124 = math.exp %123 : vector<8x128xf32>
    %cst_44 = arith.constant 1.000000e+00 : f32
    %125 = vector.broadcast %cst_44 : f32 to vector<8x128xf32>
    %126 = arith.addf %125, %124 : vector<8x128xf32>
    %127 = arith.divf %125, %126 : vector<8x128xf32>
    %128 = vector.extract_strided_slice %96 {offsets = [0, 128], sizes = [8, 128], strides = [1, 1]} : vector<8x512xf32> to vector<8x128xf32>
    %129 = arith.negf %128 : vector<8x128xf32>
    %130 = math.exp %129 : vector<8x128xf32>
    %cst_45 = arith.constant 1.000000e+00 : f32
    %131 = vector.broadcast %cst_45 : f32 to vector<8x128xf32>
    %132 = arith.addf %131, %130 : vector<8x128xf32>
    %133 = arith.divf %131, %132 : vector<8x128xf32>
    %134 = vector.extract_strided_slice %96 {offsets = [0, 256], sizes = [8, 128], strides = [1, 1]} : vector<8x512xf32> to vector<8x128xf32>
    %135 = math.tanh %134 : vector<8x128xf32>
    %136 = vector.extract_strided_slice %96 {offsets = [0, 384], sizes = [8, 128], strides = [1, 1]} : vector<8x512xf32> to vector<8x128xf32>
    %137 = arith.negf %136 : vector<8x128xf32>
    %138 = math.exp %137 : vector<8x128xf32>
    %cst_46 = arith.constant 1.000000e+00 : f32
    %139 = vector.broadcast %cst_46 : f32 to vector<8x128xf32>
    %140 = arith.addf %139, %138 : vector<8x128xf32>
    %141 = arith.divf %139, %140 : vector<8x128xf32>
    %142 = arith.mulf %133, %77 : vector<8x128xf32>
    %143 = arith.mulf %127, %135 : vector<8x128xf32>
    %144 = arith.addf %142, %143 : vector<8x128xf32>
    %145 = math.tanh %144 : vector<8x128xf32>
    %146 = arith.mulf %141, %145 : vector<8x128xf32>
    %147 = arith.index_cast %85 : i32 to index
    %c0_47 = arith.constant 0 : index
    %148 = vector.load %arg7[%147, %c0_47] : memref<64x128xf32, #tpu.memory_space<vmem>>, vector<8x128xf32>
    tpu.vector_store %arg7[%147, %c0_47], %121 {strides = array<i32>} : memref<64x128xf32, #tpu.memory_space<vmem>>, vector<8x128xf32>,
    %149 = arith.index_cast %88 : i32 to index
    %c0_48 = arith.constant 0 : index
    %150 = vector.load %arg8[%149, %c0_48] : memref<64x128xf32, #tpu.memory_space<vmem>>, vector<8x128xf32>
    tpu.vector_store %arg8[%149, %c0_48], %146 {strides = array<i32>} : memref<64x128xf32, #tpu.memory_space<vmem>>, vector<8x128xf32>,
    %c2_i32 = arith.constant 2 : i32
    %c8_i32_49 = arith.constant 8 : i32
    %151 = arith.muli %c2_i32, %c8_i32_49 : i32
    %152 = tpu.assume_multiple %151, 8 : i32
    %c7_i32_50 = arith.constant 7 : i32
    %153 = arith.subi %c7_i32_50, %c2_i32 : i32
    %c8_i32_51 = arith.constant 8 : i32
    %154 = arith.muli %153, %c8_i32_51 : i32
    %155 = tpu.assume_multiple %154, 8 : i32
    %156 = arith.index_cast %152 : i32 to index
    %c0_52 = arith.constant 0 : index
    %157 = vector.load %arg9[%156, %c0_52] : memref<64x512xf32, #tpu.memory_space<vmem>>, vector<8x512xf32>
    %cst_53 = arith.constant dense<0.000000e+00> : vector<8x512xf32>
    %158 = tpu.matmul %121, %14, %cst_53 {dimension_numbers = #tpu.dot_dimension_numbers<[1], [0], [0], [1], [0, 0, 1, 1], [], []>} : vector<8x128xf32>, vector<128x512xf32>, vector<8x512xf32> -> vector<8x512xf32>
    %159 = arith.addf %157, %158 : vector<8x512xf32>
    %160 = arith.index_cast %155 : i32 to index
    %c0_54 = arith.constant 0 : index
    %161 = vector.load %arg10[%160, %c0_54] : memref<64x512xf32, #tpu.memory_space<vmem>>, vector<8x512xf32>
    %cst_55 = arith.constant dense<0.000000e+00> : vector<8x512xf32>
    %162 = tpu.matmul %146, %15, %cst_55 {dimension_numbers = #tpu.dot_dimension_numbers<[1], [0], [0], [1], [0, 0, 1, 1], [], []>} : vector<8x128xf32>, vector<128x512xf32>, vector<8x512xf32> -> vector<8x512xf32>
    %163 = arith.addf %161, %162 : vector<8x512xf32>
    %164 = vector.extract_strided_slice %159 {offsets = [0, 0], sizes = [8, 128], strides = [1, 1]} : vector<8x512xf32> to vector<8x128xf32>
    %165 = arith.negf %164 : vector<8x128xf32>
    %166 = math.exp %165 : vector<8x128xf32>
    %cst_56 = arith.constant 1.000000e+00 : f32
    %167 = vector.broadcast %cst_56 : f32 to vector<8x128xf32>
    %168 = arith.addf %167, %166 : vector<8x128xf32>
    %169 = arith.divf %167, %168 : vector<8x128xf32>
    %170 = vector.extract_strided_slice %159 {offsets = [0, 128], sizes = [8, 128], strides = [1, 1]} : vector<8x512xf32> to vector<8x128xf32>
    %171 = arith.negf %170 : vector<8x128xf32>
    %172 = math.exp %171 : vector<8x128xf32>
    %cst_57 = arith.constant 1.000000e+00 : f32
    %173 = vector.broadcast %cst_57 : f32 to vector<8x128xf32>
    %174 = arith.addf %173, %172 : vector<8x128xf32>
    %175 = arith.divf %173, %174 : vector<8x128xf32>
    %176 = vector.extract_strided_slice %159 {offsets = [0, 256], sizes = [8, 128], strides = [1, 1]} : vector<8x512xf32> to vector<8x128xf32>
    %177 = math.tanh %176 : vector<8x128xf32>
    %178 = vector.extract_strided_slice %159 {offsets = [0, 384], sizes = [8, 128], strides = [1, 1]} : vector<8x512xf32> to vector<8x128xf32>
    %179 = arith.negf %178 : vector<8x128xf32>
    %180 = math.exp %179 : vector<8x128xf32>
    %cst_58 = arith.constant 1.000000e+00 : f32
    %181 = vector.broadcast %cst_58 : f32 to vector<8x128xf32>
    %182 = arith.addf %181, %180 : vector<8x128xf32>
    %183 = arith.divf %181, %182 : vector<8x128xf32>
    %184 = arith.mulf %175, %119 : vector<8x128xf32>
    %185 = arith.mulf %169, %177 : vector<8x128xf32>
    %186 = arith.addf %184, %185 : vector<8x128xf32>
    %187 = math.tanh %186 : vector<8x128xf32>
    %188 = arith.mulf %183, %187 : vector<8x128xf32>
    %189 = vector.extract_strided_slice %163 {offsets = [0, 0], sizes = [8, 128], strides = [1, 1]} : vector<8x512xf32> to vector<8x128xf32>
    %190 = arith.negf %189 : vector<8x128xf32>
    %191 = math.exp %190 : vector<8x128xf32>
    %cst_59 = arith.constant 1.000000e+00 : f32
    %192 = vector.broadcast %cst_59 : f32 to vector<8x128xf32>
    %193 = arith.addf %192, %191 : vector<8x128xf32>
    %194 = arith.divf %192, %193 : vector<8x128xf32>
    %195 = vector.extract_strided_slice %163 {offsets = [0, 128], sizes = [8, 128], strides = [1, 1]} : vector<8x512xf32> to vector<8x128xf32>
    %196 = arith.negf %195 : vector<8x128xf32>
    %197 = math.exp %196 : vector<8x128xf32>
    %cst_60 = arith.constant 1.000000e+00 : f32
    %198 = vector.broadcast %cst_60 : f32 to vector<8x128xf32>
    %199 = arith.addf %198, %197 : vector<8x128xf32>
    %200 = arith.divf %198, %199 : vector<8x128xf32>
    %201 = vector.extract_strided_slice %163 {offsets = [0, 256], sizes = [8, 128], strides = [1, 1]} : vector<8x512xf32> to vector<8x128xf32>
    %202 = math.tanh %201 : vector<8x128xf32>
    %203 = vector.extract_strided_slice %163 {offsets = [0, 384], sizes = [8, 128], strides = [1, 1]} : vector<8x512xf32> to vector<8x128xf32>
    %204 = arith.negf %203 : vector<8x128xf32>
    %205 = math.exp %204 : vector<8x128xf32>
    %cst_61 = arith.constant 1.000000e+00 : f32
    %206 = vector.broadcast %cst_61 : f32 to vector<8x128xf32>
    %207 = arith.addf %206, %205 : vector<8x128xf32>
    %208 = arith.divf %206, %207 : vector<8x128xf32>
    %209 = arith.mulf %200, %144 : vector<8x128xf32>
    %210 = arith.mulf %194, %202 : vector<8x128xf32>
    %211 = arith.addf %209, %210 : vector<8x128xf32>
    %212 = math.tanh %211 : vector<8x128xf32>
    %213 = arith.mulf %208, %212 : vector<8x128xf32>
    %214 = arith.index_cast %152 : i32 to index
    %c0_62 = arith.constant 0 : index
    %215 = vector.load %arg7[%214, %c0_62] : memref<64x128xf32, #tpu.memory_space<vmem>>, vector<8x128xf32>
    tpu.vector_store %arg7[%214, %c0_62], %188 {strides = array<i32>} : memref<64x128xf32, #tpu.memory_space<vmem>>, vector<8x128xf32>,
    %216 = arith.index_cast %155 : i32 to index
    %c0_63 = arith.constant 0 : index
    %217 = vector.load %arg8[%216, %c0_63] : memref<64x128xf32, #tpu.memory_space<vmem>>, vector<8x128xf32>
    tpu.vector_store %arg8[%216, %c0_63], %213 {strides = array<i32>} : memref<64x128xf32, #tpu.memory_space<vmem>>, vector<8x128xf32>,
    %c3_i32 = arith.constant 3 : i32
    %c8_i32_64 = arith.constant 8 : i32
    %218 = arith.muli %c3_i32, %c8_i32_64 : i32
    %219 = tpu.assume_multiple %218, 8 : i32
    %c7_i32_65 = arith.constant 7 : i32
    %220 = arith.subi %c7_i32_65, %c3_i32 : i32
    %c8_i32_66 = arith.constant 8 : i32
    %221 = arith.muli %220, %c8_i32_66 : i32
    %222 = tpu.assume_multiple %221, 8 : i32
    %223 = arith.index_cast %219 : i32 to index
    %c0_67 = arith.constant 0 : index
    %224 = vector.load %arg9[%223, %c0_67] : memref<64x512xf32, #tpu.memory_space<vmem>>, vector<8x512xf32>
    %cst_68 = arith.constant dense<0.000000e+00> : vector<8x512xf32>
    %225 = tpu.matmul %188, %14, %cst_68 {dimension_numbers = #tpu.dot_dimension_numbers<[1], [0], [0], [1], [0, 0, 1, 1], [], []>} : vector<8x128xf32>, vector<128x512xf32>, vector<8x512xf32> -> vector<8x512xf32>
    %226 = arith.addf %224, %225 : vector<8x512xf32>
    %227 = arith.index_cast %222 : i32 to index
    %c0_69 = arith.constant 0 : index
    %228 = vector.load %arg10[%227, %c0_69] : memref<64x512xf32, #tpu.memory_space<vmem>>, vector<8x512xf32>
    %cst_70 = arith.constant dense<0.000000e+00> : vector<8x512xf32>
    %229 = tpu.matmul %213, %15, %cst_70 {dimension_numbers = #tpu.dot_dimension_numbers<[1], [0], [0], [1], [0, 0, 1, 1], [], []>} : vector<8x128xf32>, vector<128x512xf32>, vector<8x512xf32> -> vector<8x512xf32>
    %230 = arith.addf %228, %229 : vector<8x512xf32>
    %231 = vector.extract_strided_slice %226 {offsets = [0, 0], sizes = [8, 128], strides = [1, 1]} : vector<8x512xf32> to vector<8x128xf32>
    %232 = arith.negf %231 : vector<8x128xf32>
    %233 = math.exp %232 : vector<8x128xf32>
    %cst_71 = arith.constant 1.000000e+00 : f32
    %234 = vector.broadcast %cst_71 : f32 to vector<8x128xf32>
    %235 = arith.addf %234, %233 : vector<8x128xf32>
    %236 = arith.divf %234, %235 : vector<8x128xf32>
    %237 = vector.extract_strided_slice %226 {offsets = [0, 128], sizes = [8, 128], strides = [1, 1]} : vector<8x512xf32> to vector<8x128xf32>
    %238 = arith.negf %237 : vector<8x128xf32>
    %239 = math.exp %238 : vector<8x128xf32>
    %cst_72 = arith.constant 1.000000e+00 : f32
    %240 = vector.broadcast %cst_72 : f32 to vector<8x128xf32>
    %241 = arith.addf %240, %239 : vector<8x128xf32>
    %242 = arith.divf %240, %241 : vector<8x128xf32>
    %243 = vector.extract_strided_slice %226 {offsets = [0, 256], sizes = [8, 128], strides = [1, 1]} : vector<8x512xf32> to vector<8x128xf32>
    %244 = math.tanh %243 : vector<8x128xf32>
    %245 = vector.extract_strided_slice %226 {offsets = [0, 384], sizes = [8, 128], strides = [1, 1]} : vector<8x512xf32> to vector<8x128xf32>
    %246 = arith.negf %245 : vector<8x128xf32>
    %247 = math.exp %246 : vector<8x128xf32>
    %cst_73 = arith.constant 1.000000e+00 : f32
    %248 = vector.broadcast %cst_73 : f32 to vector<8x128xf32>
    %249 = arith.addf %248, %247 : vector<8x128xf32>
    %250 = arith.divf %248, %249 : vector<8x128xf32>
    %251 = arith.mulf %242, %186 : vector<8x128xf32>
    %252 = arith.mulf %236, %244 : vector<8x128xf32>
    %253 = arith.addf %251, %252 : vector<8x128xf32>
    %254 = math.tanh %253 : vector<8x128xf32>
    %255 = arith.mulf %250, %254 : vector<8x128xf32>
    %256 = vector.extract_strided_slice %230 {offsets = [0, 0], sizes = [8, 128], strides = [1, 1]} : vector<8x512xf32> to vector<8x128xf32>
    %257 = arith.negf %256 : vector<8x128xf32>
    %258 = math.exp %257 : vector<8x128xf32>
    %cst_74 = arith.constant 1.000000e+00 : f32
    %259 = vector.broadcast %cst_74 : f32 to vector<8x128xf32>
    %260 = arith.addf %259, %258 : vector<8x128xf32>
    %261 = arith.divf %259, %260 : vector<8x128xf32>
    %262 = vector.extract_strided_slice %230 {offsets = [0, 128], sizes = [8, 128], strides = [1, 1]} : vector<8x512xf32> to vector<8x128xf32>
    %263 = arith.negf %262 : vector<8x128xf32>
    %264 = math.exp %263 : vector<8x128xf32>
    %cst_75 = arith.constant 1.000000e+00 : f32
    %265 = vector.broadcast %cst_75 : f32 to vector<8x128xf32>
    %266 = arith.addf %265, %264 : vector<8x128xf32>
    %267 = arith.divf %265, %266 : vector<8x128xf32>
    %268 = vector.extract_strided_slice %230 {offsets = [0, 256], sizes = [8, 128], strides = [1, 1]} : vector<8x512xf32> to vector<8x128xf32>
    %269 = math.tanh %268 : vector<8x128xf32>
    %270 = vector.extract_strided_slice %230 {offsets = [0, 384], sizes = [8, 128], strides = [1, 1]} : vector<8x512xf32> to vector<8x128xf32>
    %271 = arith.negf %270 : vector<8x128xf32>
    %272 = math.exp %271 : vector<8x128xf32>
    %cst_76 = arith.constant 1.000000e+00 : f32
    %273 = vector.broadcast %cst_76 : f32 to vector<8x128xf32>
    %274 = arith.addf %273, %272 : vector<8x128xf32>
    %275 = arith.divf %273, %274 : vector<8x128xf32>
    %276 = arith.mulf %267, %211 : vector<8x128xf32>
    %277 = arith.mulf %261, %269 : vector<8x128xf32>
    %278 = arith.addf %276, %277 : vector<8x128xf32>
    %279 = math.tanh %278 : vector<8x128xf32>
    %280 = arith.mulf %275, %279 : vector<8x128xf32>
    %281 = arith.index_cast %219 : i32 to index
    %c0_77 = arith.constant 0 : index
    %282 = vector.load %arg7[%281, %c0_77] : memref<64x128xf32, #tpu.memory_space<vmem>>, vector<8x128xf32>
    tpu.vector_store %arg7[%281, %c0_77], %255 {strides = array<i32>} : memref<64x128xf32, #tpu.memory_space<vmem>>, vector<8x128xf32>,
    %283 = arith.index_cast %222 : i32 to index
    %c0_78 = arith.constant 0 : index
    %284 = vector.load %arg8[%283, %c0_78] : memref<64x128xf32, #tpu.memory_space<vmem>>, vector<8x128xf32>
    tpu.vector_store %arg8[%283, %c0_78], %280 {strides = array<i32>} : memref<64x128xf32, #tpu.memory_space<vmem>>, vector<8x128xf32>,
    %c4_i32 = arith.constant 4 : i32
    %c8_i32_79 = arith.constant 8 : i32
    %285 = arith.muli %c4_i32, %c8_i32_79 : i32
    %286 = tpu.assume_multiple %285, 8 : i32
    %c7_i32_80 = arith.constant 7 : i32
    %287 = arith.subi %c7_i32_80, %c4_i32 : i32
    %c8_i32_81 = arith.constant 8 : i32
    %288 = arith.muli %287, %c8_i32_81 : i32
    %289 = tpu.assume_multiple %288, 8 : i32
    %290 = arith.index_cast %286 : i32 to index
    %c0_82 = arith.constant 0 : index
    %291 = vector.load %arg9[%290, %c0_82] : memref<64x512xf32, #tpu.memory_space<vmem>>, vector<8x512xf32>
    %cst_83 = arith.constant dense<0.000000e+00> : vector<8x512xf32>
    %292 = tpu.matmul %255, %14, %cst_83 {dimension_numbers = #tpu.dot_dimension_numbers<[1], [0], [0], [1], [0, 0, 1, 1], [], []>} : vector<8x128xf32>, vector<128x512xf32>, vector<8x512xf32> -> vector<8x512xf32>
    %293 = arith.addf %291, %292 : vector<8x512xf32>
    %294 = arith.index_cast %289 : i32 to index
    %c0_84 = arith.constant 0 : index
    %295 = vector.load %arg10[%294, %c0_84] : memref<64x512xf32, #tpu.memory_space<vmem>>, vector<8x512xf32>
    %cst_85 = arith.constant dense<0.000000e+00> : vector<8x512xf32>
    %296 = tpu.matmul %280, %15, %cst_85 {dimension_numbers = #tpu.dot_dimension_numbers<[1], [0], [0], [1], [0, 0, 1, 1], [], []>} : vector<8x128xf32>, vector<128x512xf32>, vector<8x512xf32> -> vector<8x512xf32>
    %297 = arith.addf %295, %296 : vector<8x512xf32>
    %298 = vector.extract_strided_slice %293 {offsets = [0, 0], sizes = [8, 128], strides = [1, 1]} : vector<8x512xf32> to vector<8x128xf32>
    %299 = arith.negf %298 : vector<8x128xf32>
    %300 = math.exp %299 : vector<8x128xf32>
    %cst_86 = arith.constant 1.000000e+00 : f32
    %301 = vector.broadcast %cst_86 : f32 to vector<8x128xf32>
    %302 = arith.addf %301, %300 : vector<8x128xf32>
    %303 = arith.divf %301, %302 : vector<8x128xf32>
    %304 = vector.extract_strided_slice %293 {offsets = [0, 128], sizes = [8, 128], strides = [1, 1]} : vector<8x512xf32> to vector<8x128xf32>
    %305 = arith.negf %304 : vector<8x128xf32>
    %306 = math.exp %305 : vector<8x128xf32>
    %cst_87 = arith.constant 1.000000e+00 : f32
    %307 = vector.broadcast %cst_87 : f32 to vector<8x128xf32>
    %308 = arith.addf %307, %306 : vector<8x128xf32>
    %309 = arith.divf %307, %308 : vector<8x128xf32>
    %310 = vector.extract_strided_slice %293 {offsets = [0, 256], sizes = [8, 128], strides = [1, 1]} : vector<8x512xf32> to vector<8x128xf32>
    %311 = math.tanh %310 : vector<8x128xf32>
    %312 = vector.extract_strided_slice %293 {offsets = [0, 384], sizes = [8, 128], strides = [1, 1]} : vector<8x512xf32> to vector<8x128xf32>
    %313 = arith.negf %312 : vector<8x128xf32>
    %314 = math.exp %313 : vector<8x128xf32>
    %cst_88 = arith.constant 1.000000e+00 : f32
    %315 = vector.broadcast %cst_88 : f32 to vector<8x128xf32>
    %316 = arith.addf %315, %314 : vector<8x128xf32>
    %317 = arith.divf %315, %316 : vector<8x128xf32>
    %318 = arith.mulf %309, %253 : vector<8x128xf32>
    %319 = arith.mulf %303, %311 : vector<8x128xf32>
    %320 = arith.addf %318, %319 : vector<8x128xf32>
    %321 = math.tanh %320 : vector<8x128xf32>
    %322 = arith.mulf %317, %321 : vector<8x128xf32>
    %323 = vector.extract_strided_slice %297 {offsets = [0, 0], sizes = [8, 128], strides = [1, 1]} : vector<8x512xf32> to vector<8x128xf32>
    %324 = arith.negf %323 : vector<8x128xf32>
    %325 = math.exp %324 : vector<8x128xf32>
    %cst_89 = arith.constant 1.000000e+00 : f32
    %326 = vector.broadcast %cst_89 : f32 to vector<8x128xf32>
    %327 = arith.addf %326, %325 : vector<8x128xf32>
    %328 = arith.divf %326, %327 : vector<8x128xf32>
    %329 = vector.extract_strided_slice %297 {offsets = [0, 128], sizes = [8, 128], strides = [1, 1]} : vector<8x512xf32> to vector<8x128xf32>
    %330 = arith.negf %329 : vector<8x128xf32>
    %331 = math.exp %330 : vector<8x128xf32>
    %cst_90 = arith.constant 1.000000e+00 : f32
    %332 = vector.broadcast %cst_90 : f32 to vector<8x128xf32>
    %333 = arith.addf %332, %331 : vector<8x128xf32>
    %334 = arith.divf %332, %333 : vector<8x128xf32>
    %335 = vector.extract_strided_slice %297 {offsets = [0, 256], sizes = [8, 128], strides = [1, 1]} : vector<8x512xf32> to vector<8x128xf32>
    %336 = math.tanh %335 : vector<8x128xf32>
    %337 = vector.extract_strided_slice %297 {offsets = [0, 384], sizes = [8, 128], strides = [1, 1]} : vector<8x512xf32> to vector<8x128xf32>
    %338 = arith.negf %337 : vector<8x128xf32>
    %339 = math.exp %338 : vector<8x128xf32>
    %cst_91 = arith.constant 1.000000e+00 : f32
    %340 = vector.broadcast %cst_91 : f32 to vector<8x128xf32>
    %341 = arith.addf %340, %339 : vector<8x128xf32>
    %342 = arith.divf %340, %341 : vector<8x128xf32>
    %343 = arith.mulf %334, %278 : vector<8x128xf32>
    %344 = arith.mulf %328, %336 : vector<8x128xf32>
    %345 = arith.addf %343, %344 : vector<8x128xf32>
    %346 = math.tanh %345 : vector<8x128xf32>
    %347 = arith.mulf %342, %346 : vector<8x128xf32>
    %348 = arith.index_cast %286 : i32 to index
    %c0_92 = arith.constant 0 : index
    %349 = vector.load %arg7[%348, %c0_92] : memref<64x128xf32, #tpu.memory_space<vmem>>, vector<8x128xf32>
    tpu.vector_store %arg7[%348, %c0_92], %322 {strides = array<i32>} : memref<64x128xf32, #tpu.memory_space<vmem>>, vector<8x128xf32>,
    %350 = arith.index_cast %289 : i32 to index
    %c0_93 = arith.constant 0 : index
    %351 = vector.load %arg8[%350, %c0_93] : memref<64x128xf32, #tpu.memory_space<vmem>>, vector<8x128xf32>
    tpu.vector_store %arg8[%350, %c0_93], %347 {strides = array<i32>} : memref<64x128xf32, #tpu.memory_space<vmem>>, vector<8x128xf32>,
    %c5_i32 = arith.constant 5 : i32
    %c8_i32_94 = arith.constant 8 : i32
    %352 = arith.muli %c5_i32, %c8_i32_94 : i32
    %353 = tpu.assume_multiple %352, 8 : i32
    %c7_i32_95 = arith.constant 7 : i32
    %354 = arith.subi %c7_i32_95, %c5_i32 : i32
    %c8_i32_96 = arith.constant 8 : i32
    %355 = arith.muli %354, %c8_i32_96 : i32
    %356 = tpu.assume_multiple %355, 8 : i32
    %357 = arith.index_cast %353 : i32 to index
    %c0_97 = arith.constant 0 : index
    %358 = vector.load %arg9[%357, %c0_97] : memref<64x512xf32, #tpu.memory_space<vmem>>, vector<8x512xf32>
    %cst_98 = arith.constant dense<0.000000e+00> : vector<8x512xf32>
    %359 = tpu.matmul %322, %14, %cst_98 {dimension_numbers = #tpu.dot_dimension_numbers<[1], [0], [0], [1], [0, 0, 1, 1], [], []>} : vector<8x128xf32>, vector<128x512xf32>, vector<8x512xf32> -> vector<8x512xf32>
    %360 = arith.addf %358, %359 : vector<8x512xf32>
    %361 = arith.index_cast %356 : i32 to index
    %c0_99 = arith.constant 0 : index
    %362 = vector.load %arg10[%361, %c0_99] : memref<64x512xf32, #tpu.memory_space<vmem>>, vector<8x512xf32>
    %cst_100 = arith.constant dense<0.000000e+00> : vector<8x512xf32>
    %363 = tpu.matmul %347, %15, %cst_100 {dimension_numbers = #tpu.dot_dimension_numbers<[1], [0], [0], [1], [0, 0, 1, 1], [], []>} : vector<8x128xf32>, vector<128x512xf32>, vector<8x512xf32> -> vector<8x512xf32>
    %364 = arith.addf %362, %363 : vector<8x512xf32>
    %365 = vector.extract_strided_slice %360 {offsets = [0, 0], sizes = [8, 128], strides = [1, 1]} : vector<8x512xf32> to vector<8x128xf32>
    %366 = arith.negf %365 : vector<8x128xf32>
    %367 = math.exp %366 : vector<8x128xf32>
    %cst_101 = arith.constant 1.000000e+00 : f32
    %368 = vector.broadcast %cst_101 : f32 to vector<8x128xf32>
    %369 = arith.addf %368, %367 : vector<8x128xf32>
    %370 = arith.divf %368, %369 : vector<8x128xf32>
    %371 = vector.extract_strided_slice %360 {offsets = [0, 128], sizes = [8, 128], strides = [1, 1]} : vector<8x512xf32> to vector<8x128xf32>
    %372 = arith.negf %371 : vector<8x128xf32>
    %373 = math.exp %372 : vector<8x128xf32>
    %cst_102 = arith.constant 1.000000e+00 : f32
    %374 = vector.broadcast %cst_102 : f32 to vector<8x128xf32>
    %375 = arith.addf %374, %373 : vector<8x128xf32>
    %376 = arith.divf %374, %375 : vector<8x128xf32>
    %377 = vector.extract_strided_slice %360 {offsets = [0, 256], sizes = [8, 128], strides = [1, 1]} : vector<8x512xf32> to vector<8x128xf32>
    %378 = math.tanh %377 : vector<8x128xf32>
    %379 = vector.extract_strided_slice %360 {offsets = [0, 384], sizes = [8, 128], strides = [1, 1]} : vector<8x512xf32> to vector<8x128xf32>
    %380 = arith.negf %379 : vector<8x128xf32>
    %381 = math.exp %380 : vector<8x128xf32>
    %cst_103 = arith.constant 1.000000e+00 : f32
    %382 = vector.broadcast %cst_103 : f32 to vector<8x128xf32>
    %383 = arith.addf %382, %381 : vector<8x128xf32>
    %384 = arith.divf %382, %383 : vector<8x128xf32>
    %385 = arith.mulf %376, %320 : vector<8x128xf32>
    %386 = arith.mulf %370, %378 : vector<8x128xf32>
    %387 = arith.addf %385, %386 : vector<8x128xf32>
    %388 = math.tanh %387 : vector<8x128xf32>
    %389 = arith.mulf %384, %388 : vector<8x128xf32>
    %390 = vector.extract_strided_slice %364 {offsets = [0, 0], sizes = [8, 128], strides = [1, 1]} : vector<8x512xf32> to vector<8x128xf32>
    %391 = arith.negf %390 : vector<8x128xf32>
    %392 = math.exp %391 : vector<8x128xf32>
    %cst_104 = arith.constant 1.000000e+00 : f32
    %393 = vector.broadcast %cst_104 : f32 to vector<8x128xf32>
    %394 = arith.addf %393, %392 : vector<8x128xf32>
    %395 = arith.divf %393, %394 : vector<8x128xf32>
    %396 = vector.extract_strided_slice %364 {offsets = [0, 128], sizes = [8, 128], strides = [1, 1]} : vector<8x512xf32> to vector<8x128xf32>
    %397 = arith.negf %396 : vector<8x128xf32>
    %398 = math.exp %397 : vector<8x128xf32>
    %cst_105 = arith.constant 1.000000e+00 : f32
    %399 = vector.broadcast %cst_105 : f32 to vector<8x128xf32>
    %400 = arith.addf %399, %398 : vector<8x128xf32>
    %401 = arith.divf %399, %400 : vector<8x128xf32>
    %402 = vector.extract_strided_slice %364 {offsets = [0, 256], sizes = [8, 128], strides = [1, 1]} : vector<8x512xf32> to vector<8x128xf32>
    %403 = math.tanh %402 : vector<8x128xf32>
    %404 = vector.extract_strided_slice %364 {offsets = [0, 384], sizes = [8, 128], strides = [1, 1]} : vector<8x512xf32> to vector<8x128xf32>
    %405 = arith.negf %404 : vector<8x128xf32>
    %406 = math.exp %405 : vector<8x128xf32>
    %cst_106 = arith.constant 1.000000e+00 : f32
    %407 = vector.broadcast %cst_106 : f32 to vector<8x128xf32>
    %408 = arith.addf %407, %406 : vector<8x128xf32>
    %409 = arith.divf %407, %408 : vector<8x128xf32>
    %410 = arith.mulf %401, %345 : vector<8x128xf32>
    %411 = arith.mulf %395, %403 : vector<8x128xf32>
    %412 = arith.addf %410, %411 : vector<8x128xf32>
    %413 = math.tanh %412 : vector<8x128xf32>
    %414 = arith.mulf %409, %413 : vector<8x128xf32>
    %415 = arith.index_cast %353 : i32 to index
    %c0_107 = arith.constant 0 : index
    %416 = vector.load %arg7[%415, %c0_107] : memref<64x128xf32, #tpu.memory_space<vmem>>, vector<8x128xf32>
    tpu.vector_store %arg7[%415, %c0_107], %389 {strides = array<i32>} : memref<64x128xf32, #tpu.memory_space<vmem>>, vector<8x128xf32>,
    %417 = arith.index_cast %356 : i32 to index
    %c0_108 = arith.constant 0 : index
    %418 = vector.load %arg8[%417, %c0_108] : memref<64x128xf32, #tpu.memory_space<vmem>>, vector<8x128xf32>
    tpu.vector_store %arg8[%417, %c0_108], %414 {strides = array<i32>} : memref<64x128xf32, #tpu.memory_space<vmem>>, vector<8x128xf32>,
    %c6_i32 = arith.constant 6 : i32
    %c8_i32_109 = arith.constant 8 : i32
    %419 = arith.muli %c6_i32, %c8_i32_109 : i32
    %420 = tpu.assume_multiple %419, 8 : i32
    %c7_i32_110 = arith.constant 7 : i32
    %421 = arith.subi %c7_i32_110, %c6_i32 : i32
    %c8_i32_111 = arith.constant 8 : i32
    %422 = arith.muli %421, %c8_i32_111 : i32
    %423 = tpu.assume_multiple %422, 8 : i32
    %424 = arith.index_cast %420 : i32 to index
    %c0_112 = arith.constant 0 : index
    %425 = vector.load %arg9[%424, %c0_112] : memref<64x512xf32, #tpu.memory_space<vmem>>, vector<8x512xf32>
    %cst_113 = arith.constant dense<0.000000e+00> : vector<8x512xf32>
    %426 = tpu.matmul %389, %14, %cst_113 {dimension_numbers = #tpu.dot_dimension_numbers<[1], [0], [0], [1], [0, 0, 1, 1], [], []>} : vector<8x128xf32>, vector<128x512xf32>, vector<8x512xf32> -> vector<8x512xf32>
    %427 = arith.addf %425, %426 : vector<8x512xf32>
    %428 = arith.index_cast %423 : i32 to index
    %c0_114 = arith.constant 0 : index
    %429 = vector.load %arg10[%428, %c0_114] : memref<64x512xf32, #tpu.memory_space<vmem>>, vector<8x512xf32>
    %cst_115 = arith.constant dense<0.000000e+00> : vector<8x512xf32>
    %430 = tpu.matmul %414, %15, %cst_115 {dimension_numbers = #tpu.dot_dimension_numbers<[1], [0], [0], [1], [0, 0, 1, 1], [], []>} : vector<8x128xf32>, vector<128x512xf32>, vector<8x512xf32> -> vector<8x512xf32>
    %431 = arith.addf %429, %430 : vector<8x512xf32>
    %432 = vector.extract_strided_slice %427 {offsets = [0, 0], sizes = [8, 128], strides = [1, 1]} : vector<8x512xf32> to vector<8x128xf32>
    %433 = arith.negf %432 : vector<8x128xf32>
    %434 = math.exp %433 : vector<8x128xf32>
    %cst_116 = arith.constant 1.000000e+00 : f32
    %435 = vector.broadcast %cst_116 : f32 to vector<8x128xf32>
    %436 = arith.addf %435, %434 : vector<8x128xf32>
    %437 = arith.divf %435, %436 : vector<8x128xf32>
    %438 = vector.extract_strided_slice %427 {offsets = [0, 128], sizes = [8, 128], strides = [1, 1]} : vector<8x512xf32> to vector<8x128xf32>
    %439 = arith.negf %438 : vector<8x128xf32>
    %440 = math.exp %439 : vector<8x128xf32>
    %cst_117 = arith.constant 1.000000e+00 : f32
    %441 = vector.broadcast %cst_117 : f32 to vector<8x128xf32>
    %442 = arith.addf %441, %440 : vector<8x128xf32>
    %443 = arith.divf %441, %442 : vector<8x128xf32>
    %444 = vector.extract_strided_slice %427 {offsets = [0, 256], sizes = [8, 128], strides = [1, 1]} : vector<8x512xf32> to vector<8x128xf32>
    %445 = math.tanh %444 : vector<8x128xf32>
    %446 = vector.extract_strided_slice %427 {offsets = [0, 384], sizes = [8, 128], strides = [1, 1]} : vector<8x512xf32> to vector<8x128xf32>
    %447 = arith.negf %446 : vector<8x128xf32>
    %448 = math.exp %447 : vector<8x128xf32>
    %cst_118 = arith.constant 1.000000e+00 : f32
    %449 = vector.broadcast %cst_118 : f32 to vector<8x128xf32>
    %450 = arith.addf %449, %448 : vector<8x128xf32>
    %451 = arith.divf %449, %450 : vector<8x128xf32>
    %452 = arith.mulf %443, %387 : vector<8x128xf32>
    %453 = arith.mulf %437, %445 : vector<8x128xf32>
    %454 = arith.addf %452, %453 : vector<8x128xf32>
    %455 = math.tanh %454 : vector<8x128xf32>
    %456 = arith.mulf %451, %455 : vector<8x128xf32>
    %457 = vector.extract_strided_slice %431 {offsets = [0, 0], sizes = [8, 128], strides = [1, 1]} : vector<8x512xf32> to vector<8x128xf32>
    %458 = arith.negf %457 : vector<8x128xf32>
    %459 = math.exp %458 : vector<8x128xf32>
    %cst_119 = arith.constant 1.000000e+00 : f32
    %460 = vector.broadcast %cst_119 : f32 to vector<8x128xf32>
    %461 = arith.addf %460, %459 : vector<8x128xf32>
    %462 = arith.divf %460, %461 : vector<8x128xf32>
    %463 = vector.extract_strided_slice %431 {offsets = [0, 128], sizes = [8, 128], strides = [1, 1]} : vector<8x512xf32> to vector<8x128xf32>
    %464 = arith.negf %463 : vector<8x128xf32>
    %465 = math.exp %464 : vector<8x128xf32>
    %cst_120 = arith.constant 1.000000e+00 : f32
    %466 = vector.broadcast %cst_120 : f32 to vector<8x128xf32>
    %467 = arith.addf %466, %465 : vector<8x128xf32>
    %468 = arith.divf %466, %467 : vector<8x128xf32>
    %469 = vector.extract_strided_slice %431 {offsets = [0, 256], sizes = [8, 128], strides = [1, 1]} : vector<8x512xf32> to vector<8x128xf32>
    %470 = math.tanh %469 : vector<8x128xf32>
    %471 = vector.extract_strided_slice %431 {offsets = [0, 384], sizes = [8, 128], strides = [1, 1]} : vector<8x512xf32> to vector<8x128xf32>
    %472 = arith.negf %471 : vector<8x128xf32>
    %473 = math.exp %472 : vector<8x128xf32>
    %cst_121 = arith.constant 1.000000e+00 : f32
    %474 = vector.broadcast %cst_121 : f32 to vector<8x128xf32>
    %475 = arith.addf %474, %473 : vector<8x128xf32>
    %476 = arith.divf %474, %475 : vector<8x128xf32>
    %477 = arith.mulf %468, %412 : vector<8x128xf32>
    %478 = arith.mulf %462, %470 : vector<8x128xf32>
    %479 = arith.addf %477, %478 : vector<8x128xf32>
    %480 = math.tanh %479 : vector<8x128xf32>
    %481 = arith.mulf %476, %480 : vector<8x128xf32>
    %482 = arith.index_cast %420 : i32 to index
    %c0_122 = arith.constant 0 : index
    %483 = vector.load %arg7[%482, %c0_122] : memref<64x128xf32, #tpu.memory_space<vmem>>, vector<8x128xf32>
    tpu.vector_store %arg7[%482, %c0_122], %456 {strides = array<i32>} : memref<64x128xf32, #tpu.memory_space<vmem>>, vector<8x128xf32>,
    %484 = arith.index_cast %423 : i32 to index
    %c0_123 = arith.constant 0 : index
    %485 = vector.load %arg8[%484, %c0_123] : memref<64x128xf32, #tpu.memory_space<vmem>>, vector<8x128xf32>
    tpu.vector_store %arg8[%484, %c0_123], %481 {strides = array<i32>} : memref<64x128xf32, #tpu.memory_space<vmem>>, vector<8x128xf32>,
    %c7_i32_124 = arith.constant 7 : i32
    %c8_i32_125 = arith.constant 8 : i32
    %486 = arith.muli %c7_i32_124, %c8_i32_125 : i32
    %487 = tpu.assume_multiple %486, 8 : i32
    %c7_i32_126 = arith.constant 7 : i32
    %488 = arith.subi %c7_i32_126, %c7_i32_124 : i32
    %c8_i32_127 = arith.constant 8 : i32
    %489 = arith.muli %488, %c8_i32_127 : i32
    %490 = tpu.assume_multiple %489, 8 : i32
    %491 = arith.index_cast %487 : i32 to index
    %c0_128 = arith.constant 0 : index
    %492 = vector.load %arg9[%491, %c0_128] : memref<64x512xf32, #tpu.memory_space<vmem>>, vector<8x512xf32>
    %cst_129 = arith.constant dense<0.000000e+00> : vector<8x512xf32>
    %493 = tpu.matmul %456, %14, %cst_129 {dimension_numbers = #tpu.dot_dimension_numbers<[1], [0], [0], [1], [0, 0, 1, 1], [], []>} : vector<8x128xf32>, vector<128x512xf32>, vector<8x512xf32> -> vector<8x512xf32>
    %494 = arith.addf %492, %493 : vector<8x512xf32>
    %495 = arith.index_cast %490 : i32 to index
    %c0_130 = arith.constant 0 : index
    %496 = vector.load %arg10[%495, %c0_130] : memref<64x512xf32, #tpu.memory_space<vmem>>, vector<8x512xf32>
    %cst_131 = arith.constant dense<0.000000e+00> : vector<8x512xf32>
    %497 = tpu.matmul %481, %15, %cst_131 {dimension_numbers = #tpu.dot_dimension_numbers<[1], [0], [0], [1], [0, 0, 1, 1], [], []>} : vector<8x128xf32>, vector<128x512xf32>, vector<8x512xf32> -> vector<8x512xf32>
    %498 = arith.addf %496, %497 : vector<8x512xf32>
    %499 = vector.extract_strided_slice %494 {offsets = [0, 0], sizes = [8, 128], strides = [1, 1]} : vector<8x512xf32> to vector<8x128xf32>
    %500 = arith.negf %499 : vector<8x128xf32>
    %501 = math.exp %500 : vector<8x128xf32>
    %cst_132 = arith.constant 1.000000e+00 : f32
    %502 = vector.broadcast %cst_132 : f32 to vector<8x128xf32>
    %503 = arith.addf %502, %501 : vector<8x128xf32>
    %504 = arith.divf %502, %503 : vector<8x128xf32>
    %505 = vector.extract_strided_slice %494 {offsets = [0, 128], sizes = [8, 128], strides = [1, 1]} : vector<8x512xf32> to vector<8x128xf32>
    %506 = arith.negf %505 : vector<8x128xf32>
    %507 = math.exp %506 : vector<8x128xf32>
    %cst_133 = arith.constant 1.000000e+00 : f32
    %508 = vector.broadcast %cst_133 : f32 to vector<8x128xf32>
    %509 = arith.addf %508, %507 : vector<8x128xf32>
    %510 = arith.divf %508, %509 : vector<8x128xf32>
    %511 = vector.extract_strided_slice %494 {offsets = [0, 256], sizes = [8, 128], strides = [1, 1]} : vector<8x512xf32> to vector<8x128xf32>
    %512 = math.tanh %511 : vector<8x128xf32>
    %513 = vector.extract_strided_slice %494 {offsets = [0, 384], sizes = [8, 128], strides = [1, 1]} : vector<8x512xf32> to vector<8x128xf32>
    %514 = arith.negf %513 : vector<8x128xf32>
    %515 = math.exp %514 : vector<8x128xf32>
    %cst_134 = arith.constant 1.000000e+00 : f32
    %516 = vector.broadcast %cst_134 : f32 to vector<8x128xf32>
    %517 = arith.addf %516, %515 : vector<8x128xf32>
    %518 = arith.divf %516, %517 : vector<8x128xf32>
    %519 = arith.mulf %510, %454 : vector<8x128xf32>
    %520 = arith.mulf %504, %512 : vector<8x128xf32>
    %521 = arith.addf %519, %520 : vector<8x128xf32>
    %522 = math.tanh %521 : vector<8x128xf32>
    %523 = arith.mulf %518, %522 : vector<8x128xf32>
    %524 = vector.extract_strided_slice %498 {offsets = [0, 0], sizes = [8, 128], strides = [1, 1]} : vector<8x512xf32> to vector<8x128xf32>
    %525 = arith.negf %524 : vector<8x128xf32>
    %526 = math.exp %525 : vector<8x128xf32>
    %cst_135 = arith.constant 1.000000e+00 : f32
    %527 = vector.broadcast %cst_135 : f32 to vector<8x128xf32>
    %528 = arith.addf %527, %526 : vector<8x128xf32>
    %529 = arith.divf %527, %528 : vector<8x128xf32>
    %530 = vector.extract_strided_slice %498 {offsets = [0, 128], sizes = [8, 128], strides = [1, 1]} : vector<8x512xf32> to vector<8x128xf32>
    %531 = arith.negf %530 : vector<8x128xf32>
    %532 = math.exp %531 : vector<8x128xf32>
    %cst_136 = arith.constant 1.000000e+00 : f32
    %533 = vector.broadcast %cst_136 : f32 to vector<8x128xf32>
    %534 = arith.addf %533, %532 : vector<8x128xf32>
    %535 = arith.divf %533, %534 : vector<8x128xf32>
    %536 = vector.extract_strided_slice %498 {offsets = [0, 256], sizes = [8, 128], strides = [1, 1]} : vector<8x512xf32> to vector<8x128xf32>
    %537 = math.tanh %536 : vector<8x128xf32>
    %538 = vector.extract_strided_slice %498 {offsets = [0, 384], sizes = [8, 128], strides = [1, 1]} : vector<8x512xf32> to vector<8x128xf32>
    %539 = arith.negf %538 : vector<8x128xf32>
    %540 = math.exp %539 : vector<8x128xf32>
    %cst_137 = arith.constant 1.000000e+00 : f32
    %541 = vector.broadcast %cst_137 : f32 to vector<8x128xf32>
    %542 = arith.addf %541, %540 : vector<8x128xf32>
    %543 = arith.divf %541, %542 : vector<8x128xf32>
    %544 = arith.mulf %535, %479 : vector<8x128xf32>
    %545 = arith.mulf %529, %537 : vector<8x128xf32>
    %546 = arith.addf %544, %545 : vector<8x128xf32>
    %547 = math.tanh %546 : vector<8x128xf32>
    %548 = arith.mulf %543, %547 : vector<8x128xf32>
    %549 = arith.index_cast %487 : i32 to index
    %c0_138 = arith.constant 0 : index
    %550 = vector.load %arg7[%549, %c0_138] : memref<64x128xf32, #tpu.memory_space<vmem>>, vector<8x128xf32>
    tpu.vector_store %arg7[%549, %c0_138], %523 {strides = array<i32>} : memref<64x128xf32, #tpu.memory_space<vmem>>, vector<8x128xf32>,
    %551 = arith.index_cast %490 : i32 to index
    %c0_139 = arith.constant 0 : index
    %552 = vector.load %arg8[%551, %c0_139] : memref<64x128xf32, #tpu.memory_space<vmem>>, vector<8x128xf32>
    tpu.vector_store %arg8[%551, %c0_139], %548 {strides = array<i32>} : memref<64x128xf32, #tpu.memory_space<vmem>>, vector<8x128xf32>,
    %c8_i32_140 = arith.constant 8 : i32
    return
  }
}

</mosaic_0001>

<llo_original>
// kernel: tpu_custom_call.1
$region0: #{tpu_custom_call.1}
  #allocation0 [shape = 'u32[]', space=smem, size = 0x4, offset = 0x4, fixed_abs, tag = 'smem constant byte address 0x4 - core index']
  #allocation1 [shape = 'u32[144,128]{1,0:T(1,128)}', space=vmem, size = 0x12000, scoped, tag = 'internal scratch']
  #allocation2 [shape = 'f32[64,512]{1,0:T(8,128)}', space=vmem, size = 0x20000, scoped, tag = 'scratch operand']
  #allocation3 [shape = 'f32[64,512]{1,0:T(8,128)}', space=vmem, size = 0x20000, scoped, tag = 'scratch operand']
  %s0 = inlined_call_operand.vmem [shape: f32[64,8], index: 0, kind: input, shape index: {}]
  %s1 = inlined_call_operand.vmem [shape: f32[8,512], index: 1, kind: input, shape index: {}]
  %s2 = inlined_call_operand.vmem [shape: f32[8,512], index: 2, kind: input, shape index: {}]
  %s3 = inlined_call_operand.hbm [shape: f32[128,512], index: 3, kind: input, shape index: {}]
  %s4 = inlined_call_operand.hbm [shape: f32[128,512], index: 4, kind: input, shape index: {}]
  %s5 = inlined_call_operand.vmem [shape: f32[1,512], index: 5, kind: input, shape index: {}]
  %s6 = inlined_call_operand.vmem [shape: f32[1,512], index: 6, kind: input, shape index: {}]
  %s7 = inlined_call_operand.hbm [shape: f32[64,128], index: 7, kind: output, shape index: {0}]
  %s8 = inlined_call_operand.hbm [shape: f32[64,128], index: 8, kind: output, shape index: {1}]
  %9 = xla_tuple %s7, %s8
  %s10 = sld [smem:[#allocation0]]
  $region54: #{tpu_custom_call.1} parent=0
    _
  %s12 = ssub.s32 1, %s10
  %s13 = scalar_select 0, %s12, %s10
  $region1: #{tpu_custom_call.1} parent=0
    #allocation4 [shape = 'u8[262144]{0}', space=vmem, size = 0x40000, scoped, tag = 'input window, operand 3, single buffered']
    #allocation5 [shape = 's32[1]{0}', space=sflag, size = 0x4, scoped, tag = 'scoped memory for tpu_custom_call.1']
    #allocation6 [shape = 's32[1]{0}', space=sflag, size = 0x4, scoped, tag = 'scoped memory for tpu_custom_call.1']
    #allocation7 [shape = 'u8[262144]{0}', space=vmem, size = 0x40000, scoped, tag = 'input window, operand 4, single buffered']
    #allocation8 [shape = 's32[1]{0}', space=sflag, size = 0x4, scoped, tag = 'scoped memory for tpu_custom_call.1']
    #allocation9 [shape = 'u8[32768]{0}', space=vmem, size = 0x8000, scoped, tag = 'output window, operand 0, single buffered']
    #allocation10 [shape = 'u8[32768]{0}', space=vmem, size = 0x8000, scoped, tag = 'output window, operand 1, single buffered']
    #allocation11 [shape = 's32[1]{0}', space=sflag, size = 0x4, scoped, tag = 'scoped memory for tpu_custom_call.1']
    %14 = vsyncpa [#allocation5], 0
    %15 = vsyncpa [#allocation8], 0
    %16 = vsyncpa [#allocation6], 0
    %17 = vsyncpa [#allocation11], 0
    // Predicated region
    $region2: #{tpu_custom_call.1} parent=1 // pred_check
      _
    $region3: #{tpu_custom_call.1} parent=1 // pred_check_branch
      %19 = sbr.rel (0) target = $region5
    $region4: #{tpu_custom_call.1} parent=1 // pred_region
      _
    $region5: #{tpu_custom_call.1} parent=1 // pred_fallthru
      _
    // Predicated region
    $region6: #{tpu_custom_call.1} parent=1 // pred_check
      _
    $region7: #{tpu_custom_call.1} parent=1 // pred_check_branch
      %21 = sbr.rel (0) target = $region9
    $region8: #{tpu_custom_call.1} parent=1 // pred_region
      _
    $region9: #{tpu_custom_call.1} parent=1 // pred_fallthru
      _
    // Predicated region
    $region10: #{tpu_custom_call.1} parent=1 // pred_check
      _
    $region11: #{tpu_custom_call.1} parent=1 // pred_check_branch
      %23 = sbr.rel (0) target = $region13
    $region12: #{tpu_custom_call.1} parent=1 // pred_region
      _
    $region13: #{tpu_custom_call.1} parent=1 // pred_fallthru
      _
    // Predicated region
    $region14: #{tpu_custom_call.1} parent=1 // pred_check
      _
    $region15: #{tpu_custom_call.1} parent=1 // pred_check_branch
      %25 = sbr.rel (0) target = $region17
    $region16: #{tpu_custom_call.1} parent=1 // pred_region
      %s27 = ssub.s32 8192, 8192
      %28 = vsyncadd [#allocation5], %s27
      %s29 = sshll.u32 [#allocation4], 4
      %s30 = int_to_ptr.vmem [resolvable:$true] %s29
      %35 = dma.hbm_to_vmem [thread:$0]  %s3, 8192, %s30, [#allocation5], 512, 512, 32
    $region17: #{tpu_custom_call.1} parent=1 // pred_fallthru
      _
    // Predicated region
    $region18: #{tpu_custom_call.1} parent=1 // pred_check
      _
    $region19: #{tpu_custom_call.1} parent=1 // pred_check_branch
      %37 = sbr.rel (0) target = $region21
    $region20: #{tpu_custom_call.1} parent=1 // pred_region
      %s39 = ssub.s32 8192, 8192
      %40 = vsyncadd [#allocation8], %s39
      %s41 = sshll.u32 [#allocation7], 4
      %s42 = int_to_ptr.vmem [resolvable:$true] %s41
      %47 = dma.hbm_to_vmem [thread:$0]  %s4, 8192, %s42, [#allocation8], 512, 512, 32
    $region21: #{tpu_custom_call.1} parent=1 // pred_fallthru
      _
    // Predicated region
    $region22: #{tpu_custom_call.1} parent=1 // pred_check
      _
    $region23: #{tpu_custom_call.1} parent=1 // pred_check_branch
      %49 = sbr.rel (0) target = $region25
    $region24: #{tpu_custom_call.1} parent=1 // pred_region
      _
    $region25: #{tpu_custom_call.1} parent=1 // pred_fallthru
      _
    // Predicated region
    $region26: #{tpu_custom_call.1} parent=1 // pred_check
      _
    $region27: #{tpu_custom_call.1} parent=1 // pred_check_branch
      %51 = sbr.rel (0) target = $region29
    $region28: #{tpu_custom_call.1} parent=1 // pred_region
      _
    $region29: #{tpu_custom_call.1} parent=1 // pred_fallthru
      _
    // Predicated region
    $region30: #{tpu_custom_call.1} parent=1 // pred_check
      _
    $region31: #{tpu_custom_call.1} parent=1 // pred_check_branch
      %53 = sbr.rel (0) target = $region33
    $region32: #{tpu_custom_call.1} parent=1 // pred_region
      %54 = dma.done [#allocation5], 8192
    $region33: #{tpu_custom_call.1} parent=1 // pred_fallthru
      _
    // Predicated region
    $region34: #{tpu_custom_call.1} parent=1 // pred_check
      _
    $region35: #{tpu_custom_call.1} parent=1 // pred_check_branch
      %56 = sbr.rel (0) target = $region37
    $region36: #{tpu_custom_call.1} parent=1 // pred_region
      %57 = dma.done [#allocation8], 8192
    $region37: #{tpu_custom_call.1} parent=1 // pred_fallthru
      _
    %v58 = vld [vmem:[%s0] sm:$0xff]
    %v59 = vld [vmem:[%s0 + $0x8] sm:$0xff]
    %v60 = vld [vmem:[%s0 + $0x10] sm:$0xff]
    %v61 = vld [vmem:[%s0 + $0x18] sm:$0xff]
    %v62 = vld [vmem:[%s0 + $0x20] sm:$0xff]
    %v63 = vld [vmem:[%s0 + $0x28] sm:$0xff]
    %v64 = vld [vmem:[%s0 + $0x30] sm:$0xff]
    %v65 = vld [vmem:[%s0 + $0x38] sm:$0xff]
    %v66 = vld [vmem:[%s1] sm:$0xff]
    %v67 = vld [vmem:[%s1 + $0x8] sm:$0xff]
    %v68 = vld [vmem:[%s1 + $0x10] sm:$0xff]
    %v69 = vld [vmem:[%s1 + $0x18] sm:$0xff]
    %v70 = vld [vmem:[%s5] sm:$0xf]
    %v72 = vlaneseq
    %v73 = vshrl.u32 %v72, 7
    %v74 = vsub.s32 0, %v73
    %v75 = vrot.slane %v70, %v74
    %v76 = vlaneseq
    %v77 = vshrl.u32 %v76, 7
    %v78 = vsub.s32 1, %v77
    %v79 = vrot.slane %v70, %v78
    %v80 = vlaneseq
    %v81 = vshrl.u32 %v80, 7
    %v82 = vsub.s32 2, %v81
    %v83 = vrot.slane %v70, %v82
    %v84 = vlaneseq
    %v85 = vshrl.u32 %v84, 7
    %v86 = vsub.s32 3, %v85
    %v87 = vrot.slane %v70, %v86
    %vm92 = vcmask 64512
    %v94 = vsel %vm92, %v58, 0
    %v97 = vsel %vm92, %v59, 0
    %v100 = vsel %vm92, %v60, 0
    %v103 = vsel %vm92, %v61, 0
    %v106 = vsel %vm92, %v62, 0
    %v109 = vsel %vm92, %v63, 0
    %v112 = vsel %vm92, %v64, 0
    %v115 = vsel %vm92, %v65, 0
    %117 = vmatprep.subr.mxu0 0.0
    %118 = vmatpush1.msra.mxu0 0.0
    %119 = vmatprep.subr.mxu0 0.0
    %120 = vmatpush1.msra.mxu0 0.0
    %121 = vmatprep.subr.mxu0 0.0
    %122 = vmatpush1.msra.mxu0 0.0
    %123 = vmatprep.subr.mxu0 0.0
    %124 = vmatpush1.msra.mxu0 0.0
    %125 = vmatprep.subr.mxu0 0.0
    %126 = vmatpush1.msra.mxu0 0.0
    %127 = vmatprep.subr.mxu0 0.0
    %128 = vmatpush1.msra.mxu0 0.0
    %129 = vmatprep.subr.mxu0 0.0
    %130 = vmatpush1.msra.mxu0 0.0
    %131 = vmatprep.subr.mxu0 0.0
    %132 = vmatpush1.msra.mxu0 0.0
    %133 = vmatprep.subr.mxu0 0.0
    %134 = vmatpush1.msra.mxu0 0.0
    %135 = vmatprep.subr.mxu0 0.0
    %136 = vmatpush1.msra.mxu0 0.0
    %137 = vmatprep.subr.mxu0 0.0
    %138 = vmatpush1.msra.mxu0 0.0
    %139 = vmatprep.subr.mxu0 0.0
    %140 = vmatpush1.msra.mxu0 0.0
    %141 = vmatprep.subr.mxu0 0.0
    %142 = vmatpush1.msra.mxu0 0.0
    %143 = vmatprep.subr.mxu0 0.0
    %144 = vmatpush1.msra.mxu0 0.0
    %145 = vmatprep.subr.mxu0 0.0
    %146 = vmatpush1.msra.mxu0 0.0
    %147 = vmatprep.subr.mxu0 %v67
    %148 = vmatpush1.msra.mxu0 %v66
    %149 = vmatprep.subr.mxu0 0.0
    %150 = vmatpush2.msra.mxu0 0.0
    %151 = vmatprep.subr.mxu0 0.0
    %152 = vmatpush2.msra.mxu0 0.0
    %153 = vmatprep.subr.mxu0 0.0
    %154 = vmatpush2.msra.mxu0 0.0
    %155 = vmatprep.subr.mxu0 0.0
    %156 = vmatpush2.msra.mxu0 0.0
    %157 = vmatprep.subr.mxu0 0.0
    %158 = vmatpush2.msra.mxu0 0.0
    %159 = vmatprep.subr.mxu0 0.0
    %160 = vmatpush2.msra.mxu0 0.0
    %161 = vmatprep.subr.mxu0 0.0
    %162 = vmatpush2.msra.mxu0 0.0
    %163 = vmatprep.subr.mxu0 0.0
    %164 = vmatpush2.msra.mxu0 0.0
    %165 = vmatprep.subr.mxu0 0.0
    %166 = vmatpush2.msra.mxu0 0.0
    %167 = vmatprep.subr.mxu0 0.0
    %168 = vmatpush2.msra.mxu0 0.0
    %169 = vmatprep.subr.mxu0 0.0
    %170 = vmatpush2.msra.mxu0 0.0
    %171 = vmatprep.subr.mxu0 0.0
    %172 = vmatpush2.msra.mxu0 0.0
    %173 = vmatprep.subr.mxu0 0.0
    %174 = vmatpush2.msra.mxu0 0.0
    %175 = vmatprep.subr.mxu0 0.0
    %176 = vmatpush2.msra.mxu0 0.0
    %177 = vmatprep.subr.mxu0 0.0
    %178 = vmatpush2.msra.mxu0 0.0
    %179 = vmatprep.subr.mxu0 0.0
    %180 = vmatpush2.msra.mxu0 0.0
    %181 = vmatprep.mubr.f32.mxu0 0.0
    %182 = vmatmul.mubr.f32.gmra.mxu0 %v94
    %v183 = vpop.f32.mrf.mxu0
    %v184 = vadd.f32 %v75, %v183
    %v185 = vpop.f32.mrf.mxu0
    %v186 = vadd.f32 %v79, %v185
    %187 = vmatprep.mubr.f32.mxu0 0.0
    %188 = vmatmul.mubr.f32.gmra.mxu0 %v97
    %v189 = vpop.f32.mrf.mxu0
    %v190 = vadd.f32 %v75, %v189
    %v191 = vpop.f32.mrf.mxu0
    %v192 = vadd.f32 %v79, %v191
    %193 = vmatprep.mubr.f32.mxu0 0.0
    %194 = vmatmul.mubr.f32.gmra.mxu0 %v100
    %v195 = vpop.f32.mrf.mxu0
    %v196 = vadd.f32 %v75, %v195
    %v197 = vpop.f32.mrf.mxu0
    %v198 = vadd.f32 %v79, %v197
    %199 = vmatprep.mubr.f32.mxu0 0.0
    %200 = vmatmul.mubr.f32.gmra.mxu0 %v103
    %v201 = vpop.f32.mrf.mxu0
    %v202 = vadd.f32 %v75, %v201
    %v203 = vpop.f32.mrf.mxu0
    %v204 = vadd.f32 %v79, %v203
    %205 = vmatprep.mubr.f32.mxu0 0.0
    %206 = vmatmul.mubr.f32.gmra.mxu0 %v106
    %v207 = vpop.f32.mrf.mxu0
    %v208 = vadd.f32 %v75, %v207
    %v209 = vpop.f32.mrf.mxu0
    %v210 = vadd.f32 %v79, %v209
    %211 = vmatprep.mubr.f32.mxu0 0.0
    %212 = vmatmul.mubr.f32.gmra.mxu0 %v109
    %v213 = vpop.f32.mrf.mxu0
    %v214 = vadd.f32 %v75, %v213
    %v215 = vpop.f32.mrf.mxu0
    %v216 = vadd.f32 %v79, %v215
    %217 = vmatprep.mubr.f32.mxu0 0.0
    %218 = vmatmul.mubr.f32.gmra.mxu0 %v112
    %v219 = vpop.f32.mrf.mxu0
    %v220 = vadd.f32 %v75, %v219
    %v221 = vpop.f32.mrf.mxu0
    %v222 = vadd.f32 %v79, %v221
    %223 = vmatprep.mubr.f32.mxu0 0.0
    %224 = vmatmul.mubr.f32.gmra.mxu0 %v115
    %v225 = vpop.f32.mrf.mxu0
    %v226 = vadd.f32 %v75, %v225
    %v227 = vpop.f32.mrf.mxu0
    %v228 = vadd.f32 %v79, %v227
    %229 = vdwg.mxu0
    %230 = vmatprep.subr.mxu0 0.0
    %231 = vmatpush1.msra.mxu0 0.0
    %232 = vmatprep.subr.mxu0 0.0
    %233 = vmatpush1.msra.mxu0 0.0
    %234 = vmatprep.subr.mxu0 0.0
    %235 = vmatpush1.msra.mxu0 0.0
    %236 = vmatprep.subr.mxu0 0.0
    %237 = vmatpush1.msra.mxu0 0.0
    %238 = vmatprep.subr.mxu0 0.0
    %239 = vmatpush1.msra.mxu0 0.0
    %240 = vmatprep.subr.mxu0 0.0
    %241 = vmatpush1.msra.mxu0 0.0
    %242 = vmatprep.subr.mxu0 0.0
    %243 = vmatpush1.msra.mxu0 0.0
    %244 = vmatprep.subr.mxu0 0.0
    %245 = vmatpush1.msra.mxu0 0.0
    %246 = vmatprep.subr.mxu0 0.0
    %247 = vmatpush1.msra.mxu0 0.0
    %248 = vmatprep.subr.mxu0 0.0
    %249 = vmatpush1.msra.mxu0 0.0
    %250 = vmatprep.subr.mxu0 0.0
    %251 = vmatpush1.msra.mxu0 0.0
    %252 = vmatprep.subr.mxu0 0.0
    %253 = vmatpush1.msra.mxu0 0.0
    %254 = vmatprep.subr.mxu0 0.0
    %255 = vmatpush1.msra.mxu0 0.0
    %256 = vmatprep.subr.mxu0 0.0
    %257 = vmatpush1.msra.mxu0 0.0
    %258 = vmatprep.subr.mxu0 0.0
    %259 = vmatpush1.msra.mxu0 0.0
    %260 = vmatprep.subr.mxu0 %v69
    %261 = vmatpush1.msra.mxu0 %v68
    %262 = vmatprep.subr.mxu0 0.0
    %263 = vmatpush2.msra.mxu0 0.0
    %264 = vmatprep.subr.mxu0 0.0
    %265 = vmatpush2.msra.mxu0 0.0
    %266 = vmatprep.subr.mxu0 0.0
    %267 = vmatpush2.msra.mxu0 0.0
    %268 = vmatprep.subr.mxu0 0.0
    %269 = vmatpush2.msra.mxu0 0.0
    %270 = vmatprep.subr.mxu0 0.0
    %271 = vmatpush2.msra.mxu0 0.0
    %272 = vmatprep.subr.mxu0 0.0
    %273 = vmatpush2.msra.mxu0 0.0
    %274 = vmatprep.subr.mxu0 0.0
    %275 = vmatpush2.msra.mxu0 0.0
    %276 = vmatprep.subr.mxu0 0.0
    %277 = vmatpush2.msra.mxu0 0.0
    %278 = vmatprep.subr.mxu0 0.0
    %279 = vmatpush2.msra.mxu0 0.0
    %280 = vmatprep.subr.mxu0 0.0
    %281 = vmatpush2.msra.mxu0 0.0
    %282 = vmatprep.subr.mxu0 0.0
    %283 = vmatpush2.msra.mxu0 0.0
    %284 = vmatprep.subr.mxu0 0.0
    %285 = vmatpush2.msra.mxu0 0.0
    %286 = vmatprep.subr.mxu0 0.0
    %287 = vmatpush2.msra.mxu0 0.0
    %288 = vmatprep.subr.mxu0 0.0
    %289 = vmatpush2.msra.mxu0 0.0
    %290 = vmatprep.subr.mxu0 0.0
    %291 = vmatpush2.msra.mxu0 0.0
    %292 = vmatprep.subr.mxu0 0.0
    %293 = vmatpush2.msra.mxu0 0.0
    %294 = vmatprep.mubr.f32.mxu0 0.0
    %295 = vmatmul.mubr.f32.gmra.mxu0 %v94
    %v296 = vpop.f32.mrf.mxu0
    %v297 = vadd.f32 %v83, %v296
    %v298 = vpop.f32.mrf.mxu0
    %v299 = vadd.f32 %v87, %v298
    %300 = vmatprep.mubr.f32.mxu0 0.0
    %301 = vmatmul.mubr.f32.gmra.mxu0 %v97
    %v302 = vpop.f32.mrf.mxu0
    %v303 = vadd.f32 %v83, %v302
    %v304 = vpop.f32.mrf.mxu0
    %v305 = vadd.f32 %v87, %v304
    %306 = vmatprep.mubr.f32.mxu0 0.0
    %307 = vmatmul.mubr.f32.gmra.mxu0 %v100
    %v308 = vpop.f32.mrf.mxu0
    %v309 = vadd.f32 %v83, %v308
    %v310 = vpop.f32.mrf.mxu0
    %v311 = vadd.f32 %v87, %v310
    %312 = vmatprep.mubr.f32.mxu0 0.0
    %313 = vmatmul.mubr.f32.gmra.mxu0 %v103
    %v314 = vpop.f32.mrf.mxu0
    %v315 = vadd.f32 %v83, %v314
    %v316 = vpop.f32.mrf.mxu0
    %v317 = vadd.f32 %v87, %v316
    %318 = vmatprep.mubr.f32.mxu0 0.0
    %319 = vmatmul.mubr.f32.gmra.mxu0 %v106
    %v320 = vpop.f32.mrf.mxu0
    %v321 = vadd.f32 %v83, %v320
    %v322 = vpop.f32.mrf.mxu0
    %v323 = vadd.f32 %v87, %v322
    %324 = vmatprep.mubr.f32.mxu0 0.0
    %325 = vmatmul.mubr.f32.gmra.mxu0 %v109
    %v326 = vpop.f32.mrf.mxu0
    %v327 = vadd.f32 %v83, %v326
    %v328 = vpop.f32.mrf.mxu0
    %v329 = vadd.f32 %v87, %v328
    %330 = vmatprep.mubr.f32.mxu0 0.0
    %331 = vmatmul.mubr.f32.gmra.mxu0 %v112
    %v332 = vpop.f32.mrf.mxu0
    %v333 = vadd.f32 %v83, %v332
    %v334 = vpop.f32.mrf.mxu0
    %v335 = vadd.f32 %v87, %v334
    %336 = vmatprep.mubr.f32.mxu0 0.0
    %337 = vmatmul.mubr.f32.gmra.mxu0 %v115
    %v338 = vpop.f32.mrf.mxu0
    %v339 = vadd.f32 %v83, %v338
    %v340 = vpop.f32.mrf.mxu0
    %v341 = vadd.f32 %v87, %v340
    %342 = vdwg.mxu0
    %343 = vst [vmem:[#allocation2] sm:$0xff] %v184
    %344 = vst [vmem:[#allocation2 + $0x8] sm:$0xff] %v186
    %345 = vst [vmem:[#allocation2 + $0x10] sm:$0xff] %v297
    %346 = vst [vmem:[#allocation2 + $0x18] sm:$0xff] %v299
    %347 = vst [vmem:[#allocation2 + $0x20] sm:$0xff] %v190
    %348 = vst [vmem:[#allocation2 + $0x28] sm:$0xff] %v192
    %349 = vst [vmem:[#allocation2 + $0x30] sm:$0xff] %v303
    %350 = vst [vmem:[#allocation2 + $0x38] sm:$0xff] %v305
    %351 = vst [vmem:[#allocation2 + $0x40] sm:$0xff] %v196
    %352 = vst [vmem:[#allocation2 + $0x48] sm:$0xff] %v198
    %353 = vst [vmem:[#allocation2 + $0x50] sm:$0xff] %v309
    %354 = vst [vmem:[#allocation2 + $0x58] sm:$0xff] %v311
    %355 = vst [vmem:[#allocation2 + $0x60] sm:$0xff] %v202
    %356 = vst [vmem:[#allocation2 + $0x68] sm:$0xff] %v204
    %357 = vst [vmem:[#allocation2 + $0x70] sm:$0xff] %v315
    %358 = vst [vmem:[#allocation2 + $0x78] sm:$0xff] %v317
    %359 = vst [vmem:[#allocation2 + $0x80] sm:$0xff] %v208
    %360 = vst [vmem:[#allocation2 + $0x88] sm:$0xff] %v210
    %361 = vst [vmem:[#allocation2 + $0x90] sm:$0xff] %v321
    %362 = vst [vmem:[#allocation2 + $0x98] sm:$0xff] %v323
    %363 = vst [vmem:[#allocation2 + $0xa0] sm:$0xff] %v214
    %364 = vst [vmem:[#allocation2 + $0xa8] sm:$0xff] %v216
    %365 = vst [vmem:[#allocation2 + $0xb0] sm:$0xff] %v327
    %366 = vst [vmem:[#allocation2 + $0xb8] sm:$0xff] %v329
    %367 = vst [vmem:[#allocation2 + $0xc0] sm:$0xff] %v220
    %368 = vst [vmem:[#allocation2 + $0xc8] sm:$0xff] %v222
    %369 = vst [vmem:[#allocation2 + $0xd0] sm:$0xff] %v333
    %370 = vst [vmem:[#allocation2 + $0xd8] sm:$0xff] %v335
    %371 = vst [vmem:[#allocation2 + $0xe0] sm:$0xff] %v226
    %372 = vst [vmem:[#allocation2 + $0xe8] sm:$0xff] %v228
    %373 = vst [vmem:[#allocation2 + $0xf0] sm:$0xff] %v339
    %374 = vst [vmem:[#allocation2 + $0xf8] sm:$0xff] %v341
    %v375 = vld [vmem:[%s0] sm:$0xff]
    %v376 = vld [vmem:[%s0 + $0x8] sm:$0xff]
    %v377 = vld [vmem:[%s0 + $0x10] sm:$0xff]
    %v378 = vld [vmem:[%s0 + $0x18] sm:$0xff]
    %v379 = vld [vmem:[%s0 + $0x20] sm:$0xff]
    %v380 = vld [vmem:[%s0 + $0x28] sm:$0xff]
    %v381 = vld [vmem:[%s0 + $0x30] sm:$0xff]
    %v382 = vld [vmem:[%s0 + $0x38] sm:$0xff]
    %v383 = vld [vmem:[%s2] sm:$0xff]
    %v384 = vld [vmem:[%s2 + $0x8] sm:$0xff]
    %v385 = vld [vmem:[%s2 + $0x10] sm:$0xff]
    %v386 = vld [vmem:[%s2 + $0x18] sm:$0xff]
    %v387 = vld [vmem:[%s6] sm:$0xf]
    %v389 = vlaneseq
    %v390 = vshrl.u32 %v389, 7
    %v391 = vsub.s32 0, %v390
    %v392 = vrot.slane %v387, %v391
    %v393 = vlaneseq
    %v394 = vshrl.u32 %v393, 7
    %v395 = vsub.s32 1, %v394
    %v396 = vrot.slane %v387, %v395
    %v397 = vlaneseq
    %v398 = vshrl.u32 %v397, 7
    %v399 = vsub.s32 2, %v398
    %v400 = vrot.slane %v387, %v399
    %v401 = vlaneseq
    %v402 = vshrl.u32 %v401, 7
    %v403 = vsub.s32 3, %v402
    %v404 = vrot.slane %v387, %v403
    %v410 = vsel %vm92, %v375, 0
    %v413 = vsel %vm92, %v376, 0
    %v416 = vsel %vm92, %v377, 0
    %v419 = vsel %vm92, %v378, 0
    %v422 = vsel %vm92, %v379, 0
    %v425 = vsel %vm92, %v380, 0
    %v428 = vsel %vm92, %v381, 0
    %v431 = vsel %vm92, %v382, 0
    %433 = vmatprep.subr.mxu0 0.0
    %434 = vmatpush1.msra.mxu0 0.0
    %435 = vmatprep.subr.mxu0 0.0
    %436 = vmatpush1.msra.mxu0 0.0
    %437 = vmatprep.subr.mxu0 0.0
    %438 = vmatpush1.msra.mxu0 0.0
    %439 = vmatprep.subr.mxu0 0.0
    %440 = vmatpush1.msra.mxu0 0.0
    %441 = vmatprep.subr.mxu0 0.0
    %442 = vmatpush1.msra.mxu0 0.0
    %443 = vmatprep.subr.mxu0 0.0
    %444 = vmatpush1.msra.mxu0 0.0
    %445 = vmatprep.subr.mxu0 0.0
    %446 = vmatpush1.msra.mxu0 0.0
    %447 = vmatprep.subr.mxu0 0.0
    %448 = vmatpush1.msra.mxu0 0.0
    %449 = vmatprep.subr.mxu0 0.0
    %450 = vmatpush1.msra.mxu0 0.0
    %451 = vmatprep.subr.mxu0 0.0
    %452 = vmatpush1.msra.mxu0 0.0
    %453 = vmatprep.subr.mxu0 0.0
    %454 = vmatpush1.msra.mxu0 0.0
    %455 = vmatprep.subr.mxu0 0.0
    %456 = vmatpush1.msra.mxu0 0.0
    %457 = vmatprep.subr.mxu0 0.0
    %458 = vmatpush1.msra.mxu0 0.0
    %459 = vmatprep.subr.mxu0 0.0
    %460 = vmatpush1.msra.mxu0 0.0
    %461 = vmatprep.subr.mxu0 0.0
    %462 = vmatpush1.msra.mxu0 0.0
    %463 = vmatprep.subr.mxu0 %v384
    %464 = vmatpush1.msra.mxu0 %v383
    %465 = vmatprep.subr.mxu0 0.0
    %466 = vmatpush2.msra.mxu0 0.0
    %467 = vmatprep.subr.mxu0 0.0
    %468 = vmatpush2.msra.mxu0 0.0
    %469 = vmatprep.subr.mxu0 0.0
    %470 = vmatpush2.msra.mxu0 0.0
    %471 = vmatprep.subr.mxu0 0.0
    %472 = vmatpush2.msra.mxu0 0.0
    %473 = vmatprep.subr.mxu0 0.0
    %474 = vmatpush2.msra.mxu0 0.0
    %475 = vmatprep.subr.mxu0 0.0
    %476 = vmatpush2.msra.mxu0 0.0
    %477 = vmatprep.subr.mxu0 0.0
    %478 = vmatpush2.msra.mxu0 0.0
    %479 = vmatprep.subr.mxu0 0.0
    %480 = vmatpush2.msra.mxu0 0.0
    %481 = vmatprep.subr.mxu0 0.0
    %482 = vmatpush2.msra.mxu0 0.0
    %483 = vmatprep.subr.mxu0 0.0
    %484 = vmatpush2.msra.mxu0 0.0
    %485 = vmatprep.subr.mxu0 0.0
    %486 = vmatpush2.msra.mxu0 0.0
    %487 = vmatprep.subr.mxu0 0.0
    %488 = vmatpush2.msra.mxu0 0.0
    %489 = vmatprep.subr.mxu0 0.0
    %490 = vmatpush2.msra.mxu0 0.0
    %491 = vmatprep.subr.mxu0 0.0
    %492 = vmatpush2.msra.mxu0 0.0
    %493 = vmatprep.subr.mxu0 0.0
    %494 = vmatpush2.msra.mxu0 0.0
    %495 = vmatprep.subr.mxu0 0.0
    %496 = vmatpush2.msra.mxu0 0.0
    %497 = vmatprep.mubr.f32.mxu0 0.0
    %498 = vmatmul.mubr.f32.gmra.mxu0 %v410
    %v499 = vpop.f32.mrf.mxu0
    %v500 = vadd.f32 %v392, %v499
    %v501 = vpop.f32.mrf.mxu0
    %v502 = vadd.f32 %v396, %v501
    %503 = vmatprep.mubr.f32.mxu0 0.0
    %504 = vmatmul.mubr.f32.gmra.mxu0 %v413
    %v505 = vpop.f32.mrf.mxu0
    %v506 = vadd.f32 %v392, %v505
    %v507 = vpop.f32.mrf.mxu0
    %v508 = vadd.f32 %v396, %v507
    %509 = vmatprep.mubr.f32.mxu0 0.0
    %510 = vmatmul.mubr.f32.gmra.mxu0 %v416
    %v511 = vpop.f32.mrf.mxu0
    %v512 = vadd.f32 %v392, %v511
    %v513 = vpop.f32.mrf.mxu0
    %v514 = vadd.f32 %v396, %v513
    %515 = vmatprep.mubr.f32.mxu0 0.0
    %516 = vmatmul.mubr.f32.gmra.mxu0 %v419
    %v517 = vpop.f32.mrf.mxu0
    %v518 = vadd.f32 %v392, %v517
    %v519 = vpop.f32.mrf.mxu0
    %v520 = vadd.f32 %v396, %v519
    %521 = vmatprep.mubr.f32.mxu0 0.0
    %522 = vmatmul.mubr.f32.gmra.mxu0 %v422
    %v523 = vpop.f32.mrf.mxu0
    %v524 = vadd.f32 %v392, %v523
    %v525 = vpop.f32.mrf.mxu0
    %v526 = vadd.f32 %v396, %v525
    %527 = vmatprep.mubr.f32.mxu0 0.0
    %528 = vmatmul.mubr.f32.gmra.mxu0 %v425
    %v529 = vpop.f32.mrf.mxu0
    %v530 = vadd.f32 %v392, %v529
    %v531 = vpop.f32.mrf.mxu0
    %v532 = vadd.f32 %v396, %v531
    %533 = vmatprep.mubr.f32.mxu0 0.0
    %534 = vmatmul.mubr.f32.gmra.mxu0 %v428
    %v535 = vpop.f32.mrf.mxu0
    %v536 = vadd.f32 %v392, %v535
    %v537 = vpop.f32.mrf.mxu0
    %v538 = vadd.f32 %v396, %v537
    %539 = vmatprep.mubr.f32.mxu0 0.0
    %540 = vmatmul.mubr.f32.gmra.mxu0 %v431
    %v541 = vpop.f32.mrf.mxu0
    %v542 = vadd.f32 %v392, %v541
    %v543 = vpop.f32.mrf.mxu0
    %v544 = vadd.f32 %v396, %v543
    %545 = vdwg.mxu0
    %546 = vmatprep.subr.mxu0 0.0
    %547 = vmatpush1.msra.mxu0 0.0
    %548 = vmatprep.subr.mxu0 0.0
    %549 = vmatpush1.msra.mxu0 0.0
    %550 = vmatprep.subr.mxu0 0.0
    %551 = vmatpush1.msra.mxu0 0.0
    %552 = vmatprep.subr.mxu0 0.0
    %553 = vmatpush1.msra.mxu0 0.0
    %554 = vmatprep.subr.mxu0 0.0
    %555 = vmatpush1.msra.mxu0 0.0
    %556 = vmatprep.subr.mxu0 0.0
    %557 = vmatpush1.msra.mxu0 0.0
    %558 = vmatprep.subr.mxu0 0.0
    %559 = vmatpush1.msra.mxu0 0.0
    %560 = vmatprep.subr.mxu0 0.0
    %561 = vmatpush1.msra.mxu0 0.0
    %562 = vmatprep.subr.mxu0 0.0
    %563 = vmatpush1.msra.mxu0 0.0
    %564 = vmatprep.subr.mxu0 0.0
    %565 = vmatpush1.msra.mxu0 0.0
    %566 = vmatprep.subr.mxu0 0.0
    %567 = vmatpush1.msra.mxu0 0.0
    %568 = vmatprep.subr.mxu0 0.0
    %569 = vmatpush1.msra.mxu0 0.0
    %570 = vmatprep.subr.mxu0 0.0
    %571 = vmatpush1.msra.mxu0 0.0
    %572 = vmatprep.subr.mxu0 0.0
    %573 = vmatpush1.msra.mxu0 0.0
    %574 = vmatprep.subr.mxu0 0.0
    %575 = vmatpush1.msra.mxu0 0.0
    %576 = vmatprep.subr.mxu0 %v386
    %577 = vmatpush1.msra.mxu0 %v385
    %578 = vmatprep.subr.mxu0 0.0
    %579 = vmatpush2.msra.mxu0 0.0
    %580 = vmatprep.subr.mxu0 0.0
    %581 = vmatpush2.msra.mxu0 0.0
    %582 = vmatprep.subr.mxu0 0.0
    %583 = vmatpush2.msra.mxu0 0.0
    %584 = vmatprep.subr.mxu0 0.0
    %585 = vmatpush2.msra.mxu0 0.0
    %586 = vmatprep.subr.mxu0 0.0
    %587 = vmatpush2.msra.mxu0 0.0
    %588 = vmatprep.subr.mxu0 0.0
    %589 = vmatpush2.msra.mxu0 0.0
    %590 = vmatprep.subr.mxu0 0.0
    %591 = vmatpush2.msra.mxu0 0.0
    %592 = vmatprep.subr.mxu0 0.0
    %593 = vmatpush2.msra.mxu0 0.0
    %594 = vmatprep.subr.mxu0 0.0
    %595 = vmatpush2.msra.mxu0 0.0
    %596 = vmatprep.subr.mxu0 0.0
    %597 = vmatpush2.msra.mxu0 0.0
    %598 = vmatprep.subr.mxu0 0.0
    %599 = vmatpush2.msra.mxu0 0.0
    %600 = vmatprep.subr.mxu0 0.0
    %601 = vmatpush2.msra.mxu0 0.0
    %602 = vmatprep.subr.mxu0 0.0
    %603 = vmatpush2.msra.mxu0 0.0
    %604 = vmatprep.subr.mxu0 0.0
    %605 = vmatpush2.msra.mxu0 0.0
    %606 = vmatprep.subr.mxu0 0.0
    %607 = vmatpush2.msra.mxu0 0.0
    %608 = vmatprep.subr.mxu0 0.0
    %609 = vmatpush2.msra.mxu0 0.0
    %610 = vmatprep.mubr.f32.mxu0 0.0
    %611 = vmatmul.mubr.f32.gmra.mxu0 %v410
    %v612 = vpop.f32.mrf.mxu0
    %v613 = vadd.f32 %v400, %v612
    %v614 = vpop.f32.mrf.mxu0
    %v615 = vadd.f32 %v404, %v614
    %616 = vmatprep.mubr.f32.mxu0 0.0
    %617 = vmatmul.mubr.f32.gmra.mxu0 %v413
    %v618 = vpop.f32.mrf.mxu0
    %v619 = vadd.f32 %v400, %v618
    %v620 = vpop.f32.mrf.mxu0
    %v621 = vadd.f32 %v404, %v620
    %622 = vmatprep.mubr.f32.mxu0 0.0
    %623 = vmatmul.mubr.f32.gmra.mxu0 %v416
    %v624 = vpop.f32.mrf.mxu0
    %v625 = vadd.f32 %v400, %v624
    %v626 = vpop.f32.mrf.mxu0
    %v627 = vadd.f32 %v404, %v626
    %628 = vmatprep.mubr.f32.mxu0 0.0
    %629 = vmatmul.mubr.f32.gmra.mxu0 %v419
    %v630 = vpop.f32.mrf.mxu0
    %v631 = vadd.f32 %v400, %v630
    %v632 = vpop.f32.mrf.mxu0
    %v633 = vadd.f32 %v404, %v632
    %634 = vmatprep.mubr.f32.mxu0 0.0
    %635 = vmatmul.mubr.f32.gmra.mxu0 %v422
    %v636 = vpop.f32.mrf.mxu0
    %v637 = vadd.f32 %v400, %v636
    %v638 = vpop.f32.mrf.mxu0
    %v639 = vadd.f32 %v404, %v638
    %640 = vmatprep.mubr.f32.mxu0 0.0
    %641 = vmatmul.mubr.f32.gmra.mxu0 %v425
    %v642 = vpop.f32.mrf.mxu0
    %v643 = vadd.f32 %v400, %v642
    %v644 = vpop.f32.mrf.mxu0
    %v645 = vadd.f32 %v404, %v644
    %646 = vmatprep.mubr.f32.mxu0 0.0
    %647 = vmatmul.mubr.f32.gmra.mxu0 %v428
    %v648 = vpop.f32.mrf.mxu0
    %v649 = vadd.f32 %v400, %v648
    %v650 = vpop.f32.mrf.mxu0
    %v651 = vadd.f32 %v404, %v650
    %652 = vmatprep.mubr.f32.mxu0 0.0
    %653 = vmatmul.mubr.f32.gmra.mxu0 %v431
    %v654 = vpop.f32.mrf.mxu0
    %v655 = vadd.f32 %v400, %v654
    %v656 = vpop.f32.mrf.mxu0
    %v657 = vadd.f32 %v404, %v656
    %658 = vdwg.mxu0
    %659 = vst [vmem:[#allocation3] sm:$0xff] %v500
    %660 = vst [vmem:[#allocation3 + $0x8] sm:$0xff] %v502
    %661 = vst [vmem:[#allocation3 + $0x10] sm:$0xff] %v613
    %662 = vst [vmem:[#allocation3 + $0x18] sm:$0xff] %v615
    %663 = vst [vmem:[#allocation3 + $0x20] sm:$0xff] %v506
    %664 = vst [vmem:[#allocation3 + $0x28] sm:$0xff] %v508
    %665 = vst [vmem:[#allocation3 + $0x30] sm:$0xff] %v619
    %666 = vst [vmem:[#allocation3 + $0x38] sm:$0xff] %v621
    %667 = vst [vmem:[#allocation3 + $0x40] sm:$0xff] %v512
    %668 = vst [vmem:[#allocation3 + $0x48] sm:$0xff] %v514
    %669 = vst [vmem:[#allocation3 + $0x50] sm:$0xff] %v625
    %670 = vst [vmem:[#allocation3 + $0x58] sm:$0xff] %v627
    %671 = vst [vmem:[#allocation3 + $0x60] sm:$0xff] %v518
    %672 = vst [vmem:[#allocation3 + $0x68] sm:$0xff] %v520
    %673 = vst [vmem:[#allocation3 + $0x70] sm:$0xff] %v631
    %674 = vst [vmem:[#allocation3 + $0x78] sm:$0xff] %v633
    %675 = vst [vmem:[#allocation3 + $0x80] sm:$0xff] %v524
    %676 = vst [vmem:[#allocation3 + $0x88] sm:$0xff] %v526
    %677 = vst [vmem:[#allocation3 + $0x90] sm:$0xff] %v637
    %678 = vst [vmem:[#allocation3 + $0x98] sm:$0xff] %v639
    %679 = vst [vmem:[#allocation3 + $0xa0] sm:$0xff] %v530
    %680 = vst [vmem:[#allocation3 + $0xa8] sm:$0xff] %v532
    %681 = vst [vmem:[#allocation3 + $0xb0] sm:$0xff] %v643
    %682 = vst [vmem:[#allocation3 + $0xb8] sm:$0xff] %v645
    %683 = vst [vmem:[#allocation3 + $0xc0] sm:$0xff] %v536
    %684 = vst [vmem:[#allocation3 + $0xc8] sm:$0xff] %v538
    %685 = vst [vmem:[#allocation3 + $0xd0] sm:$0xff] %v649
    %686 = vst [vmem:[#allocation3 + $0xd8] sm:$0xff] %v651
    %687 = vst [vmem:[#allocation3 + $0xe0] sm:$0xff] %v542
    %688 = vst [vmem:[#allocation3 + $0xe8] sm:$0xff] %v544
    %689 = vst [vmem:[#allocation3 + $0xf0] sm:$0xff] %v655
    %690 = vst [vmem:[#allocation3 + $0xf8] sm:$0xff] %v657
    %v691 = vld [vmem:[#allocation4] sm:$0xff]
    %v692 = vld [vmem:[#allocation4 + $0x8] sm:$0xff]
    %v693 = vld [vmem:[#allocation4 + $0x10] sm:$0xff]
    %v694 = vld [vmem:[#allocation4 + $0x18] sm:$0xff]
    %v695 = vld [vmem:[#allocation4 + $0x20] sm:$0xff]
    %v696 = vld [vmem:[#allocation4 + $0x28] sm:$0xff]
    %v697 = vld [vmem:[#allocation4 + $0x30] sm:$0xff]
    %v698 = vld [vmem:[#allocation4 + $0x38] sm:$0xff]
    %v699 = vld [vmem:[#allocation4 + $0x40] sm:$0xff]
    %v700 = vld [vmem:[#allocation4 + $0x48] sm:$0xff]
    %v701 = vld [vmem:[#allocation4 + $0x50] sm:$0xff]
    %v702 = vld [vmem:[#allocation4 + $0x58] sm:$0xff]
    %v703 = vld [vmem:[#allocation4 + $0x60] sm:$0xff]
    %v704 = vld [vmem:[#allocation4 + $0x68] sm:$0xff]
    %v705 = vld [vmem:[#allocation4 + $0x70] sm:$0xff]
    %v706 = vld [vmem:[#allocation4 + $0x78] sm:$0xff]
    %v707 = vld [vmem:[#allocation4 + $0x80] sm:$0xff]
    %v708 = vld [vmem:[#allocation4 + $0x88] sm:$0xff]
    %v709 = vld [vmem:[#allocation4 + $0x90] sm:$0xff]
    %v710 = vld [vmem:[#allocation4 + $0x98] sm:$0xff]
    %v711 = vld [vmem:[#allocation4 + $0xa0] sm:$0xff]
    %v712 = vld [vmem:[#allocation4 + $0xa8] sm:$0xff]
    %v713 = vld [vmem:[#allocation4 + $0xb0] sm:$0xff]
    %v714 = vld [vmem:[#allocation4 + $0xb8] sm:$0xff]
    %v715 = vld [vmem:[#allocation4 + $0xc0] sm:$0xff]
    %v716 = vld [vmem:[#allocation4 + $0xc8] sm:$0xff]
    %v717 = vld [vmem:[#allocation4 + $0xd0] sm:$0xff]
    %v718 = vld [vmem:[#allocation4 + $0xd8] sm:$0xff]
    %v719 = vld [vmem:[#allocation4 + $0xe0] sm:$0xff]
    %v720 = vld [vmem:[#allocation4 + $0xe8] sm:$0xff]
    %v721 = vld [vmem:[#allocation4 + $0xf0] sm:$0xff]
    %v722 = vld [vmem:[#allocation4 + $0xf8] sm:$0xff]
    %v723 = vld [vmem:[#allocation4 + $0x100] sm:$0xff]
    %v724 = vld [vmem:[#allocation4 + $0x108] sm:$0xff]
    %v725 = vld [vmem:[#allocation4 + $0x110] sm:$0xff]
    %v726 = vld [vmem:[#allocation4 + $0x118] sm:$0xff]
    %v727 = vld [vmem:[#allocation4 + $0x120] sm:$0xff]
    %v728 = vld [vmem:[#allocation4 + $0x128] sm:$0xff]
    %v729 = vld [vmem:[#allocation4 + $0x130] sm:$0xff]
    %v730 = vld [vmem:[#allocation4 + $0x138] sm:$0xff]
    %v731 = vld [vmem:[#allocation4 + $0x140] sm:$0xff]
    %v732 = vld [vmem:[#allocation4 + $0x148] sm:$0xff]
    %v733 = vld [vmem:[#allocation4 + $0x150] sm:$0xff]
    %v734 = vld [vmem:[#allocation4 + $0x158] sm:$0xff]
    %v735 = vld [vmem:[#allocation4 + $0x160] sm:$0xff]
    %v736 = vld [vmem:[#allocation4 + $0x168] sm:$0xff]
    %v737 = vld [vmem:[#allocation4 + $0x170] sm:$0xff]
    %v738 = vld [vmem:[#allocation4 + $0x178] sm:$0xff]
    %v739 = vld [vmem:[#allocation4 + $0x180] sm:$0xff]
    %v740 = vld [vmem:[#allocation4 + $0x188] sm:$0xff]
    %v741 = vld [vmem:[#allocation4 + $0x190] sm:$0xff]
    %v742 = vld [vmem:[#allocation4 + $0x198] sm:$0xff]
    %v743 = vld [vmem:[#allocation4 + $0x1a0] sm:$0xff]
    %v744 = vld [vmem:[#allocation4 + $0x1a8] sm:$0xff]
    %v745 = vld [vmem:[#allocation4 + $0x1b0] sm:$0xff]
    %v746 = vld [vmem:[#allocation4 + $0x1b8] sm:$0xff]
    %v747 = vld [vmem:[#allocation4 + $0x1c0] sm:$0xff]
    %v748 = vld [vmem:[#allocation4 + $0x1c8] sm:$0xff]
    %v749 = vld [vmem:[#allocation4 + $0x1d0] sm:$0xff]
    %v750 = vld [vmem:[#allocation4 + $0x1d8] sm:$0xff]
    %v751 = vld [vmem:[#allocation4 + $0x1e0] sm:$0xff]
    %v752 = vld [vmem:[#allocation4 + $0x1e8] sm:$0xff]
    %v753 = vld [vmem:[#allocation4 + $0x1f0] sm:$0xff]
    %v754 = vld [vmem:[#allocation4 + $0x1f8] sm:$0xff]
    %v755 = vld [vmem:[#allocation7] sm:$0xff]
    %v756 = vld [vmem:[#allocation7 + $0x8] sm:$0xff]
    %v757 = vld [vmem:[#allocation7 + $0x10] sm:$0xff]
    %v758 = vld [vmem:[#allocation7 + $0x18] sm:$0xff]
    %v759 = vld [vmem:[#allocation7 + $0x20] sm:$0xff]
    %v760 = vld [vmem:[#allocation7 + $0x28] sm:$0xff]
    %v761 = vld [vmem:[#allocation7 + $0x30] sm:$0xff]
    %v762 = vld [vmem:[#allocation7 + $0x38] sm:$0xff]
    %v763 = vld [vmem:[#allocation7 + $0x40] sm:$0xff]
    %v764 = vld [vmem:[#allocation7 + $0x48] sm:$0xff]
    %v765 = vld [vmem:[#allocation7 + $0x50] sm:$0xff]
    %v766 = vld [vmem:[#allocation7 + $0x58] sm:$0xff]
    %v767 = vld [vmem:[#allocation7 + $0x60] sm:$0xff]
    %v768 = vld [vmem:[#allocation7 + $0x68] sm:$0xff]
    %v769 = vld [vmem:[#allocation7 + $0x70] sm:$0xff]
    %v770 = vld [vmem:[#allocation7 + $0x78] sm:$0xff]
    %v771 = vld [vmem:[#allocation7 + $0x80] sm:$0xff]
    %v772 = vld [vmem:[#allocation7 + $0x88] sm:$0xff]
    %v773 = vld [vmem:[#allocation7 + $0x90] sm:$0xff]
    %v774 = vld [vmem:[#allocation7 + $0x98] sm:$0xff]
    %v775 = vld [vmem:[#allocation7 + $0xa0] sm:$0xff]
    %v776 = vld [vmem:[#allocation7 + $0xa8] sm:$0xff]
    %v777 = vld [vmem:[#allocation7 + $0xb0] sm:$0xff]
    %v778 = vld [vmem:[#allocation7 + $0xb8] sm:$0xff]
    %v779 = vld [vmem:[#allocation7 + $0xc0] sm:$0xff]
    %v780 = vld [vmem:[#allocation7 + $0xc8] sm:$0xff]
    %v781 = vld [vmem:[#allocation7 + $0xd0] sm:$0xff]
    %v782 = vld [vmem:[#allocation7 + $0xd8] sm:$0xff]
    %v783 = vld [vmem:[#allocation7 + $0xe0] sm:$0xff]
    %v784 = vld [vmem:[#allocation7 + $0xe8] sm:$0xff]
    %v785 = vld [vmem:[#allocation7 + $0xf0] sm:$0xff]
    %v786 = vld [vmem:[#allocation7 + $0xf8] sm:$0xff]
    %v787 = vld [vmem:[#allocation7 + $0x100] sm:$0xff]
    %v788 = vld [vmem:[#allocation7 + $0x108] sm:$0xff]
    %v789 = vld [vmem:[#allocation7 + $0x110] sm:$0xff]
    %v790 = vld [vmem:[#allocation7 + $0x118] sm:$0xff]
    %v791 = vld [vmem:[#allocation7 + $0x120] sm:$0xff]
    %v792 = vld [vmem:[#allocation7 + $0x128] sm:$0xff]
    %v793 = vld [vmem:[#allocation7 + $0x130] sm:$0xff]
    %v794 = vld [vmem:[#allocation7 + $0x138] sm:$0xff]
    %v795 = vld [vmem:[#allocation7 + $0x140] sm:$0xff]
    %v796 = vld [vmem:[#allocation7 + $0x148] sm:$0xff]
    %v797 = vld [vmem:[#allocation7 + $0x150] sm:$0xff]
    %v798 = vld [vmem:[#allocation7 + $0x158] sm:$0xff]
    %v799 = vld [vmem:[#allocation7 + $0x160] sm:$0xff]
    %v800 = vld [vmem:[#allocation7 + $0x168] sm:$0xff]
    %v801 = vld [vmem:[#allocation7 + $0x170] sm:$0xff]
    %v802 = vld [vmem:[#allocation7 + $0x178] sm:$0xff]
    %v803 = vld [vmem:[#allocation7 + $0x180] sm:$0xff]
    %v804 = vld [vmem:[#allocation7 + $0x188] sm:$0xff]
    %v805 = vld [vmem:[#allocation7 + $0x190] sm:$0xff]
    %v806 = vld [vmem:[#allocation7 + $0x198] sm:$0xff]
    %v807 = vld [vmem:[#allocation7 + $0x1a0] sm:$0xff]
    %v808 = vld [vmem:[#allocation7 + $0x1a8] sm:$0xff]
    %v809 = vld [vmem:[#allocation7 + $0x1b0] sm:$0xff]
    %v810 = vld [vmem:[#allocation7 + $0x1b8] sm:$0xff]
    %v811 = vld [vmem:[#allocation7 + $0x1c0] sm:$0xff]
    %v812 = vld [vmem:[#allocation7 + $0x1c8] sm:$0xff]
    %v813 = vld [vmem:[#allocation7 + $0x1d0] sm:$0xff]
    %v814 = vld [vmem:[#allocation7 + $0x1d8] sm:$0xff]
    %v815 = vld [vmem:[#allocation7 + $0x1e0] sm:$0xff]
    %v816 = vld [vmem:[#allocation7 + $0x1e8] sm:$0xff]
    %v817 = vld [vmem:[#allocation7 + $0x1f0] sm:$0xff]
    %v818 = vld [vmem:[#allocation7 + $0x1f8] sm:$0xff]
    %s819 = smul.u32 0, 4
    %s820 = smul.addr %s819, 8
    %s821 = scalar_lea.vmem [#allocation2], %s820
    %v822 = vld [vmem:[%s821] sm:$0xff]
    %v823 = vld [vmem:[%s821 + $0x8] sm:$0xff]
    %v824 = vld [vmem:[%s821 + $0x10] sm:$0xff]
    %v825 = vld [vmem:[%s821 + $0x18] sm:$0xff]
    %826 = vmatprep.subr.mxu0 %v752
    %827 = vmatpush1.msra.mxu0 %v751
    %828 = vmatprep.subr.mxu0 %v748
    %829 = vmatpush1.msra.mxu0 %v747
    %830 = vmatprep.subr.mxu0 %v744
    %831 = vmatpush1.msra.mxu0 %v743
    %832 = vmatprep.subr.mxu0 %v740
    %833 = vmatpush1.msra.mxu0 %v739
    %834 = vmatprep.subr.mxu0 %v736
    %835 = vmatpush1.msra.mxu0 %v735
    %836 = vmatprep.subr.mxu0 %v732
    %837 = vmatpush1.msra.mxu0 %v731
    %838 = vmatprep.subr.mxu0 %v728
    %839 = vmatpush1.msra.mxu0 %v727
    %840 = vmatprep.subr.mxu0 %v724
    %841 = vmatpush1.msra.mxu0 %v723
    %842 = vmatprep.subr.mxu0 %v720
    %843 = vmatpush1.msra.mxu0 %v719
    %844 = vmatprep.subr.mxu0 %v716
    %845 = vmatpush1.msra.mxu0 %v715
    %846 = vmatprep.subr.mxu0 %v712
    %847 = vmatpush1.msra.mxu0 %v711
    %848 = vmatprep.subr.mxu0 %v708
    %849 = vmatpush1.msra.mxu0 %v707
    %850 = vmatprep.subr.mxu0 %v704
    %851 = vmatpush1.msra.mxu0 %v703
    %852 = vmatprep.subr.mxu0 %v700
    %853 = vmatpush1.msra.mxu0 %v699
    %854 = vmatprep.subr.mxu0 %v696
    %855 = vmatpush1.msra.mxu0 %v695
    %856 = vmatprep.subr.mxu0 %v692
    %857 = vmatpush1.msra.mxu0 %v691
    %858 = vmatprep.subr.mxu0 0.0
    %859 = vmatpush2.msra.mxu0 0.0
    %860 = vmatprep.subr.mxu0 0.0
    %861 = vmatpush2.msra.mxu0 0.0
    %862 = vmatprep.subr.mxu0 0.0
    %863 = vmatpush2.msra.mxu0 0.0
    %864 = vmatprep.subr.mxu0 0.0
    %865 = vmatpush2.msra.mxu0 0.0
    %866 = vmatprep.subr.mxu0 0.0
    %867 = vmatpush2.msra.mxu0 0.0
    %868 = vmatprep.subr.mxu0 0.0
    %869 = vmatpush2.msra.mxu0 0.0
    %870 = vmatprep.subr.mxu0 0.0
    %871 = vmatpush2.msra.mxu0 0.0
    %872 = vmatprep.subr.mxu0 0.0
    %873 = vmatpush2.msra.mxu0 0.0
    %874 = vmatprep.subr.mxu0 0.0
    %875 = vmatpush2.msra.mxu0 0.0
    %876 = vmatprep.subr.mxu0 0.0
    %877 = vmatpush2.msra.mxu0 0.0
    %878 = vmatprep.subr.mxu0 0.0
    %879 = vmatpush2.msra.mxu0 0.0
    %880 = vmatprep.subr.mxu0 0.0
    %881 = vmatpush2.msra.mxu0 0.0
    %882 = vmatprep.subr.mxu0 0.0
    %883 = vmatpush2.msra.mxu0 0.0
    %884 = vmatprep.subr.mxu0 0.0
    %885 = vmatpush2.msra.mxu0 0.0
    %886 = vmatprep.subr.mxu0 0.0
    %887 = vmatpush2.msra.mxu0 0.0
    %888 = vmatprep.subr.mxu0 0.0
    %889 = vmatpush2.msra.mxu0 0.0
    %890 = vmatprep.mubr.f32.mxu0 0.0
    %891 = vmatmul.mubr.f32.gmra.mxu0 0.0
    %v892 = vpop.f32.mrf.mxu0
    %v893 = vadd.f32 0.0, %v892
    %v894 = vpop.f32.mrf.mxu0
    %v895 = vadd.f32 0.0, %v894
    %896 = vdwg.mxu0
    %897 = vmatprep.subr.mxu0 %v754
    %898 = vmatpush1.msra.mxu0 %v753
    %899 = vmatprep.subr.mxu0 %v750
    %900 = vmatpush1.msra.mxu0 %v749
    %901 = vmatprep.subr.mxu0 %v746
    %902 = vmatpush1.msra.mxu0 %v745
    %903 = vmatprep.subr.mxu0 %v742
    %904 = vmatpush1.msra.mxu0 %v741
    %905 = vmatprep.subr.mxu0 %v738
    %906 = vmatpush1.msra.mxu0 %v737
    %907 = vmatprep.subr.mxu0 %v734
    %908 = vmatpush1.msra.mxu0 %v733
    %909 = vmatprep.subr.mxu0 %v730
    %910 = vmatpush1.msra.mxu0 %v729
    %911 = vmatprep.subr.mxu0 %v726
    %912 = vmatpush1.msra.mxu0 %v725
    %913 = vmatprep.subr.mxu0 %v722
    %914 = vmatpush1.msra.mxu0 %v721
    %915 = vmatprep.subr.mxu0 %v718
    %916 = vmatpush1.msra.mxu0 %v717
    %917 = vmatprep.subr.mxu0 %v714
    %918 = vmatpush1.msra.mxu0 %v713
    %919 = vmatprep.subr.mxu0 %v710
    %920 = vmatpush1.msra.mxu0 %v709
    %921 = vmatprep.subr.mxu0 %v706
    %922 = vmatpush1.msra.mxu0 %v705
    %923 = vmatprep.subr.mxu0 %v702
    %924 = vmatpush1.msra.mxu0 %v701
    %925 = vmatprep.subr.mxu0 %v698
    %926 = vmatpush1.msra.mxu0 %v697
    %927 = vmatprep.subr.mxu0 %v694
    %928 = vmatpush1.msra.mxu0 %v693
    %929 = vmatprep.subr.mxu0 0.0
    %930 = vmatpush2.msra.mxu0 0.0
    %931 = vmatprep.subr.mxu0 0.0
    %932 = vmatpush2.msra.mxu0 0.0
    %933 = vmatprep.subr.mxu0 0.0
    %934 = vmatpush2.msra.mxu0 0.0
    %935 = vmatprep.subr.mxu0 0.0
    %936 = vmatpush2.msra.mxu0 0.0
    %937 = vmatprep.subr.mxu0 0.0
    %938 = vmatpush2.msra.mxu0 0.0
    %939 = vmatprep.subr.mxu0 0.0
    %940 = vmatpush2.msra.mxu0 0.0
    %941 = vmatprep.subr.mxu0 0.0
    %942 = vmatpush2.msra.mxu0 0.0
    %943 = vmatprep.subr.mxu0 0.0
    %944 = vmatpush2.msra.mxu0 0.0
    %945 = vmatprep.subr.mxu0 0.0
    %946 = vmatpush2.msra.mxu0 0.0
    %947 = vmatprep.subr.mxu0 0.0
    %948 = vmatpush2.msra.mxu0 0.0
    %949 = vmatprep.subr.mxu0 0.0
    %950 = vmatpush2.msra.mxu0 0.0
    %951 = vmatprep.subr.mxu0 0.0
    %952 = vmatpush2.msra.mxu0 0.0
    %953 = vmatprep.subr.mxu0 0.0
    %954 = vmatpush2.msra.mxu0 0.0
    %955 = vmatprep.subr.mxu0 0.0
    %956 = vmatpush2.msra.mxu0 0.0
    %957 = vmatprep.subr.mxu0 0.0
    %958 = vmatpush2.msra.mxu0 0.0
    %959 = vmatprep.subr.mxu0 0.0
    %960 = vmatpush2.msra.mxu0 0.0
    %961 = vmatprep.mubr.f32.mxu0 0.0
    %962 = vmatmul.mubr.f32.gmra.mxu0 0.0
    %v963 = vpop.f32.mrf.mxu0
    %v964 = vadd.f32 0.0, %v963
    %v965 = vpop.f32.mrf.mxu0
    %v966 = vadd.f32 0.0, %v965
    %967 = vdwg.mxu0
    %v968 = vadd.f32 %v822, %v893
    %v969 = vadd.f32 %v823, %v895
    %v970 = vadd.f32 %v824, %v964
    %v971 = vadd.f32 %v825, %v966
    %s972 = smul.u32 7, 4
    %s973 = smul.addr %s972, 8
    %s974 = scalar_lea.vmem [#allocation3], %s973
    %v975 = vld [vmem:[%s974] sm:$0xff]
    %v976 = vld [vmem:[%s974 + $0x8] sm:$0xff]
    %v977 = vld [vmem:[%s974 + $0x10] sm:$0xff]
    %v978 = vld [vmem:[%s974 + $0x18] sm:$0xff]
    %979 = vmatprep.subr.mxu0 %v816
    %980 = vmatpush1.msra.mxu0 %v815
    %981 = vmatprep.subr.mxu0 %v812
    %982 = vmatpush1.msra.mxu0 %v811
    %983 = vmatprep.subr.mxu0 %v808
    %984 = vmatpush1.msra.mxu0 %v807
    %985 = vmatprep.subr.mxu0 %v804
    %986 = vmatpush1.msra.mxu0 %v803
    %987 = vmatprep.subr.mxu0 %v800
    %988 = vmatpush1.msra.mxu0 %v799
    %989 = vmatprep.subr.mxu0 %v796
    %990 = vmatpush1.msra.mxu0 %v795
    %991 = vmatprep.subr.mxu0 %v792
    %992 = vmatpush1.msra.mxu0 %v791
    %993 = vmatprep.subr.mxu0 %v788
    %994 = vmatpush1.msra.mxu0 %v787
    %995 = vmatprep.subr.mxu0 %v784
    %996 = vmatpush1.msra.mxu0 %v783
    %997 = vmatprep.subr.mxu0 %v780
    %998 = vmatpush1.msra.mxu0 %v779
    %999 = vmatprep.subr.mxu0 %v776
    %1000 = vmatpush1.msra.mxu0 %v775
    %1001 = vmatprep.subr.mxu0 %v772
    %1002 = vmatpush1.msra.mxu0 %v771
    %1003 = vmatprep.subr.mxu0 %v768
    %1004 = vmatpush1.msra.mxu0 %v767
    %1005 = vmatprep.subr.mxu0 %v764
    %1006 = vmatpush1.msra.mxu0 %v763
    %1007 = vmatprep.subr.mxu0 %v760
    %1008 = vmatpush1.msra.mxu0 %v759
    %1009 = vmatprep.subr.mxu0 %v756
    %1010 = vmatpush1.msra.mxu0 %v755
    %1011 = vmatprep.subr.mxu0 0.0
    %1012 = vmatpush2.msra.mxu0 0.0
    %1013 = vmatprep.subr.mxu0 0.0
    %1014 = vmatpush2.msra.mxu0 0.0
    %1015 = vmatprep.subr.mxu0 0.0
    %1016 = vmatpush2.msra.mxu0 0.0
    %1017 = vmatprep.subr.mxu0 0.0
    %1018 = vmatpush2.msra.mxu0 0.0
    %1019 = vmatprep.subr.mxu0 0.0
    %1020 = vmatpush2.msra.mxu0 0.0
    %1021 = vmatprep.subr.mxu0 0.0
    %1022 = vmatpush2.msra.mxu0 0.0
    %1023 = vmatprep.subr.mxu0 0.0
    %1024 = vmatpush2.msra.mxu0 0.0
    %1025 = vmatprep.subr.mxu0 0.0
    %1026 = vmatpush2.msra.mxu0 0.0
    %1027 = vmatprep.subr.mxu0 0.0
    %1028 = vmatpush2.msra.mxu0 0.0
    %1029 = vmatprep.subr.mxu0 0.0
    %1030 = vmatpush2.msra.mxu0 0.0
    %1031 = vmatprep.subr.mxu0 0.0
    %1032 = vmatpush2.msra.mxu0 0.0
    %1033 = vmatprep.subr.mxu0 0.0
    %1034 = vmatpush2.msra.mxu0 0.0
    %1035 = vmatprep.subr.mxu0 0.0
    %1036 = vmatpush2.msra.mxu0 0.0
    %1037 = vmatprep.subr.mxu0 0.0
    %1038 = vmatpush2.msra.mxu0 0.0
    %1039 = vmatprep.subr.mxu0 0.0
    %1040 = vmatpush2.msra.mxu0 0.0
    %1041 = vmatprep.subr.mxu0 0.0
    %1042 = vmatpush2.msra.mxu0 0.0
    %1043 = vmatprep.mubr.f32.mxu0 0.0
    %1044 = vmatmul.mubr.f32.gmra.mxu0 0.0
    %v1045 = vpop.f32.mrf.mxu0
    %v1046 = vadd.f32 0.0, %v1045
    %v1047 = vpop.f32.mrf.mxu0
    %v1048 = vadd.f32 0.0, %v1047
    %1049 = vdwg.mxu0
    %1050 = vmatprep.subr.mxu0 %v818
    %1051 = vmatpush1.msra.mxu0 %v817
    %1052 = vmatprep.subr.mxu0 %v814
    %1053 = vmatpush1.msra.mxu0 %v813
    %1054 = vmatprep.subr.mxu0 %v810
    %1055 = vmatpush1.msra.mxu0 %v809
    %1056 = vmatprep.subr.mxu0 %v806
    %1057 = vmatpush1.msra.mxu0 %v805
    %1058 = vmatprep.subr.mxu0 %v802
    %1059 = vmatpush1.msra.mxu0 %v801
    %1060 = vmatprep.subr.mxu0 %v798
    %1061 = vmatpush1.msra.mxu0 %v797
    %1062 = vmatprep.subr.mxu0 %v794
    %1063 = vmatpush1.msra.mxu0 %v793
    %1064 = vmatprep.subr.mxu0 %v790
    %1065 = vmatpush1.msra.mxu0 %v789
    %1066 = vmatprep.subr.mxu0 %v786
    %1067 = vmatpush1.msra.mxu0 %v785
    %1068 = vmatprep.subr.mxu0 %v782
    %1069 = vmatpush1.msra.mxu0 %v781
    %1070 = vmatprep.subr.mxu0 %v778
    %1071 = vmatpush1.msra.mxu0 %v777
    %1072 = vmatprep.subr.mxu0 %v774
    %1073 = vmatpush1.msra.mxu0 %v773
    %1074 = vmatprep.subr.mxu0 %v770
    %1075 = vmatpush1.msra.mxu0 %v769
    %1076 = vmatprep.subr.mxu0 %v766
    %1077 = vmatpush1.msra.mxu0 %v765
    %1078 = vmatprep.subr.mxu0 %v762
    %1079 = vmatpush1.msra.mxu0 %v761
    %1080 = vmatprep.subr.mxu0 %v758
    %1081 = vmatpush1.msra.mxu0 %v757
    %1082 = vmatprep.subr.mxu0 0.0
    %1083 = vmatpush2.msra.mxu0 0.0
    %1084 = vmatprep.subr.mxu0 0.0
    %1085 = vmatpush2.msra.mxu0 0.0
    %1086 = vmatprep.subr.mxu0 0.0
    %1087 = vmatpush2.msra.mxu0 0.0
    %1088 = vmatprep.subr.mxu0 0.0
    %1089 = vmatpush2.msra.mxu0 0.0
    %1090 = vmatprep.subr.mxu0 0.0
    %1091 = vmatpush2.msra.mxu0 0.0
    %1092 = vmatprep.subr.mxu0 0.0
    %1093 = vmatpush2.msra.mxu0 0.0
    %1094 = vmatprep.subr.mxu0 0.0
    %1095 = vmatpush2.msra.mxu0 0.0
    %1096 = vmatprep.subr.mxu0 0.0
    %1097 = vmatpush2.msra.mxu0 0.0
    %1098 = vmatprep.subr.mxu0 0.0
    %1099 = vmatpush2.msra.mxu0 0.0
    %1100 = vmatprep.subr.mxu0 0.0
    %1101 = vmatpush2.msra.mxu0 0.0
    %1102 = vmatprep.subr.mxu0 0.0
    %1103 = vmatpush2.msra.mxu0 0.0
    %1104 = vmatprep.subr.mxu0 0.0
    %1105 = vmatpush2.msra.mxu0 0.0
    %1106 = vmatprep.subr.mxu0 0.0
    %1107 = vmatpush2.msra.mxu0 0.0
    %1108 = vmatprep.subr.mxu0 0.0
    %1109 = vmatpush2.msra.mxu0 0.0
    %1110 = vmatprep.subr.mxu0 0.0
    %1111 = vmatpush2.msra.mxu0 0.0
    %1112 = vmatprep.subr.mxu0 0.0
    %1113 = vmatpush2.msra.mxu0 0.0
    %1114 = vmatprep.mubr.f32.mxu0 0.0
    %1115 = vmatmul.mubr.f32.gmra.mxu0 0.0
    %v1116 = vpop.f32.mrf.mxu0
    %v1117 = vadd.f32 0.0, %v1116
    %v1118 = vpop.f32.mrf.mxu0
    %v1119 = vadd.f32 0.0, %v1118
    %1120 = vdwg.mxu0
    %v1121 = vadd.f32 %v975, %v1046
    %v1122 = vadd.f32 %v976, %v1048
    %v1123 = vadd.f32 %v977, %v1117
    %v1124 = vadd.f32 %v978, %v1119
    %v1125 = vxor.u32 %v968, 2147483648
    %v1126 = vmul.f32 %v1125, 1.442695
    %v1127 = vpow.pop %v1126
    %v1128 = vadd.f32 %v1127, 1.0
    %v1129 = vrcp.pop %v1128
    %v1130 = vmul.f32 1.0, %v1129
    %v1131 = vxor.u32 %v969, 2147483648
    %v1132 = vmul.f32 %v1131, 1.442695
    %v1133 = vpow.pop %v1132
    %v1134 = vadd.f32 %v1133, 1.0
    %v1135 = vrcp.pop %v1134
    %v1136 = vmul.f32 1.0, %v1135
    %v1137 = vtanh.pop %v970
    %v1138 = vxor.u32 %v971, 2147483648
    %v1139 = vmul.f32 %v1138, 1.442695
    %v1140 = vpow.pop %v1139
    %v1141 = vadd.f32 %v1140, 1.0
    %v1142 = vrcp.pop %v1141
    %v1143 = vmul.f32 1.0, %v1142
    %v1144 = vmul.f32 %v1136, 0.0
    %v1145 = vmul.f32 %v1130, %v1137
    %v1146 = vadd.f32 %v1144, %v1145
    %v1147 = vtanh.pop %v1146
    %v1148 = vmul.f32 %v1143, %v1147
    %v1149 = vxor.u32 %v1121, 2147483648
    %v1150 = vmul.f32 %v1149, 1.442695
    %v1151 = vpow.pop %v1150
    %v1152 = vadd.f32 %v1151, 1.0
    %v1153 = vrcp.pop %v1152
    %v1154 = vmul.f32 1.0, %v1153
    %v1155 = vxor.u32 %v1122, 2147483648
    %v1156 = vmul.f32 %v1155, 1.442695
    %v1157 = vpow.pop %v1156
    %v1158 = vadd.f32 %v1157, 1.0
    %v1159 = vrcp.pop %v1158
    %v1160 = vmul.f32 1.0, %v1159
    %v1161 = vtanh.pop %v1123
    %v1162 = vxor.u32 %v1124, 2147483648
    %v1163 = vmul.f32 %v1162, 1.442695
    %v1164 = vpow.pop %v1163
    %v1165 = vadd.f32 %v1164, 1.0
    %v1166 = vrcp.pop %v1165
    %v1167 = vmul.f32 1.0, %v1166
    %v1168 = vmul.f32 %v1160, 0.0
    %v1169 = vmul.f32 %v1154, %v1161
    %v1170 = vadd.f32 %v1168, %v1169
    %v1171 = vtanh.pop %v1170
    %v1172 = vmul.f32 %v1167, %v1171
    %1173 = vst [vmem:[#allocation9] sm:$0xff] %v1148
    %s1174 = scalar_lea.vmem [#allocation10], 56
    %1175 = vst [vmem:[%s1174] sm:$0xff] %v1172
    %s1176 = smul.u32 1, 4
    %s1177 = smul.addr %s1176, 8
    %s1178 = scalar_lea.vmem [#allocation2], %s1177
    %v1179 = vld [vmem:[%s1178] sm:$0xff]
    %v1180 = vld [vmem:[%s1178 + $0x8] sm:$0xff]
    %v1181 = vld [vmem:[%s1178 + $0x10] sm:$0xff]
    %v1182 = vld [vmem:[%s1178 + $0x18] sm:$0xff]
    %1183 = vmatprep.subr.mxu0 %v752
    %1184 = vmatpush1.msra.mxu0 %v751
    %1185 = vmatprep.subr.mxu0 %v748
    %1186 = vmatpush1.msra.mxu0 %v747
    %1187 = vmatprep.subr.mxu0 %v744
    %1188 = vmatpush1.msra.mxu0 %v743
    %1189 = vmatprep.subr.mxu0 %v740
    %1190 = vmatpush1.msra.mxu0 %v739
    %1191 = vmatprep.subr.mxu0 %v736
    %1192 = vmatpush1.msra.mxu0 %v735
    %1193 = vmatprep.subr.mxu0 %v732
    %1194 = vmatpush1.msra.mxu0 %v731
    %1195 = vmatprep.subr.mxu0 %v728
    %1196 = vmatpush1.msra.mxu0 %v727
    %1197 = vmatprep.subr.mxu0 %v724
    %1198 = vmatpush1.msra.mxu0 %v723
    %1199 = vmatprep.subr.mxu0 %v720
    %1200 = vmatpush1.msra.mxu0 %v719
    %1201 = vmatprep.subr.mxu0 %v716
    %1202 = vmatpush1.msra.mxu0 %v715
    %1203 = vmatprep.subr.mxu0 %v712
    %1204 = vmatpush1.msra.mxu0 %v711
    %1205 = vmatprep.subr.mxu0 %v708
    %1206 = vmatpush1.msra.mxu0 %v707
    %1207 = vmatprep.subr.mxu0 %v704
    %1208 = vmatpush1.msra.mxu0 %v703
    %1209 = vmatprep.subr.mxu0 %v700
    %1210 = vmatpush1.msra.mxu0 %v699
    %1211 = vmatprep.subr.mxu0 %v696
    %1212 = vmatpush1.msra.mxu0 %v695
    %1213 = vmatprep.subr.mxu0 %v692
    %1214 = vmatpush1.msra.mxu0 %v691
    %1215 = vmatprep.subr.mxu0 0.0
    %1216 = vmatpush2.msra.mxu0 0.0
    %1217 = vmatprep.subr.mxu0 0.0
    %1218 = vmatpush2.msra.mxu0 0.0
    %1219 = vmatprep.subr.mxu0 0.0
    %1220 = vmatpush2.msra.mxu0 0.0
    %1221 = vmatprep.subr.mxu0 0.0
    %1222 = vmatpush2.msra.mxu0 0.0
    %1223 = vmatprep.subr.mxu0 0.0
    %1224 = vmatpush2.msra.mxu0 0.0
    %1225 = vmatprep.subr.mxu0 0.0
    %1226 = vmatpush2.msra.mxu0 0.0
    %1227 = vmatprep.subr.mxu0 0.0
    %1228 = vmatpush2.msra.mxu0 0.0
    %1229 = vmatprep.subr.mxu0 0.0
    %1230 = vmatpush2.msra.mxu0 0.0
    %1231 = vmatprep.subr.mxu0 0.0
    %1232 = vmatpush2.msra.mxu0 0.0
    %1233 = vmatprep.subr.mxu0 0.0
    %1234 = vmatpush2.msra.mxu0 0.0
    %1235 = vmatprep.subr.mxu0 0.0
    %1236 = vmatpush2.msra.mxu0 0.0
    %1237 = vmatprep.subr.mxu0 0.0
    %1238 = vmatpush2.msra.mxu0 0.0
    %1239 = vmatprep.subr.mxu0 0.0
    %1240 = vmatpush2.msra.mxu0 0.0
    %1241 = vmatprep.subr.mxu0 0.0
    %1242 = vmatpush2.msra.mxu0 0.0
    %1243 = vmatprep.subr.mxu0 0.0
    %1244 = vmatpush2.msra.mxu0 0.0
    %1245 = vmatprep.subr.mxu0 0.0
    %1246 = vmatpush2.msra.mxu0 0.0
    %1247 = vmatprep.mubr.f32.mxu0 0.0
    %1248 = vmatmul.mubr.f32.gmra.mxu0 %v1148
    %v1249 = vpop.f32.mrf.mxu0
    %v1250 = vadd.f32 0.0, %v1249
    %v1251 = vpop.f32.mrf.mxu0
    %v1252 = vadd.f32 0.0, %v1251
    %1253 = vdwg.mxu0
    %1254 = vmatprep.subr.mxu0 %v754
    %1255 = vmatpush1.msra.mxu0 %v753
    %1256 = vmatprep.subr.mxu0 %v750
    %1257 = vmatpush1.msra.mxu0 %v749
    %1258 = vmatprep.subr.mxu0 %v746
    %1259 = vmatpush1.msra.mxu0 %v745
    %1260 = vmatprep.subr.mxu0 %v742
    %1261 = vmatpush1.msra.mxu0 %v741
    %1262 = vmatprep.subr.mxu0 %v738
    %1263 = vmatpush1.msra.mxu0 %v737
    %1264 = vmatprep.subr.mxu0 %v734
    %1265 = vmatpush1.msra.mxu0 %v733
    %1266 = vmatprep.subr.mxu0 %v730
    %1267 = vmatpush1.msra.mxu0 %v729
    %1268 = vmatprep.subr.mxu0 %v726
    %1269 = vmatpush1.msra.mxu0 %v725
    %1270 = vmatprep.subr.mxu0 %v722
    %1271 = vmatpush1.msra.mxu0 %v721
    %1272 = vmatprep.subr.mxu0 %v718
    %1273 = vmatpush1.msra.mxu0 %v717
    %1274 = vmatprep.subr.mxu0 %v714
    %1275 = vmatpush1.msra.mxu0 %v713
    %1276 = vmatprep.subr.mxu0 %v710
    %1277 = vmatpush1.msra.mxu0 %v709
    %1278 = vmatprep.subr.mxu0 %v706
    %1279 = vmatpush1.msra.mxu0 %v705
    %1280 = vmatprep.subr.mxu0 %v702
    %1281 = vmatpush1.msra.mxu0 %v701
    %1282 = vmatprep.subr.mxu0 %v698
    %1283 = vmatpush1.msra.mxu0 %v697
    %1284 = vmatprep.subr.mxu0 %v694
    %1285 = vmatpush1.msra.mxu0 %v693
    %1286 = vmatprep.subr.mxu0 0.0
    %1287 = vmatpush2.msra.mxu0 0.0
    %1288 = vmatprep.subr.mxu0 0.0
    %1289 = vmatpush2.msra.mxu0 0.0
    %1290 = vmatprep.subr.mxu0 0.0
    %1291 = vmatpush2.msra.mxu0 0.0
    %1292 = vmatprep.subr.mxu0 0.0
    %1293 = vmatpush2.msra.mxu0 0.0
    %1294 = vmatprep.subr.mxu0 0.0
    %1295 = vmatpush2.msra.mxu0 0.0
    %1296 = vmatprep.subr.mxu0 0.0
    %1297 = vmatpush2.msra.mxu0 0.0
    %1298 = vmatprep.subr.mxu0 0.0
    %1299 = vmatpush2.msra.mxu0 0.0
    %1300 = vmatprep.subr.mxu0 0.0
    %1301 = vmatpush2.msra.mxu0 0.0
    %1302 = vmatprep.subr.mxu0 0.0
    %1303 = vmatpush2.msra.mxu0 0.0
    %1304 = vmatprep.subr.mxu0 0.0
    %1305 = vmatpush2.msra.mxu0 0.0
    %1306 = vmatprep.subr.mxu0 0.0
    %1307 = vmatpush2.msra.mxu0 0.0
    %1308 = vmatprep.subr.mxu0 0.0
    %1309 = vmatpush2.msra.mxu0 0.0
    %1310 = vmatprep.subr.mxu0 0.0
    %1311 = vmatpush2.msra.mxu0 0.0
    %1312 = vmatprep.subr.mxu0 0.0
    %1313 = vmatpush2.msra.mxu0 0.0
    %1314 = vmatprep.subr.mxu0 0.0
    %1315 = vmatpush2.msra.mxu0 0.0
    %1316 = vmatprep.subr.mxu0 0.0
    %1317 = vmatpush2.msra.mxu0 0.0
    %1318 = vmatprep.mubr.f32.mxu0 0.0
    %1319 = vmatmul.mubr.f32.gmra.mxu0 %v1148
    %v1320 = vpop.f32.mrf.mxu0
    %v1321 = vadd.f32 0.0, %v1320
    %v1322 = vpop.f32.mrf.mxu0
    %v1323 = vadd.f32 0.0, %v1322
    %1324 = vdwg.mxu0
    %v1325 = vadd.f32 %v1179, %v1250
    %v1326 = vadd.f32 %v1180, %v1252
    %v1327 = vadd.f32 %v1181, %v1321
    %v1328 = vadd.f32 %v1182, %v1323
    %s1329 = smul.u32 6, 4
    %s1330 = smul.addr %s1329, 8
    %s1331 = scalar_lea.vmem [#allocation3], %s1330
    %v1332 = vld [vmem:[%s1331] sm:$0xff]
    %v1333 = vld [vmem:[%s1331 + $0x8] sm:$0xff]
    %v1334 = vld [vmem:[%s1331 + $0x10] sm:$0xff]
    %v1335 = vld [vmem:[%s1331 + $0x18] sm:$0xff]
    %1336 = vmatprep.subr.mxu0 %v816
    %1337 = vmatpush1.msra.mxu0 %v815
    %1338 = vmatprep.subr.mxu0 %v812
    %1339 = vmatpush1.msra.mxu0 %v811
    %1340 = vmatprep.subr.mxu0 %v808
    %1341 = vmatpush1.msra.mxu0 %v807
    %1342 = vmatprep.subr.mxu0 %v804
    %1343 = vmatpush1.msra.mxu0 %v803
    %1344 = vmatprep.subr.mxu0 %v800
    %1345 = vmatpush1.msra.mxu0 %v799
    %1346 = vmatprep.subr.mxu0 %v796
    %1347 = vmatpush1.msra.mxu0 %v795
    %1348 = vmatprep.subr.mxu0 %v792
    %1349 = vmatpush1.msra.mxu0 %v791
    %1350 = vmatprep.subr.mxu0 %v788
    %1351 = vmatpush1.msra.mxu0 %v787
    %1352 = vmatprep.subr.mxu0 %v784
    %1353 = vmatpush1.msra.mxu0 %v783
    %1354 = vmatprep.subr.mxu0 %v780
    %1355 = vmatpush1.msra.mxu0 %v779
    %1356 = vmatprep.subr.mxu0 %v776
    %1357 = vmatpush1.msra.mxu0 %v775
    %1358 = vmatprep.subr.mxu0 %v772
    %1359 = vmatpush1.msra.mxu0 %v771
    %1360 = vmatprep.subr.mxu0 %v768
    %1361 = vmatpush1.msra.mxu0 %v767
    %1362 = vmatprep.subr.mxu0 %v764
    %1363 = vmatpush1.msra.mxu0 %v763
    %1364 = vmatprep.subr.mxu0 %v760
    %1365 = vmatpush1.msra.mxu0 %v759
    %1366 = vmatprep.subr.mxu0 %v756
    %1367 = vmatpush1.msra.mxu0 %v755
    %1368 = vmatprep.subr.mxu0 0.0
    %1369 = vmatpush2.msra.mxu0 0.0
    %1370 = vmatprep.subr.mxu0 0.0
    %1371 = vmatpush2.msra.mxu0 0.0
    %1372 = vmatprep.subr.mxu0 0.0
    %1373 = vmatpush2.msra.mxu0 0.0
    %1374 = vmatprep.subr.mxu0 0.0
    %1375 = vmatpush2.msra.mxu0 0.0
    %1376 = vmatprep.subr.mxu0 0.0
    %1377 = vmatpush2.msra.mxu0 0.0
    %1378 = vmatprep.subr.mxu0 0.0
    %1379 = vmatpush2.msra.mxu0 0.0
    %1380 = vmatprep.subr.mxu0 0.0
    %1381 = vmatpush2.msra.mxu0 0.0
    %1382 = vmatprep.subr.mxu0 0.0
    %1383 = vmatpush2.msra.mxu0 0.0
    %1384 = vmatprep.subr.mxu0 0.0
    %1385 = vmatpush2.msra.mxu0 0.0
    %1386 = vmatprep.subr.mxu0 0.0
    %1387 = vmatpush2.msra.mxu0 0.0
    %1388 = vmatprep.subr.mxu0 0.0
    %1389 = vmatpush2.msra.mxu0 0.0
    %1390 = vmatprep.subr.mxu0 0.0
    %1391 = vmatpush2.msra.mxu0 0.0
    %1392 = vmatprep.subr.mxu0 0.0
    %1393 = vmatpush2.msra.mxu0 0.0
    %1394 = vmatprep.subr.mxu0 0.0
    %1395 = vmatpush2.msra.mxu0 0.0
    %1396 = vmatprep.subr.mxu0 0.0
    %1397 = vmatpush2.msra.mxu0 0.0
    %1398 = vmatprep.subr.mxu0 0.0
    %1399 = vmatpush2.msra.mxu0 0.0
    %1400 = vmatprep.mubr.f32.mxu0 0.0
    %1401 = vmatmul.mubr.f32.gmra.mxu0 %v1172
    %v1402 = vpop.f32.mrf.mxu0
    %v1403 = vadd.f32 0.0, %v1402
    %v1404 = vpop.f32.mrf.mxu0
    %v1405 = vadd.f32 0.0, %v1404
    %1406 = vdwg.mxu0
    %1407 = vmatprep.subr.mxu0 %v818
    %1408 = vmatpush1.msra.mxu0 %v817
    %1409 = vmatprep.subr.mxu0 %v814
    %1410 = vmatpush1.msra.mxu0 %v813
    %1411 = vmatprep.subr.mxu0 %v810
    %1412 = vmatpush1.msra.mxu0 %v809
    %1413 = vmatprep.subr.mxu0 %v806
    %1414 = vmatpush1.msra.mxu0 %v805
    %1415 = vmatprep.subr.mxu0 %v802
    %1416 = vmatpush1.msra.mxu0 %v801
    %1417 = vmatprep.subr.mxu0 %v798
    %1418 = vmatpush1.msra.mxu0 %v797
    %1419 = vmatprep.subr.mxu0 %v794
    %1420 = vmatpush1.msra.mxu0 %v793
    %1421 = vmatprep.subr.mxu0 %v790
    %1422 = vmatpush1.msra.mxu0 %v789
    %1423 = vmatprep.subr.mxu0 %v786
    %1424 = vmatpush1.msra.mxu0 %v785
    %1425 = vmatprep.subr.mxu0 %v782
    %1426 = vmatpush1.msra.mxu0 %v781
    %1427 = vmatprep.subr.mxu0 %v778
    %1428 = vmatpush1.msra.mxu0 %v777
    %1429 = vmatprep.subr.mxu0 %v774
    %1430 = vmatpush1.msra.mxu0 %v773
    %1431 = vmatprep.subr.mxu0 %v770
    %1432 = vmatpush1.msra.mxu0 %v769
    %1433 = vmatprep.subr.mxu0 %v766
    %1434 = vmatpush1.msra.mxu0 %v765
    %1435 = vmatprep.subr.mxu0 %v762
    %1436 = vmatpush1.msra.mxu0 %v761
    %1437 = vmatprep.subr.mxu0 %v758
    %1438 = vmatpush1.msra.mxu0 %v757
    %1439 = vmatprep.subr.mxu0 0.0
    %1440 = vmatpush2.msra.mxu0 0.0
    %1441 = vmatprep.subr.mxu0 0.0
    %1442 = vmatpush2.msra.mxu0 0.0
    %1443 = vmatprep.subr.mxu0 0.0
    %1444 = vmatpush2.msra.mxu0 0.0
    %1445 = vmatprep.subr.mxu0 0.0
    %1446 = vmatpush2.msra.mxu0 0.0
    %1447 = vmatprep.subr.mxu0 0.0
    %1448 = vmatpush2.msra.mxu0 0.0
    %1449 = vmatprep.subr.mxu0 0.0
    %1450 = vmatpush2.msra.mxu0 0.0
    %1451 = vmatprep.subr.mxu0 0.0
    %1452 = vmatpush2.msra.mxu0 0.0
    %1453 = vmatprep.subr.mxu0 0.0
    %1454 = vmatpush2.msra.mxu0 0.0
    %1455 = vmatprep.subr.mxu0 0.0
    %1456 = vmatpush2.msra.mxu0 0.0
    %1457 = vmatprep.subr.mxu0 0.0
    %1458 = vmatpush2.msra.mxu0 0.0
    %1459 = vmatprep.subr.mxu0 0.0
    %1460 = vmatpush2.msra.mxu0 0.0
    %1461 = vmatprep.subr.mxu0 0.0
    %1462 = vmatpush2.msra.mxu0 0.0
    %1463 = vmatprep.subr.mxu0 0.0
    %1464 = vmatpush2.msra.mxu0 0.0
    %1465 = vmatprep.subr.mxu0 0.0
    %1466 = vmatpush2.msra.mxu0 0.0
    %1467 = vmatprep.subr.mxu0 0.0
    %1468 = vmatpush2.msra.mxu0 0.0
    %1469 = vmatprep.subr.mxu0 0.0
    %1470 = vmatpush2.msra.mxu0 0.0
    %1471 = vmatprep.mubr.f32.mxu0 0.0
    %1472 = vmatmul.mubr.f32.gmra.mxu0 %v1172
    %v1473 = vpop.f32.mrf.mxu0
    %v1474 = vadd.f32 0.0, %v1473
    %v1475 = vpop.f32.mrf.mxu0
    %v1476 = vadd.f32 0.0, %v1475
    %1477 = vdwg.mxu0
    %v1478 = vadd.f32 %v1332, %v1403
    %v1479 = vadd.f32 %v1333, %v1405
    %v1480 = vadd.f32 %v1334, %v1474
    %v1481 = vadd.f32 %v1335, %v1476
    %v1482 = vxor.u32 %v1325, 2147483648
    %v1483 = vmul.f32 %v1482, 1.442695
    %v1484 = vpow.pop %v1483
    %v1485 = vadd.f32 %v1484, 1.0
    %v1486 = vrcp.pop %v1485
    %v1487 = vmul.f32 1.0, %v1486
    %v1488 = vxor.u32 %v1326, 2147483648
    %v1489 = vmul.f32 %v1488, 1.442695
    %v1490 = vpow.pop %v1489
    %v1491 = vadd.f32 %v1490, 1.0
    %v1492 = vrcp.pop %v1491
    %v1493 = vmul.f32 1.0, %v1492
    %v1494 = vtanh.pop %v1327
    %v1495 = vxor.u32 %v1328, 2147483648
    %v1496 = vmul.f32 %v1495, 1.442695
    %v1497 = vpow.pop %v1496
    %v1498 = vadd.f32 %v1497, 1.0
    %v1499 = vrcp.pop %v1498
    %v1500 = vmul.f32 1.0, %v1499
    %v1501 = vmul.f32 %v1493, %v1146
    %v1502 = vmul.f32 %v1487, %v1494
    %v1503 = vadd.f32 %v1501, %v1502
    %v1504 = vtanh.pop %v1503
    %v1505 = vmul.f32 %v1500, %v1504
    %v1506 = vxor.u32 %v1478, 2147483648
    %v1507 = vmul.f32 %v1506, 1.442695
    %v1508 = vpow.pop %v1507
    %v1509 = vadd.f32 %v1508, 1.0
    %v1510 = vrcp.pop %v1509
    %v1511 = vmul.f32 1.0, %v1510
    %v1512 = vxor.u32 %v1479, 2147483648
    %v1513 = vmul.f32 %v1512, 1.442695
    %v1514 = vpow.pop %v1513
    %v1515 = vadd.f32 %v1514, 1.0
    %v1516 = vrcp.pop %v1515
    %v1517 = vmul.f32 1.0, %v1516
    %v1518 = vtanh.pop %v1480
    %v1519 = vxor.u32 %v1481, 2147483648
    %v1520 = vmul.f32 %v1519, 1.442695
    %v1521 = vpow.pop %v1520
    %v1522 = vadd.f32 %v1521, 1.0
    %v1523 = vrcp.pop %v1522
    %v1524 = vmul.f32 1.0, %v1523
    %v1525 = vmul.f32 %v1517, %v1170
    %v1526 = vmul.f32 %v1511, %v1518
    %v1527 = vadd.f32 %v1525, %v1526
    %v1528 = vtanh.pop %v1527
    %v1529 = vmul.f32 %v1524, %v1528
    %s1530 = scalar_lea.vmem [#allocation9], 8
    %1531 = vst [vmem:[%s1530] sm:$0xff] %v1505
    %s1532 = scalar_lea.vmem [#allocation10], 48
    %1533 = vst [vmem:[%s1532] sm:$0xff] %v1529
    %s1534 = smul.u32 2, 4
    %s1535 = smul.addr %s1534, 8
    %s1536 = scalar_lea.vmem [#allocation2], %s1535
    %v1537 = vld [vmem:[%s1536] sm:$0xff]
    %v1538 = vld [vmem:[%s1536 + $0x8] sm:$0xff]
    %v1539 = vld [vmem:[%s1536 + $0x10] sm:$0xff]
    %v1540 = vld [vmem:[%s1536 + $0x18] sm:$0xff]
    %1541 = vmatprep.subr.mxu0 %v752
    %1542 = vmatpush1.msra.mxu0 %v751
    %1543 = vmatprep.subr.mxu0 %v748
    %1544 = vmatpush1.msra.mxu0 %v747
    %1545 = vmatprep.subr.mxu0 %v744
    %1546 = vmatpush1.msra.mxu0 %v743
    %1547 = vmatprep.subr.mxu0 %v740
    %1548 = vmatpush1.msra.mxu0 %v739
    %1549 = vmatprep.subr.mxu0 %v736
    %1550 = vmatpush1.msra.mxu0 %v735
    %1551 = vmatprep.subr.mxu0 %v732
    %1552 = vmatpush1.msra.mxu0 %v731
    %1553 = vmatprep.subr.mxu0 %v728
    %1554 = vmatpush1.msra.mxu0 %v727
    %1555 = vmatprep.subr.mxu0 %v724
    %1556 = vmatpush1.msra.mxu0 %v723
    %1557 = vmatprep.subr.mxu0 %v720
    %1558 = vmatpush1.msra.mxu0 %v719
    %1559 = vmatprep.subr.mxu0 %v716
    %1560 = vmatpush1.msra.mxu0 %v715
    %1561 = vmatprep.subr.mxu0 %v712
    %1562 = vmatpush1.msra.mxu0 %v711
    %1563 = vmatprep.subr.mxu0 %v708
    %1564 = vmatpush1.msra.mxu0 %v707
    %1565 = vmatprep.subr.mxu0 %v704
    %1566 = vmatpush1.msra.mxu0 %v703
    %1567 = vmatprep.subr.mxu0 %v700
    %1568 = vmatpush1.msra.mxu0 %v699
    %1569 = vmatprep.subr.mxu0 %v696
    %1570 = vmatpush1.msra.mxu0 %v695
    %1571 = vmatprep.subr.mxu0 %v692
    %1572 = vmatpush1.msra.mxu0 %v691
    %1573 = vmatprep.subr.mxu0 0.0
    %1574 = vmatpush2.msra.mxu0 0.0
    %1575 = vmatprep.subr.mxu0 0.0
    %1576 = vmatpush2.msra.mxu0 0.0
    %1577 = vmatprep.subr.mxu0 0.0
    %1578 = vmatpush2.msra.mxu0 0.0
    %1579 = vmatprep.subr.mxu0 0.0
    %1580 = vmatpush2.msra.mxu0 0.0
    %1581 = vmatprep.subr.mxu0 0.0
    %1582 = vmatpush2.msra.mxu0 0.0
    %1583 = vmatprep.subr.mxu0 0.0
    %1584 = vmatpush2.msra.mxu0 0.0
    %1585 = vmatprep.subr.mxu0 0.0
    %1586 = vmatpush2.msra.mxu0 0.0
    %1587 = vmatprep.subr.mxu0 0.0
    %1588 = vmatpush2.msra.mxu0 0.0
    %1589 = vmatprep.subr.mxu0 0.0
    %1590 = vmatpush2.msra.mxu0 0.0
    %1591 = vmatprep.subr.mxu0 0.0
    %1592 = vmatpush2.msra.mxu0 0.0
    %1593 = vmatprep.subr.mxu0 0.0
    %1594 = vmatpush2.msra.mxu0 0.0
    %1595 = vmatprep.subr.mxu0 0.0
    %1596 = vmatpush2.msra.mxu0 0.0
    %1597 = vmatprep.subr.mxu0 0.0
    %1598 = vmatpush2.msra.mxu0 0.0
    %1599 = vmatprep.subr.mxu0 0.0
    %1600 = vmatpush2.msra.mxu0 0.0
    %1601 = vmatprep.subr.mxu0 0.0
    %1602 = vmatpush2.msra.mxu0 0.0
    %1603 = vmatprep.subr.mxu0 0.0
    %1604 = vmatpush2.msra.mxu0 0.0
    %1605 = vmatprep.mubr.f32.mxu0 0.0
    %1606 = vmatmul.mubr.f32.gmra.mxu0 %v1505
    %v1607 = vpop.f32.mrf.mxu0
    %v1608 = vadd.f32 0.0, %v1607
    %v1609 = vpop.f32.mrf.mxu0
    %v1610 = vadd.f32 0.0, %v1609
    %1611 = vdwg.mxu0
    %1612 = vmatprep.subr.mxu0 %v754
    %1613 = vmatpush1.msra.mxu0 %v753
    %1614 = vmatprep.subr.mxu0 %v750
    %1615 = vmatpush1.msra.mxu0 %v749
    %1616 = vmatprep.subr.mxu0 %v746
    %1617 = vmatpush1.msra.mxu0 %v745
    %1618 = vmatprep.subr.mxu0 %v742
    %1619 = vmatpush1.msra.mxu0 %v741
    %1620 = vmatprep.subr.mxu0 %v738
    %1621 = vmatpush1.msra.mxu0 %v737
    %1622 = vmatprep.subr.mxu0 %v734
    %1623 = vmatpush1.msra.mxu0 %v733
    %1624 = vmatprep.subr.mxu0 %v730
    %1625 = vmatpush1.msra.mxu0 %v729
    %1626 = vmatprep.subr.mxu0 %v726
    %1627 = vmatpush1.msra.mxu0 %v725
    %1628 = vmatprep.subr.mxu0 %v722
    %1629 = vmatpush1.msra.mxu0 %v721
    %1630 = vmatprep.subr.mxu0 %v718
    %1631 = vmatpush1.msra.mxu0 %v717
    %1632 = vmatprep.subr.mxu0 %v714
    %1633 = vmatpush1.msra.mxu0 %v713
    %1634 = vmatprep.subr.mxu0 %v710
    %1635 = vmatpush1.msra.mxu0 %v709
    %1636 = vmatprep.subr.mxu0 %v706
    %1637 = vmatpush1.msra.mxu0 %v705
    %1638 = vmatprep.subr.mxu0 %v702
    %1639 = vmatpush1.msra.mxu0 %v701
    %1640 = vmatprep.subr.mxu0 %v698
    %1641 = vmatpush1.msra.mxu0 %v697
    %1642 = vmatprep.subr.mxu0 %v694
    %1643 = vmatpush1.msra.mxu0 %v693
    %1644 = vmatprep.subr.mxu0 0.0
    %1645 = vmatpush2.msra.mxu0 0.0
    %1646 = vmatprep.subr.mxu0 0.0
    %1647 = vmatpush2.msra.mxu0 0.0
    %1648 = vmatprep.subr.mxu0 0.0
    %1649 = vmatpush2.msra.mxu0 0.0
    %1650 = vmatprep.subr.mxu0 0.0
    %1651 = vmatpush2.msra.mxu0 0.0
    %1652 = vmatprep.subr.mxu0 0.0
    %1653 = vmatpush2.msra.mxu0 0.0
    %1654 = vmatprep.subr.mxu0 0.0
    %1655 = vmatpush2.msra.mxu0 0.0
    %1656 = vmatprep.subr.mxu0 0.0
    %1657 = vmatpush2.msra.mxu0 0.0
    %1658 = vmatprep.subr.mxu0 0.0
    %1659 = vmatpush2.msra.mxu0 0.0
    %1660 = vmatprep.subr.mxu0 0.0
    %1661 = vmatpush2.msra.mxu0 0.0
    %1662 = vmatprep.subr.mxu0 0.0
    %1663 = vmatpush2.msra.mxu0 0.0
    %1664 = vmatprep.subr.mxu0 0.0
    %1665 = vmatpush2.msra.mxu0 0.0
    %1666 = vmatprep.subr.mxu0 0.0
    %1667 = vmatpush2.msra.mxu0 0.0
    %1668 = vmatprep.subr.mxu0 0.0
    %1669 = vmatpush2.msra.mxu0 0.0
    %1670 = vmatprep.subr.mxu0 0.0
    %1671 = vmatpush2.msra.mxu0 0.0
    %1672 = vmatprep.subr.mxu0 0.0
    %1673 = vmatpush2.msra.mxu0 0.0
    %1674 = vmatprep.subr.mxu0 0.0
    %1675 = vmatpush2.msra.mxu0 0.0
    %1676 = vmatprep.mubr.f32.mxu0 0.0
    %1677 = vmatmul.mubr.f32.gmra.mxu0 %v1505
    %v1678 = vpop.f32.mrf.mxu0
    %v1679 = vadd.f32 0.0, %v1678
    %v1680 = vpop.f32.mrf.mxu0
    %v1681 = vadd.f32 0.0, %v1680
    %1682 = vdwg.mxu0
    %v1683 = vadd.f32 %v1537, %v1608
    %v1684 = vadd.f32 %v1538, %v1610
    %v1685 = vadd.f32 %v1539, %v1679
    %v1686 = vadd.f32 %v1540, %v1681
    %s1687 = smul.u32 5, 4
    %s1688 = smul.addr %s1687, 8
    %s1689 = scalar_lea.vmem [#allocation3], %s1688
    %v1690 = vld [vmem:[%s1689] sm:$0xff]
    %v1691 = vld [vmem:[%s1689 + $0x8] sm:$0xff]
    %v1692 = vld [vmem:[%s1689 + $0x10] sm:$0xff]
    %v1693 = vld [vmem:[%s1689 + $0x18] sm:$0xff]
    %1694 = vmatprep.subr.mxu0 %v816
    %1695 = vmatpush1.msra.mxu0 %v815
    %1696 = vmatprep.subr.mxu0 %v812
    %1697 = vmatpush1.msra.mxu0 %v811
    %1698 = vmatprep.subr.mxu0 %v808
    %1699 = vmatpush1.msra.mxu0 %v807
    %1700 = vmatprep.subr.mxu0 %v804
    %1701 = vmatpush1.msra.mxu0 %v803
    %1702 = vmatprep.subr.mxu0 %v800
    %1703 = vmatpush1.msra.mxu0 %v799
    %1704 = vmatprep.subr.mxu0 %v796
    %1705 = vmatpush1.msra.mxu0 %v795
    %1706 = vmatprep.subr.mxu0 %v792
    %1707 = vmatpush1.msra.mxu0 %v791
    %1708 = vmatprep.subr.mxu0 %v788
    %1709 = vmatpush1.msra.mxu0 %v787
    %1710 = vmatprep.subr.mxu0 %v784
    %1711 = vmatpush1.msra.mxu0 %v783
    %1712 = vmatprep.subr.mxu0 %v780
    %1713 = vmatpush1.msra.mxu0 %v779
    %1714 = vmatprep.subr.mxu0 %v776
    %1715 = vmatpush1.msra.mxu0 %v775
    %1716 = vmatprep.subr.mxu0 %v772
    %1717 = vmatpush1.msra.mxu0 %v771
    %1718 = vmatprep.subr.mxu0 %v768
    %1719 = vmatpush1.msra.mxu0 %v767
    %1720 = vmatprep.subr.mxu0 %v764
    %1721 = vmatpush1.msra.mxu0 %v763
    %1722 = vmatprep.subr.mxu0 %v760
    %1723 = vmatpush1.msra.mxu0 %v759
    %1724 = vmatprep.subr.mxu0 %v756
    %1725 = vmatpush1.msra.mxu0 %v755
    %1726 = vmatprep.subr.mxu0 0.0
    %1727 = vmatpush2.msra.mxu0 0.0
    %1728 = vmatprep.subr.mxu0 0.0
    %1729 = vmatpush2.msra.mxu0 0.0
    %1730 = vmatprep.subr.mxu0 0.0
    %1731 = vmatpush2.msra.mxu0 0.0
    %1732 = vmatprep.subr.mxu0 0.0
    %1733 = vmatpush2.msra.mxu0 0.0
    %1734 = vmatprep.subr.mxu0 0.0
    %1735 = vmatpush2.msra.mxu0 0.0
    %1736 = vmatprep.subr.mxu0 0.0
    %1737 = vmatpush2.msra.mxu0 0.0
    %1738 = vmatprep.subr.mxu0 0.0
    %1739 = vmatpush2.msra.mxu0 0.0
    %1740 = vmatprep.subr.mxu0 0.0
    %1741 = vmatpush2.msra.mxu0 0.0
    %1742 = vmatprep.subr.mxu0 0.0
    %1743 = vmatpush2.msra.mxu0 0.0
    %1744 = vmatprep.subr.mxu0 0.0
    %1745 = vmatpush2.msra.mxu0 0.0
    %1746 = vmatprep.subr.mxu0 0.0
    %1747 = vmatpush2.msra.mxu0 0.0
    %1748 = vmatprep.subr.mxu0 0.0
    %1749 = vmatpush2.msra.mxu0 0.0
    %1750 = vmatprep.subr.mxu0 0.0
    %1751 = vmatpush2.msra.mxu0 0.0
    %1752 = vmatprep.subr.mxu0 0.0
    %1753 = vmatpush2.msra.mxu0 0.0
    %1754 = vmatprep.subr.mxu0 0.0
    %1755 = vmatpush2.msra.mxu0 0.0
    %1756 = vmatprep.subr.mxu0 0.0
    %1757 = vmatpush2.msra.mxu0 0.0
    %1758 = vmatprep.mubr.f32.mxu0 0.0
    %1759 = vmatmul.mubr.f32.gmra.mxu0 %v1529
    %v1760 = vpop.f32.mrf.mxu0
    %v1761 = vadd.f32 0.0, %v1760
    %v1762 = vpop.f32.mrf.mxu0
    %v1763 = vadd.f32 0.0, %v1762
    %1764 = vdwg.mxu0
    %1765 = vmatprep.subr.mxu0 %v818
    %1766 = vmatpush1.msra.mxu0 %v817
    %1767 = vmatprep.subr.mxu0 %v814
    %1768 = vmatpush1.msra.mxu0 %v813
    %1769 = vmatprep.subr.mxu0 %v810
    %1770 = vmatpush1.msra.mxu0 %v809
    %1771 = vmatprep.subr.mxu0 %v806
    %1772 = vmatpush1.msra.mxu0 %v805
    %1773 = vmatprep.subr.mxu0 %v802
    %1774 = vmatpush1.msra.mxu0 %v801
    %1775 = vmatprep.subr.mxu0 %v798
    %1776 = vmatpush1.msra.mxu0 %v797
    %1777 = vmatprep.subr.mxu0 %v794
    %1778 = vmatpush1.msra.mxu0 %v793
    %1779 = vmatprep.subr.mxu0 %v790
    %1780 = vmatpush1.msra.mxu0 %v789
    %1781 = vmatprep.subr.mxu0 %v786
    %1782 = vmatpush1.msra.mxu0 %v785
    %1783 = vmatprep.subr.mxu0 %v782
    %1784 = vmatpush1.msra.mxu0 %v781
    %1785 = vmatprep.subr.mxu0 %v778
    %1786 = vmatpush1.msra.mxu0 %v777
    %1787 = vmatprep.subr.mxu0 %v774
    %1788 = vmatpush1.msra.mxu0 %v773
    %1789 = vmatprep.subr.mxu0 %v770
    %1790 = vmatpush1.msra.mxu0 %v769
    %1791 = vmatprep.subr.mxu0 %v766
    %1792 = vmatpush1.msra.mxu0 %v765
    %1793 = vmatprep.subr.mxu0 %v762
    %1794 = vmatpush1.msra.mxu0 %v761
    %1795 = vmatprep.subr.mxu0 %v758
    %1796 = vmatpush1.msra.mxu0 %v757
    %1797 = vmatprep.subr.mxu0 0.0
    %1798 = vmatpush2.msra.mxu0 0.0
    %1799 = vmatprep.subr.mxu0 0.0
    %1800 = vmatpush2.msra.mxu0 0.0
    %1801 = vmatprep.subr.mxu0 0.0
    %1802 = vmatpush2.msra.mxu0 0.0
    %1803 = vmatprep.subr.mxu0 0.0
    %1804 = vmatpush2.msra.mxu0 0.0
    %1805 = vmatprep.subr.mxu0 0.0
    %1806 = vmatpush2.msra.mxu0 0.0
    %1807 = vmatprep.subr.mxu0 0.0
    %1808 = vmatpush2.msra.mxu0 0.0
    %1809 = vmatprep.subr.mxu0 0.0
    %1810 = vmatpush2.msra.mxu0 0.0
    %1811 = vmatprep.subr.mxu0 0.0
    %1812 = vmatpush2.msra.mxu0 0.0
    %1813 = vmatprep.subr.mxu0 0.0
    %1814 = vmatpush2.msra.mxu0 0.0
    %1815 = vmatprep.subr.mxu0 0.0
    %1816 = vmatpush2.msra.mxu0 0.0
    %1817 = vmatprep.subr.mxu0 0.0
    %1818 = vmatpush2.msra.mxu0 0.0
    %1819 = vmatprep.subr.mxu0 0.0
    %1820 = vmatpush2.msra.mxu0 0.0
    %1821 = vmatprep.subr.mxu0 0.0
    %1822 = vmatpush2.msra.mxu0 0.0
    %1823 = vmatprep.subr.mxu0 0.0
    %1824 = vmatpush2.msra.mxu0 0.0
    %1825 = vmatprep.subr.mxu0 0.0
    %1826 = vmatpush2.msra.mxu0 0.0
    %1827 = vmatprep.subr.mxu0 0.0
    %1828 = vmatpush2.msra.mxu0 0.0
    %1829 = vmatprep.mubr.f32.mxu0 0.0
    %1830 = vmatmul.mubr.f32.gmra.mxu0 %v1529
    %v1831 = vpop.f32.mrf.mxu0
    %v1832 = vadd.f32 0.0, %v1831
    %v1833 = vpop.f32.mrf.mxu0
    %v1834 = vadd.f32 0.0, %v1833
    %1835 = vdwg.mxu0
    %v1836 = vadd.f32 %v1690, %v1761
    %v1837 = vadd.f32 %v1691, %v1763
    %v1838 = vadd.f32 %v1692, %v1832
    %v1839 = vadd.f32 %v1693, %v1834
    %v1840 = vxor.u32 %v1683, 2147483648
    %v1841 = vmul.f32 %v1840, 1.442695
    %v1842 = vpow.pop %v1841
    %v1843 = vadd.f32 %v1842, 1.0
    %v1844 = vrcp.pop %v1843
    %v1845 = vmul.f32 1.0, %v1844
    %v1846 = vxor.u32 %v1684, 2147483648
    %v1847 = vmul.f32 %v1846, 1.442695
    %v1848 = vpow.pop %v1847
    %v1849 = vadd.f32 %v1848, 1.0
    %v1850 = vrcp.pop %v1849
    %v1851 = vmul.f32 1.0, %v1850
    %v1852 = vtanh.pop %v1685
    %v1853 = vxor.u32 %v1686, 2147483648
    %v1854 = vmul.f32 %v1853, 1.442695
    %v1855 = vpow.pop %v1854
    %v1856 = vadd.f32 %v1855, 1.0
    %v1857 = vrcp.pop %v1856
    %v1858 = vmul.f32 1.0, %v1857
    %v1859 = vmul.f32 %v1851, %v1503
    %v1860 = vmul.f32 %v1845, %v1852
    %v1861 = vadd.f32 %v1859, %v1860
    %v1862 = vtanh.pop %v1861
    %v1863 = vmul.f32 %v1858, %v1862
    %v1864 = vxor.u32 %v1836, 2147483648
    %v1865 = vmul.f32 %v1864, 1.442695
    %v1866 = vpow.pop %v1865
    %v1867 = vadd.f32 %v1866, 1.0
    %v1868 = vrcp.pop %v1867
    %v1869 = vmul.f32 1.0, %v1868
    %v1870 = vxor.u32 %v1837, 2147483648
    %v1871 = vmul.f32 %v1870, 1.442695
    %v1872 = vpow.pop %v1871
    %v1873 = vadd.f32 %v1872, 1.0
    %v1874 = vrcp.pop %v1873
    %v1875 = vmul.f32 1.0, %v1874
    %v1876 = vtanh.pop %v1838
    %v1877 = vxor.u32 %v1839, 2147483648
    %v1878 = vmul.f32 %v1877, 1.442695
    %v1879 = vpow.pop %v1878
    %v1880 = vadd.f32 %v1879, 1.0
    %v1881 = vrcp.pop %v1880
    %v1882 = vmul.f32 1.0, %v1881
    %v1883 = vmul.f32 %v1875, %v1527
    %v1884 = vmul.f32 %v1869, %v1876
    %v1885 = vadd.f32 %v1883, %v1884
    %v1886 = vtanh.pop %v1885
    %v1887 = vmul.f32 %v1882, %v1886
    %s1888 = scalar_lea.vmem [#allocation9], 16
    %1889 = vst [vmem:[%s1888] sm:$0xff] %v1863
    %s1890 = scalar_lea.vmem [#allocation10], 40
    %1891 = vst [vmem:[%s1890] sm:$0xff] %v1887
    %s1892 = smul.u32 3, 4
    %s1893 = smul.addr %s1892, 8
    %s1894 = scalar_lea.vmem [#allocation2], %s1893
    %v1895 = vld [vmem:[%s1894] sm:$0xff]
    %v1896 = vld [vmem:[%s1894 + $0x8] sm:$0xff]
    %v1897 = vld [vmem:[%s1894 + $0x10] sm:$0xff]
    %v1898 = vld [vmem:[%s1894 + $0x18] sm:$0xff]
    %1899 = vmatprep.subr.mxu0 %v752
    %1900 = vmatpush1.msra.mxu0 %v751
    %1901 = vmatprep.subr.mxu0 %v748
    %1902 = vmatpush1.msra.mxu0 %v747
    %1903 = vmatprep.subr.mxu0 %v744
    %1904 = vmatpush1.msra.mxu0 %v743
    %1905 = vmatprep.subr.mxu0 %v740
    %1906 = vmatpush1.msra.mxu0 %v739
    %1907 = vmatprep.subr.mxu0 %v736
    %1908 = vmatpush1.msra.mxu0 %v735
    %1909 = vmatprep.subr.mxu0 %v732
    %1910 = vmatpush1.msra.mxu0 %v731
    %1911 = vmatprep.subr.mxu0 %v728
    %1912 = vmatpush1.msra.mxu0 %v727
    %1913 = vmatprep.subr.mxu0 %v724
    %1914 = vmatpush1.msra.mxu0 %v723
    %1915 = vmatprep.subr.mxu0 %v720
    %1916 = vmatpush1.msra.mxu0 %v719
    %1917 = vmatprep.subr.mxu0 %v716
    %1918 = vmatpush1.msra.mxu0 %v715
    %1919 = vmatprep.subr.mxu0 %v712
    %1920 = vmatpush1.msra.mxu0 %v711
    %1921 = vmatprep.subr.mxu0 %v708
    %1922 = vmatpush1.msra.mxu0 %v707
    %1923 = vmatprep.subr.mxu0 %v704
    %1924 = vmatpush1.msra.mxu0 %v703
    %1925 = vmatprep.subr.mxu0 %v700
    %1926 = vmatpush1.msra.mxu0 %v699
    %1927 = vmatprep.subr.mxu0 %v696
    %1928 = vmatpush1.msra.mxu0 %v695
    %1929 = vmatprep.subr.mxu0 %v692
    %1930 = vmatpush1.msra.mxu0 %v691
    %1931 = vmatprep.subr.mxu0 0.0
    %1932 = vmatpush2.msra.mxu0 0.0
    %1933 = vmatprep.subr.mxu0 0.0
    %1934 = vmatpush2.msra.mxu0 0.0
    %1935 = vmatprep.subr.mxu0 0.0
    %1936 = vmatpush2.msra.mxu0 0.0
    %1937 = vmatprep.subr.mxu0 0.0
    %1938 = vmatpush2.msra.mxu0 0.0
    %1939 = vmatprep.subr.mxu0 0.0
    %1940 = vmatpush2.msra.mxu0 0.0
    %1941 = vmatprep.subr.mxu0 0.0
    %1942 = vmatpush2.msra.mxu0 0.0
    %1943 = vmatprep.subr.mxu0 0.0
    %1944 = vmatpush2.msra.mxu0 0.0
    %1945 = vmatprep.subr.mxu0 0.0
    %1946 = vmatpush2.msra.mxu0 0.0
    %1947 = vmatprep.subr.mxu0 0.0
    %1948 = vmatpush2.msra.mxu0 0.0
    %1949 = vmatprep.subr.mxu0 0.0
    %1950 = vmatpush2.msra.mxu0 0.0
    %1951 = vmatprep.subr.mxu0 0.0
    %1952 = vmatpush2.msra.mxu0 0.0
    %1953 = vmatprep.subr.mxu0 0.0
    %1954 = vmatpush2.msra.mxu0 0.0
    %1955 = vmatprep.subr.mxu0 0.0
    %1956 = vmatpush2.msra.mxu0 0.0
    %1957 = vmatprep.subr.mxu0 0.0
    %1958 = vmatpush2.msra.mxu0 0.0
    %1959 = vmatprep.subr.mxu0 0.0
    %1960 = vmatpush2.msra.mxu0 0.0
    %1961 = vmatprep.subr.mxu0 0.0
    %1962 = vmatpush2.msra.mxu0 0.0
    %1963 = vmatprep.mubr.f32.mxu0 0.0
    %1964 = vmatmul.mubr.f32.gmra.mxu0 %v1863
    %v1965 = vpop.f32.mrf.mxu0
    %v1966 = vadd.f32 0.0, %v1965
    %v1967 = vpop.f32.mrf.mxu0
    %v1968 = vadd.f32 0.0, %v1967
    %1969 = vdwg.mxu0
    %1970 = vmatprep.subr.mxu0 %v754
    %1971 = vmatpush1.msra.mxu0 %v753
    %1972 = vmatprep.subr.mxu0 %v750
    %1973 = vmatpush1.msra.mxu0 %v749
    %1974 = vmatprep.subr.mxu0 %v746
    %1975 = vmatpush1.msra.mxu0 %v745
    %1976 = vmatprep.subr.mxu0 %v742
    %1977 = vmatpush1.msra.mxu0 %v741
    %1978 = vmatprep.subr.mxu0 %v738
    %1979 = vmatpush1.msra.mxu0 %v737
    %1980 = vmatprep.subr.mxu0 %v734
    %1981 = vmatpush1.msra.mxu0 %v733
    %1982 = vmatprep.subr.mxu0 %v730
    %1983 = vmatpush1.msra.mxu0 %v729
    %1984 = vmatprep.subr.mxu0 %v726
    %1985 = vmatpush1.msra.mxu0 %v725
    %1986 = vmatprep.subr.mxu0 %v722
    %1987 = vmatpush1.msra.mxu0 %v721
    %1988 = vmatprep.subr.mxu0 %v718
    %1989 = vmatpush1.msra.mxu0 %v717
    %1990 = vmatprep.subr.mxu0 %v714
    %1991 = vmatpush1.msra.mxu0 %v713
    %1992 = vmatprep.subr.mxu0 %v710
    %1993 = vmatpush1.msra.mxu0 %v709
    %1994 = vmatprep.subr.mxu0 %v706
    %1995 = vmatpush1.msra.mxu0 %v705
    %1996 = vmatprep.subr.mxu0 %v702
    %1997 = vmatpush1.msra.mxu0 %v701
    %1998 = vmatprep.subr.mxu0 %v698
    %1999 = vmatpush1.msra.mxu0 %v697
    %2000 = vmatprep.subr.mxu0 %v694
    %2001 = vmatpush1.msra.mxu0 %v693
    %2002 = vmatprep.subr.mxu0 0.0
    %2003 = vmatpush2.msra.mxu0 0.0
    %2004 = vmatprep.subr.mxu0 0.0
    %2005 = vmatpush2.msra.mxu0 0.0
    %2006 = vmatprep.subr.mxu0 0.0
    %2007 = vmatpush2.msra.mxu0 0.0
    %2008 = vmatprep.subr.mxu0 0.0
    %2009 = vmatpush2.msra.mxu0 0.0
    %2010 = vmatprep.subr.mxu0 0.0
    %2011 = vmatpush2.msra.mxu0 0.0
    %2012 = vmatprep.subr.mxu0 0.0
    %2013 = vmatpush2.msra.mxu0 0.0
    %2014 = vmatprep.subr.mxu0 0.0
    %2015 = vmatpush2.msra.mxu0 0.0
    %2016 = vmatprep.subr.mxu0 0.0
    %2017 = vmatpush2.msra.mxu0 0.0
    %2018 = vmatprep.subr.mxu0 0.0
    %2019 = vmatpush2.msra.mxu0 0.0
    %2020 = vmatprep.subr.mxu0 0.0
    %2021 = vmatpush2.msra.mxu0 0.0
    %2022 = vmatprep.subr.mxu0 0.0
    %2023 = vmatpush2.msra.mxu0 0.0
    %2024 = vmatprep.subr.mxu0 0.0
    %2025 = vmatpush2.msra.mxu0 0.0
    %2026 = vmatprep.subr.mxu0 0.0
    %2027 = vmatpush2.msra.mxu0 0.0
    %2028 = vmatprep.subr.mxu0 0.0
    %2029 = vmatpush2.msra.mxu0 0.0
    %2030 = vmatprep.subr.mxu0 0.0
    %2031 = vmatpush2.msra.mxu0 0.0
    %2032 = vmatprep.subr.mxu0 0.0
    %2033 = vmatpush2.msra.mxu0 0.0
    %2034 = vmatprep.mubr.f32.mxu0 0.0
    %2035 = vmatmul.mubr.f32.gmra.mxu0 %v1863
    %v2036 = vpop.f32.mrf.mxu0
    %v2037 = vadd.f32 0.0, %v2036
    %v2038 = vpop.f32.mrf.mxu0
    %v2039 = vadd.f32 0.0, %v2038
    %2040 = vdwg.mxu0
    %v2041 = vadd.f32 %v1895, %v1966
    %v2042 = vadd.f32 %v1896, %v1968
    %v2043 = vadd.f32 %v1897, %v2037
    %v2044 = vadd.f32 %v1898, %v2039
    %s2045 = smul.u32 4, 4
    %s2046 = smul.addr %s2045, 8
    %s2047 = scalar_lea.vmem [#allocation3], %s2046
    %v2048 = vld [vmem:[%s2047] sm:$0xff]
    %v2049 = vld [vmem:[%s2047 + $0x8] sm:$0xff]
    %v2050 = vld [vmem:[%s2047 + $0x10] sm:$0xff]
    %v2051 = vld [vmem:[%s2047 + $0x18] sm:$0xff]
    %2052 = vmatprep.subr.mxu0 %v816
    %2053 = vmatpush1.msra.mxu0 %v815
    %2054 = vmatprep.subr.mxu0 %v812
    %2055 = vmatpush1.msra.mxu0 %v811
    %2056 = vmatprep.subr.mxu0 %v808
    %2057 = vmatpush1.msra.mxu0 %v807
    %2058 = vmatprep.subr.mxu0 %v804
    %2059 = vmatpush1.msra.mxu0 %v803
    %2060 = vmatprep.subr.mxu0 %v800
    %2061 = vmatpush1.msra.mxu0 %v799
    %2062 = vmatprep.subr.mxu0 %v796
    %2063 = vmatpush1.msra.mxu0 %v795
    %2064 = vmatprep.subr.mxu0 %v792
    %2065 = vmatpush1.msra.mxu0 %v791
    %2066 = vmatprep.subr.mxu0 %v788
    %2067 = vmatpush1.msra.mxu0 %v787
    %2068 = vmatprep.subr.mxu0 %v784
    %2069 = vmatpush1.msra.mxu0 %v783
    %2070 = vmatprep.subr.mxu0 %v780
    %2071 = vmatpush1.msra.mxu0 %v779
    %2072 = vmatprep.subr.mxu0 %v776
    %2073 = vmatpush1.msra.mxu0 %v775
    %2074 = vmatprep.subr.mxu0 %v772
    %2075 = vmatpush1.msra.mxu0 %v771
    %2076 = vmatprep.subr.mxu0 %v768
    %2077 = vmatpush1.msra.mxu0 %v767
    %2078 = vmatprep.subr.mxu0 %v764
    %2079 = vmatpush1.msra.mxu0 %v763
    %2080 = vmatprep.subr.mxu0 %v760
    %2081 = vmatpush1.msra.mxu0 %v759
    %2082 = vmatprep.subr.mxu0 %v756
    %2083 = vmatpush1.msra.mxu0 %v755
    %2084 = vmatprep.subr.mxu0 0.0
    %2085 = vmatpush2.msra.mxu0 0.0
    %2086 = vmatprep.subr.mxu0 0.0
    %2087 = vmatpush2.msra.mxu0 0.0
    %2088 = vmatprep.subr.mxu0 0.0
    %2089 = vmatpush2.msra.mxu0 0.0
    %2090 = vmatprep.subr.mxu0 0.0
    %2091 = vmatpush2.msra.mxu0 0.0
    %2092 = vmatprep.subr.mxu0 0.0
    %2093 = vmatpush2.msra.mxu0 0.0
    %2094 = vmatprep.subr.mxu0 0.0
    %2095 = vmatpush2.msra.mxu0 0.0
    %2096 = vmatprep.subr.mxu0 0.0
    %2097 = vmatpush2.msra.mxu0 0.0
    %2098 = vmatprep.subr.mxu0 0.0
    %2099 = vmatpush2.msra.mxu0 0.0
    %2100 = vmatprep.subr.mxu0 0.0
    %2101 = vmatpush2.msra.mxu0 0.0
    %2102 = vmatprep.subr.mxu0 0.0
    %2103 = vmatpush2.msra.mxu0 0.0
    %2104 = vmatprep.subr.mxu0 0.0
    %2105 = vmatpush2.msra.mxu0 0.0
    %2106 = vmatprep.subr.mxu0 0.0
    %2107 = vmatpush2.msra.mxu0 0.0
    %2108 = vmatprep.subr.mxu0 0.0
    %2109 = vmatpush2.msra.mxu0 0.0
    %2110 = vmatprep.subr.mxu0 0.0
    %2111 = vmatpush2.msra.mxu0 0.0
    %2112 = vmatprep.subr.mxu0 0.0
    %2113 = vmatpush2.msra.mxu0 0.0
    %2114 = vmatprep.subr.mxu0 0.0
    %2115 = vmatpush2.msra.mxu0 0.0
    %2116 = vmatprep.mubr.f32.mxu0 0.0
    %2117 = vmatmul.mubr.f32.gmra.mxu0 %v1887
    %v2118 = vpop.f32.mrf.mxu0
    %v2119 = vadd.f32 0.0, %v2118
    %v2120 = vpop.f32.mrf.mxu0
    %v2121 = vadd.f32 0.0, %v2120
    %2122 = vdwg.mxu0
    %2123 = vmatprep.subr.mxu0 %v818
    %2124 = vmatpush1.msra.mxu0 %v817
    %2125 = vmatprep.subr.mxu0 %v814
    %2126 = vmatpush1.msra.mxu0 %v813
    %2127 = vmatprep.subr.mxu0 %v810
    %2128 = vmatpush1.msra.mxu0 %v809
    %2129 = vmatprep.subr.mxu0 %v806
    %2130 = vmatpush1.msra.mxu0 %v805
    %2131 = vmatprep.subr.mxu0 %v802
    %2132 = vmatpush1.msra.mxu0 %v801
    %2133 = vmatprep.subr.mxu0 %v798
    %2134 = vmatpush1.msra.mxu0 %v797
    %2135 = vmatprep.subr.mxu0 %v794
    %2136 = vmatpush1.msra.mxu0 %v793
    %2137 = vmatprep.subr.mxu0 %v790
    %2138 = vmatpush1.msra.mxu0 %v789
    %2139 = vmatprep.subr.mxu0 %v786
    %2140 = vmatpush1.msra.mxu0 %v785
    %2141 = vmatprep.subr.mxu0 %v782
    %2142 = vmatpush1.msra.mxu0 %v781
    %2143 = vmatprep.subr.mxu0 %v778
    %2144 = vmatpush1.msra.mxu0 %v777
    %2145 = vmatprep.subr.mxu0 %v774
    %2146 = vmatpush1.msra.mxu0 %v773
    %2147 = vmatprep.subr.mxu0 %v770
    %2148 = vmatpush1.msra.mxu0 %v769
    %2149 = vmatprep.subr.mxu0 %v766
    %2150 = vmatpush1.msra.mxu0 %v765
    %2151 = vmatprep.subr.mxu0 %v762
    %2152 = vmatpush1.msra.mxu0 %v761
    %2153 = vmatprep.subr.mxu0 %v758
    %2154 = vmatpush1.msra.mxu0 %v757
    %2155 = vmatprep.subr.mxu0 0.0
    %2156 = vmatpush2.msra.mxu0 0.0
    %2157 = vmatprep.subr.mxu0 0.0
    %2158 = vmatpush2.msra.mxu0 0.0
    %2159 = vmatprep.subr.mxu0 0.0
    %2160 = vmatpush2.msra.mxu0 0.0
    %2161 = vmatprep.subr.mxu0 0.0
    %2162 = vmatpush2.msra.mxu0 0.0
    %2163 = vmatprep.subr.mxu0 0.0
    %2164 = vmatpush2.msra.mxu0 0.0
    %2165 = vmatprep.subr.mxu0 0.0
    %2166 = vmatpush2.msra.mxu0 0.0
    %2167 = vmatprep.subr.mxu0 0.0
    %2168 = vmatpush2.msra.mxu0 0.0
    %2169 = vmatprep.subr.mxu0 0.0
    %2170 = vmatpush2.msra.mxu0 0.0
    %2171 = vmatprep.subr.mxu0 0.0
    %2172 = vmatpush2.msra.mxu0 0.0
    %2173 = vmatprep.subr.mxu0 0.0
    %2174 = vmatpush2.msra.mxu0 0.0
    %2175 = vmatprep.subr.mxu0 0.0
    %2176 = vmatpush2.msra.mxu0 0.0
    %2177 = vmatprep.subr.mxu0 0.0
    %2178 = vmatpush2.msra.mxu0 0.0
    %2179 = vmatprep.subr.mxu0 0.0
    %2180 = vmatpush2.msra.mxu0 0.0
    %2181 = vmatprep.subr.mxu0 0.0
    %2182 = vmatpush2.msra.mxu0 0.0
    %2183 = vmatprep.subr.mxu0 0.0
    %2184 = vmatpush2.msra.mxu0 0.0
    %2185 = vmatprep.subr.mxu0 0.0
    %2186 = vmatpush2.msra.mxu0 0.0
    %2187 = vmatprep.mubr.f32.mxu0 0.0
    %2188 = vmatmul.mubr.f32.gmra.mxu0 %v1887
    %v2189 = vpop.f32.mrf.mxu0
    %v2190 = vadd.f32 0.0, %v2189
    %v2191 = vpop.f32.mrf.mxu0
    %v2192 = vadd.f32 0.0, %v2191
    %2193 = vdwg.mxu0
    %v2194 = vadd.f32 %v2048, %v2119
    %v2195 = vadd.f32 %v2049, %v2121
    %v2196 = vadd.f32 %v2050, %v2190
    %v2197 = vadd.f32 %v2051, %v2192
    %v2198 = vxor.u32 %v2041, 2147483648
    %v2199 = vmul.f32 %v2198, 1.442695
    %v2200 = vpow.pop %v2199
    %v2201 = vadd.f32 %v2200, 1.0
    %v2202 = vrcp.pop %v2201
    %v2203 = vmul.f32 1.0, %v2202
    %v2204 = vxor.u32 %v2042, 2147483648
    %v2205 = vmul.f32 %v2204, 1.442695
    %v2206 = vpow.pop %v2205
    %v2207 = vadd.f32 %v2206, 1.0
    %v2208 = vrcp.pop %v2207
    %v2209 = vmul.f32 1.0, %v2208
    %v2210 = vtanh.pop %v2043
    %v2211 = vxor.u32 %v2044, 2147483648
    %v2212 = vmul.f32 %v2211, 1.442695
    %v2213 = vpow.pop %v2212
    %v2214 = vadd.f32 %v2213, 1.0
    %v2215 = vrcp.pop %v2214
    %v2216 = vmul.f32 1.0, %v2215
    %v2217 = vmul.f32 %v2209, %v1861
    %v2218 = vmul.f32 %v2203, %v2210
    %v2219 = vadd.f32 %v2217, %v2218
    %v2220 = vtanh.pop %v2219
    %v2221 = vmul.f32 %v2216, %v2220
    %v2222 = vxor.u32 %v2194, 2147483648
    %v2223 = vmul.f32 %v2222, 1.442695
    %v2224 = vpow.pop %v2223
    %v2225 = vadd.f32 %v2224, 1.0
    %v2226 = vrcp.pop %v2225
    %v2227 = vmul.f32 1.0, %v2226
    %v2228 = vxor.u32 %v2195, 2147483648
    %v2229 = vmul.f32 %v2228, 1.442695
    %v2230 = vpow.pop %v2229
    %v2231 = vadd.f32 %v2230, 1.0
    %v2232 = vrcp.pop %v2231
    %v2233 = vmul.f32 1.0, %v2232
    %v2234 = vtanh.pop %v2196
    %v2235 = vxor.u32 %v2197, 2147483648
    %v2236 = vmul.f32 %v2235, 1.442695
    %v2237 = vpow.pop %v2236
    %v2238 = vadd.f32 %v2237, 1.0
    %v2239 = vrcp.pop %v2238
    %v2240 = vmul.f32 1.0, %v2239
    %v2241 = vmul.f32 %v2233, %v1885
    %v2242 = vmul.f32 %v2227, %v2234
    %v2243 = vadd.f32 %v2241, %v2242
    %v2244 = vtanh.pop %v2243
    %v2245 = vmul.f32 %v2240, %v2244
    %s2246 = scalar_lea.vmem [#allocation9], 24
    %2247 = vst [vmem:[%s2246] sm:$0xff] %v2221
    %s2248 = scalar_lea.vmem [#allocation10], 32
    %2249 = vst [vmem:[%s2248] sm:$0xff] %v2245
    %s2250 = smul.addr %s2045, 8
    %s2251 = scalar_lea.vmem [#allocation2], %s2250
    %v2252 = vld [vmem:[%s2251] sm:$0xff]
    %v2253 = vld [vmem:[%s2251 + $0x8] sm:$0xff]
    %v2254 = vld [vmem:[%s2251 + $0x10] sm:$0xff]
    %v2255 = vld [vmem:[%s2251 + $0x18] sm:$0xff]
    %2256 = vmatprep.subr.mxu0 %v752
    %2257 = vmatpush1.msra.mxu0 %v751
    %2258 = vmatprep.subr.mxu0 %v748
    %2259 = vmatpush1.msra.mxu0 %v747
    %2260 = vmatprep.subr.mxu0 %v744
    %2261 = vmatpush1.msra.mxu0 %v743
    %2262 = vmatprep.subr.mxu0 %v740
    %2263 = vmatpush1.msra.mxu0 %v739
    %2264 = vmatprep.subr.mxu0 %v736
    %2265 = vmatpush1.msra.mxu0 %v735
    %2266 = vmatprep.subr.mxu0 %v732
    %2267 = vmatpush1.msra.mxu0 %v731
    %2268 = vmatprep.subr.mxu0 %v728
    %2269 = vmatpush1.msra.mxu0 %v727
    %2270 = vmatprep.subr.mxu0 %v724
    %2271 = vmatpush1.msra.mxu0 %v723
    %2272 = vmatprep.subr.mxu0 %v720
    %2273 = vmatpush1.msra.mxu0 %v719
    %2274 = vmatprep.subr.mxu0 %v716
    %2275 = vmatpush1.msra.mxu0 %v715
    %2276 = vmatprep.subr.mxu0 %v712
    %2277 = vmatpush1.msra.mxu0 %v711
    %2278 = vmatprep.subr.mxu0 %v708
    %2279 = vmatpush1.msra.mxu0 %v707
    %2280 = vmatprep.subr.mxu0 %v704
    %2281 = vmatpush1.msra.mxu0 %v703
    %2282 = vmatprep.subr.mxu0 %v700
    %2283 = vmatpush1.msra.mxu0 %v699
    %2284 = vmatprep.subr.mxu0 %v696
    %2285 = vmatpush1.msra.mxu0 %v695
    %2286 = vmatprep.subr.mxu0 %v692
    %2287 = vmatpush1.msra.mxu0 %v691
    %2288 = vmatprep.subr.mxu0 0.0
    %2289 = vmatpush2.msra.mxu0 0.0
    %2290 = vmatprep.subr.mxu0 0.0
    %2291 = vmatpush2.msra.mxu0 0.0
    %2292 = vmatprep.subr.mxu0 0.0
    %2293 = vmatpush2.msra.mxu0 0.0
    %2294 = vmatprep.subr.mxu0 0.0
    %2295 = vmatpush2.msra.mxu0 0.0
    %2296 = vmatprep.subr.mxu0 0.0
    %2297 = vmatpush2.msra.mxu0 0.0
    %2298 = vmatprep.subr.mxu0 0.0
    %2299 = vmatpush2.msra.mxu0 0.0
    %2300 = vmatprep.subr.mxu0 0.0
    %2301 = vmatpush2.msra.mxu0 0.0
    %2302 = vmatprep.subr.mxu0 0.0
    %2303 = vmatpush2.msra.mxu0 0.0
    %2304 = vmatprep.subr.mxu0 0.0
    %2305 = vmatpush2.msra.mxu0 0.0
    %2306 = vmatprep.subr.mxu0 0.0
    %2307 = vmatpush2.msra.mxu0 0.0
    %2308 = vmatprep.subr.mxu0 0.0
    %2309 = vmatpush2.msra.mxu0 0.0
    %2310 = vmatprep.subr.mxu0 0.0
    %2311 = vmatpush2.msra.mxu0 0.0
    %2312 = vmatprep.subr.mxu0 0.0
    %2313 = vmatpush2.msra.mxu0 0.0
    %2314 = vmatprep.subr.mxu0 0.0
    %2315 = vmatpush2.msra.mxu0 0.0
    %2316 = vmatprep.subr.mxu0 0.0
    %2317 = vmatpush2.msra.mxu0 0.0
    %2318 = vmatprep.subr.mxu0 0.0
    %2319 = vmatpush2.msra.mxu0 0.0
    %2320 = vmatprep.mubr.f32.mxu0 0.0
    %2321 = vmatmul.mubr.f32.gmra.mxu0 %v2221
    %v2322 = vpop.f32.mrf.mxu0
    %v2323 = vadd.f32 0.0, %v2322
    %v2324 = vpop.f32.mrf.mxu0
    %v2325 = vadd.f32 0.0, %v2324
    %2326 = vdwg.mxu0
    %2327 = vmatprep.subr.mxu0 %v754
    %2328 = vmatpush1.msra.mxu0 %v753
    %2329 = vmatprep.subr.mxu0 %v750
    %2330 = vmatpush1.msra.mxu0 %v749
    %2331 = vmatprep.subr.mxu0 %v746
    %2332 = vmatpush1.msra.mxu0 %v745
    %2333 = vmatprep.subr.mxu0 %v742
    %2334 = vmatpush1.msra.mxu0 %v741
    %2335 = vmatprep.subr.mxu0 %v738
    %2336 = vmatpush1.msra.mxu0 %v737
    %2337 = vmatprep.subr.mxu0 %v734
    %2338 = vmatpush1.msra.mxu0 %v733
    %2339 = vmatprep.subr.mxu0 %v730
    %2340 = vmatpush1.msra.mxu0 %v729
    %2341 = vmatprep.subr.mxu0 %v726
    %2342 = vmatpush1.msra.mxu0 %v725
    %2343 = vmatprep.subr.mxu0 %v722
    %2344 = vmatpush1.msra.mxu0 %v721
    %2345 = vmatprep.subr.mxu0 %v718
    %2346 = vmatpush1.msra.mxu0 %v717
    %2347 = vmatprep.subr.mxu0 %v714
    %2348 = vmatpush1.msra.mxu0 %v713
    %2349 = vmatprep.subr.mxu0 %v710
    %2350 = vmatpush1.msra.mxu0 %v709
    %2351 = vmatprep.subr.mxu0 %v706
    %2352 = vmatpush1.msra.mxu0 %v705
    %2353 = vmatprep.subr.mxu0 %v702
    %2354 = vmatpush1.msra.mxu0 %v701
    %2355 = vmatprep.subr.mxu0 %v698
    %2356 = vmatpush1.msra.mxu0 %v697
    %2357 = vmatprep.subr.mxu0 %v694
    %2358 = vmatpush1.msra.mxu0 %v693
    %2359 = vmatprep.subr.mxu0 0.0
    %2360 = vmatpush2.msra.mxu0 0.0
    %2361 = vmatprep.subr.mxu0 0.0
    %2362 = vmatpush2.msra.mxu0 0.0
    %2363 = vmatprep.subr.mxu0 0.0
    %2364 = vmatpush2.msra.mxu0 0.0
    %2365 = vmatprep.subr.mxu0 0.0
    %2366 = vmatpush2.msra.mxu0 0.0
    %2367 = vmatprep.subr.mxu0 0.0
    %2368 = vmatpush2.msra.mxu0 0.0
    %2369 = vmatprep.subr.mxu0 0.0
    %2370 = vmatpush2.msra.mxu0 0.0
    %2371 = vmatprep.subr.mxu0 0.0
    %2372 = vmatpush2.msra.mxu0 0.0
    %2373 = vmatprep.subr.mxu0 0.0
    %2374 = vmatpush2.msra.mxu0 0.0
    %2375 = vmatprep.subr.mxu0 0.0
    %2376 = vmatpush2.msra.mxu0 0.0
    %2377 = vmatprep.subr.mxu0 0.0
    %2378 = vmatpush2.msra.mxu0 0.0
    %2379 = vmatprep.subr.mxu0 0.0
    %2380 = vmatpush2.msra.mxu0 0.0
    %2381 = vmatprep.subr.mxu0 0.0
    %2382 = vmatpush2.msra.mxu0 0.0
    %2383 = vmatprep.subr.mxu0 0.0
    %2384 = vmatpush2.msra.mxu0 0.0
    %2385 = vmatprep.subr.mxu0 0.0
    %2386 = vmatpush2.msra.mxu0 0.0
    %2387 = vmatprep.subr.mxu0 0.0
    %2388 = vmatpush2.msra.mxu0 0.0
    %2389 = vmatprep.subr.mxu0 0.0
    %2390 = vmatpush2.msra.mxu0 0.0
    %2391 = vmatprep.mubr.f32.mxu0 0.0
    %2392 = vmatmul.mubr.f32.gmra.mxu0 %v2221
    %v2393 = vpop.f32.mrf.mxu0
    %v2394 = vadd.f32 0.0, %v2393
    %v2395 = vpop.f32.mrf.mxu0
    %v2396 = vadd.f32 0.0, %v2395
    %2397 = vdwg.mxu0
    %v2398 = vadd.f32 %v2252, %v2323
    %v2399 = vadd.f32 %v2253, %v2325
    %v2400 = vadd.f32 %v2254, %v2394
    %v2401 = vadd.f32 %v2255, %v2396
    %s2402 = smul.addr %s1892, 8
    %s2403 = scalar_lea.vmem [#allocation3], %s2402
    %v2404 = vld [vmem:[%s2403] sm:$0xff]
    %v2405 = vld [vmem:[%s2403 + $0x8] sm:$0xff]
    %v2406 = vld [vmem:[%s2403 + $0x10] sm:$0xff]
    %v2407 = vld [vmem:[%s2403 + $0x18] sm:$0xff]
    %2408 = vmatprep.subr.mxu0 %v816
    %2409 = vmatpush1.msra.mxu0 %v815
    %2410 = vmatprep.subr.mxu0 %v812
    %2411 = vmatpush1.msra.mxu0 %v811
    %2412 = vmatprep.subr.mxu0 %v808
    %2413 = vmatpush1.msra.mxu0 %v807
    %2414 = vmatprep.subr.mxu0 %v804
    %2415 = vmatpush1.msra.mxu0 %v803
    %2416 = vmatprep.subr.mxu0 %v800
    %2417 = vmatpush1.msra.mxu0 %v799
    %2418 = vmatprep.subr.mxu0 %v796
    %2419 = vmatpush1.msra.mxu0 %v795
    %2420 = vmatprep.subr.mxu0 %v792
    %2421 = vmatpush1.msra.mxu0 %v791
    %2422 = vmatprep.subr.mxu0 %v788
    %2423 = vmatpush1.msra.mxu0 %v787
    %2424 = vmatprep.subr.mxu0 %v784
    %2425 = vmatpush1.msra.mxu0 %v783
    %2426 = vmatprep.subr.mxu0 %v780
    %2427 = vmatpush1.msra.mxu0 %v779
    %2428 = vmatprep.subr.mxu0 %v776
    %2429 = vmatpush1.msra.mxu0 %v775
    %2430 = vmatprep.subr.mxu0 %v772
    %2431 = vmatpush1.msra.mxu0 %v771
    %2432 = vmatprep.subr.mxu0 %v768
    %2433 = vmatpush1.msra.mxu0 %v767
    %2434 = vmatprep.subr.mxu0 %v764
    %2435 = vmatpush1.msra.mxu0 %v763
    %2436 = vmatprep.subr.mxu0 %v760
    %2437 = vmatpush1.msra.mxu0 %v759
    %2438 = vmatprep.subr.mxu0 %v756
    %2439 = vmatpush1.msra.mxu0 %v755
    %2440 = vmatprep.subr.mxu0 0.0
    %2441 = vmatpush2.msra.mxu0 0.0
    %2442 = vmatprep.subr.mxu0 0.0
    %2443 = vmatpush2.msra.mxu0 0.0
    %2444 = vmatprep.subr.mxu0 0.0
    %2445 = vmatpush2.msra.mxu0 0.0
    %2446 = vmatprep.subr.mxu0 0.0
    %2447 = vmatpush2.msra.mxu0 0.0
    %2448 = vmatprep.subr.mxu0 0.0
    %2449 = vmatpush2.msra.mxu0 0.0
    %2450 = vmatprep.subr.mxu0 0.0
    %2451 = vmatpush2.msra.mxu0 0.0
    %2452 = vmatprep.subr.mxu0 0.0
    %2453 = vmatpush2.msra.mxu0 0.0
    %2454 = vmatprep.subr.mxu0 0.0
    %2455 = vmatpush2.msra.mxu0 0.0
    %2456 = vmatprep.subr.mxu0 0.0
    %2457 = vmatpush2.msra.mxu0 0.0
    %2458 = vmatprep.subr.mxu0 0.0
    %2459 = vmatpush2.msra.mxu0 0.0
    %2460 = vmatprep.subr.mxu0 0.0
    %2461 = vmatpush2.msra.mxu0 0.0
    %2462 = vmatprep.subr.mxu0 0.0
    %2463 = vmatpush2.msra.mxu0 0.0
    %2464 = vmatprep.subr.mxu0 0.0
    %2465 = vmatpush2.msra.mxu0 0.0
    %2466 = vmatprep.subr.mxu0 0.0
    %2467 = vmatpush2.msra.mxu0 0.0
    %2468 = vmatprep.subr.mxu0 0.0
    %2469 = vmatpush2.msra.mxu0 0.0
    %2470 = vmatprep.subr.mxu0 0.0
    %2471 = vmatpush2.msra.mxu0 0.0
    %2472 = vmatprep.mubr.f32.mxu0 0.0
    %2473 = vmatmul.mubr.f32.gmra.mxu0 %v2245
    %v2474 = vpop.f32.mrf.mxu0
    %v2475 = vadd.f32 0.0, %v2474
    %v2476 = vpop.f32.mrf.mxu0
    %v2477 = vadd.f32 0.0, %v2476
    %2478 = vdwg.mxu0
    %2479 = vmatprep.subr.mxu0 %v818
    %2480 = vmatpush1.msra.mxu0 %v817
    %2481 = vmatprep.subr.mxu0 %v814
    %2482 = vmatpush1.msra.mxu0 %v813
    %2483 = vmatprep.subr.mxu0 %v810
    %2484 = vmatpush1.msra.mxu0 %v809
    %2485 = vmatprep.subr.mxu0 %v806
    %2486 = vmatpush1.msra.mxu0 %v805
    %2487 = vmatprep.subr.mxu0 %v802
    %2488 = vmatpush1.msra.mxu0 %v801
    %2489 = vmatprep.subr.mxu0 %v798
    %2490 = vmatpush1.msra.mxu0 %v797
    %2491 = vmatprep.subr.mxu0 %v794
    %2492 = vmatpush1.msra.mxu0 %v793
    %2493 = vmatprep.subr.mxu0 %v790
    %2494 = vmatpush1.msra.mxu0 %v789
    %2495 = vmatprep.subr.mxu0 %v786
    %2496 = vmatpush1.msra.mxu0 %v785
    %2497 = vmatprep.subr.mxu0 %v782
    %2498 = vmatpush1.msra.mxu0 %v781
    %2499 = vmatprep.subr.mxu0 %v778
    %2500 = vmatpush1.msra.mxu0 %v777
    %2501 = vmatprep.subr.mxu0 %v774
    %2502 = vmatpush1.msra.mxu0 %v773
    %2503 = vmatprep.subr.mxu0 %v770
    %2504 = vmatpush1.msra.mxu0 %v769
    %2505 = vmatprep.subr.mxu0 %v766
    %2506 = vmatpush1.msra.mxu0 %v765
    %2507 = vmatprep.subr.mxu0 %v762
    %2508 = vmatpush1.msra.mxu0 %v761
    %2509 = vmatprep.subr.mxu0 %v758
    %2510 = vmatpush1.msra.mxu0 %v757
    %2511 = vmatprep.subr.mxu0 0.0
    %2512 = vmatpush2.msra.mxu0 0.0
    %2513 = vmatprep.subr.mxu0 0.0
    %2514 = vmatpush2.msra.mxu0 0.0
    %2515 = vmatprep.subr.mxu0 0.0
    %2516 = vmatpush2.msra.mxu0 0.0
    %2517 = vmatprep.subr.mxu0 0.0
    %2518 = vmatpush2.msra.mxu0 0.0
    %2519 = vmatprep.subr.mxu0 0.0
    %2520 = vmatpush2.msra.mxu0 0.0
    %2521 = vmatprep.subr.mxu0 0.0
    %2522 = vmatpush2.msra.mxu0 0.0
    %2523 = vmatprep.subr.mxu0 0.0
    %2524 = vmatpush2.msra.mxu0 0.0
    %2525 = vmatprep.subr.mxu0 0.0
    %2526 = vmatpush2.msra.mxu0 0.0
    %2527 = vmatprep.subr.mxu0 0.0
    %2528 = vmatpush2.msra.mxu0 0.0
    %2529 = vmatprep.subr.mxu0 0.0
    %2530 = vmatpush2.msra.mxu0 0.0
    %2531 = vmatprep.subr.mxu0 0.0
    %2532 = vmatpush2.msra.mxu0 0.0
    %2533 = vmatprep.subr.mxu0 0.0
    %2534 = vmatpush2.msra.mxu0 0.0
    %2535 = vmatprep.subr.mxu0 0.0
    %2536 = vmatpush2.msra.mxu0 0.0
    %2537 = vmatprep.subr.mxu0 0.0
    %2538 = vmatpush2.msra.mxu0 0.0
    %2539 = vmatprep.subr.mxu0 0.0
    %2540 = vmatpush2.msra.mxu0 0.0
    %2541 = vmatprep.subr.mxu0 0.0
    %2542 = vmatpush2.msra.mxu0 0.0
    %2543 = vmatprep.mubr.f32.mxu0 0.0
    %2544 = vmatmul.mubr.f32.gmra.mxu0 %v2245
    %v2545 = vpop.f32.mrf.mxu0
    %v2546 = vadd.f32 0.0, %v2545
    %v2547 = vpop.f32.mrf.mxu0
    %v2548 = vadd.f32 0.0, %v2547
    %2549 = vdwg.mxu0
    %v2550 = vadd.f32 %v2404, %v2475
    %v2551 = vadd.f32 %v2405, %v2477
    %v2552 = vadd.f32 %v2406, %v2546
    %v2553 = vadd.f32 %v2407, %v2548
    %v2554 = vxor.u32 %v2398, 2147483648
    %v2555 = vmul.f32 %v2554, 1.442695
    %v2556 = vpow.pop %v2555
    %v2557 = vadd.f32 %v2556, 1.0
    %v2558 = vrcp.pop %v2557
    %v2559 = vmul.f32 1.0, %v2558
    %v2560 = vxor.u32 %v2399, 2147483648
    %v2561 = vmul.f32 %v2560, 1.442695
    %v2562 = vpow.pop %v2561
    %v2563 = vadd.f32 %v2562, 1.0
    %v2564 = vrcp.pop %v2563
    %v2565 = vmul.f32 1.0, %v2564
    %v2566 = vtanh.pop %v2400
    %v2567 = vxor.u32 %v2401, 2147483648
    %v2568 = vmul.f32 %v2567, 1.442695
    %v2569 = vpow.pop %v2568
    %v2570 = vadd.f32 %v2569, 1.0
    %v2571 = vrcp.pop %v2570
    %v2572 = vmul.f32 1.0, %v2571
    %v2573 = vmul.f32 %v2565, %v2219
    %v2574 = vmul.f32 %v2559, %v2566
    %v2575 = vadd.f32 %v2573, %v2574
    %v2576 = vtanh.pop %v2575
    %v2577 = vmul.f32 %v2572, %v2576
    %v2578 = vxor.u32 %v2550, 2147483648
    %v2579 = vmul.f32 %v2578, 1.442695
    %v2580 = vpow.pop %v2579
    %v2581 = vadd.f32 %v2580, 1.0
    %v2582 = vrcp.pop %v2581
    %v2583 = vmul.f32 1.0, %v2582
    %v2584 = vxor.u32 %v2551, 2147483648
    %v2585 = vmul.f32 %v2584, 1.442695
    %v2586 = vpow.pop %v2585
    %v2587 = vadd.f32 %v2586, 1.0
    %v2588 = vrcp.pop %v2587
    %v2589 = vmul.f32 1.0, %v2588
    %v2590 = vtanh.pop %v2552
    %v2591 = vxor.u32 %v2553, 2147483648
    %v2592 = vmul.f32 %v2591, 1.442695
    %v2593 = vpow.pop %v2592
    %v2594 = vadd.f32 %v2593, 1.0
    %v2595 = vrcp.pop %v2594
    %v2596 = vmul.f32 1.0, %v2595
    %v2597 = vmul.f32 %v2589, %v2243
    %v2598 = vmul.f32 %v2583, %v2590
    %v2599 = vadd.f32 %v2597, %v2598
    %v2600 = vtanh.pop %v2599
    %v2601 = vmul.f32 %v2596, %v2600
    %s2602 = scalar_lea.vmem [#allocation9], 32
    %2603 = vst [vmem:[%s2602] sm:$0xff] %v2577
    %s2604 = scalar_lea.vmem [#allocation10], 24
    %2605 = vst [vmem:[%s2604] sm:$0xff] %v2601
    %s2606 = smul.addr %s1687, 8
    %s2607 = scalar_lea.vmem [#allocation2], %s2606
    %v2608 = vld [vmem:[%s2607] sm:$0xff]
    %v2609 = vld [vmem:[%s2607 + $0x8] sm:$0xff]
    %v2610 = vld [vmem:[%s2607 + $0x10] sm:$0xff]
    %v2611 = vld [vmem:[%s2607 + $0x18] sm:$0xff]
    %2612 = vmatprep.subr.mxu0 %v752
    %2613 = vmatpush1.msra.mxu0 %v751
    %2614 = vmatprep.subr.mxu0 %v748
    %2615 = vmatpush1.msra.mxu0 %v747
    %2616 = vmatprep.subr.mxu0 %v744
    %2617 = vmatpush1.msra.mxu0 %v743
    %2618 = vmatprep.subr.mxu0 %v740
    %2619 = vmatpush1.msra.mxu0 %v739
    %2620 = vmatprep.subr.mxu0 %v736
    %2621 = vmatpush1.msra.mxu0 %v735
    %2622 = vmatprep.subr.mxu0 %v732
    %2623 = vmatpush1.msra.mxu0 %v731
    %2624 = vmatprep.subr.mxu0 %v728
    %2625 = vmatpush1.msra.mxu0 %v727
    %2626 = vmatprep.subr.mxu0 %v724
    %2627 = vmatpush1.msra.mxu0 %v723
    %2628 = vmatprep.subr.mxu0 %v720
    %2629 = vmatpush1.msra.mxu0 %v719
    %2630 = vmatprep.subr.mxu0 %v716
    %2631 = vmatpush1.msra.mxu0 %v715
    %2632 = vmatprep.subr.mxu0 %v712
    %2633 = vmatpush1.msra.mxu0 %v711
    %2634 = vmatprep.subr.mxu0 %v708
    %2635 = vmatpush1.msra.mxu0 %v707
    %2636 = vmatprep.subr.mxu0 %v704
    %2637 = vmatpush1.msra.mxu0 %v703
    %2638 = vmatprep.subr.mxu0 %v700
    %2639 = vmatpush1.msra.mxu0 %v699
    %2640 = vmatprep.subr.mxu0 %v696
    %2641 = vmatpush1.msra.mxu0 %v695
    %2642 = vmatprep.subr.mxu0 %v692
    %2643 = vmatpush1.msra.mxu0 %v691
    %2644 = vmatprep.subr.mxu0 0.0
    %2645 = vmatpush2.msra.mxu0 0.0
    %2646 = vmatprep.subr.mxu0 0.0
    %2647 = vmatpush2.msra.mxu0 0.0
    %2648 = vmatprep.subr.mxu0 0.0
    %2649 = vmatpush2.msra.mxu0 0.0
    %2650 = vmatprep.subr.mxu0 0.0
    %2651 = vmatpush2.msra.mxu0 0.0
    %2652 = vmatprep.subr.mxu0 0.0
    %2653 = vmatpush2.msra.mxu0 0.0
    %2654 = vmatprep.subr.mxu0 0.0
    %2655 = vmatpush2.msra.mxu0 0.0
    %2656 = vmatprep.subr.mxu0 0.0
    %2657 = vmatpush2.msra.mxu0 0.0
    %2658 = vmatprep.subr.mxu0 0.0
    %2659 = vmatpush2.msra.mxu0 0.0
    %2660 = vmatprep.subr.mxu0 0.0
    %2661 = vmatpush2.msra.mxu0 0.0
    %2662 = vmatprep.subr.mxu0 0.0
    %2663 = vmatpush2.msra.mxu0 0.0
    %2664 = vmatprep.subr.mxu0 0.0
    %2665 = vmatpush2.msra.mxu0 0.0
    %2666 = vmatprep.subr.mxu0 0.0
    %2667 = vmatpush2.msra.mxu0 0.0
    %2668 = vmatprep.subr.mxu0 0.0
    %2669 = vmatpush2.msra.mxu0 0.0
    %2670 = vmatprep.subr.mxu0 0.0
    %2671 = vmatpush2.msra.mxu0 0.0
    %2672 = vmatprep.subr.mxu0 0.0
    %2673 = vmatpush2.msra.mxu0 0.0
    %2674 = vmatprep.subr.mxu0 0.0
    %2675 = vmatpush2.msra.mxu0 0.0
    %2676 = vmatprep.mubr.f32.mxu0 0.0
    %2677 = vmatmul.mubr.f32.gmra.mxu0 %v2577
    %v2678 = vpop.f32.mrf.mxu0
    %v2679 = vadd.f32 0.0, %v2678
    %v2680 = vpop.f32.mrf.mxu0
    %v2681 = vadd.f32 0.0, %v2680
    %2682 = vdwg.mxu0
    %2683 = vmatprep.subr.mxu0 %v754
    %2684 = vmatpush1.msra.mxu0 %v753
    %2685 = vmatprep.subr.mxu0 %v750
    %2686 = vmatpush1.msra.mxu0 %v749
    %2687 = vmatprep.subr.mxu0 %v746
    %2688 = vmatpush1.msra.mxu0 %v745
    %2689 = vmatprep.subr.mxu0 %v742
    %2690 = vmatpush1.msra.mxu0 %v741
    %2691 = vmatprep.subr.mxu0 %v738
    %2692 = vmatpush1.msra.mxu0 %v737
    %2693 = vmatprep.subr.mxu0 %v734
    %2694 = vmatpush1.msra.mxu0 %v733
    %2695 = vmatprep.subr.mxu0 %v730
    %2696 = vmatpush1.msra.mxu0 %v729
    %2697 = vmatprep.subr.mxu0 %v726
    %2698 = vmatpush1.msra.mxu0 %v725
    %2699 = vmatprep.subr.mxu0 %v722
    %2700 = vmatpush1.msra.mxu0 %v721
    %2701 = vmatprep.subr.mxu0 %v718
    %2702 = vmatpush1.msra.mxu0 %v717
    %2703 = vmatprep.subr.mxu0 %v714
    %2704 = vmatpush1.msra.mxu0 %v713
    %2705 = vmatprep.subr.mxu0 %v710
    %2706 = vmatpush1.msra.mxu0 %v709
    %2707 = vmatprep.subr.mxu0 %v706
    %2708 = vmatpush1.msra.mxu0 %v705
    %2709 = vmatprep.subr.mxu0 %v702
    %2710 = vmatpush1.msra.mxu0 %v701
    %2711 = vmatprep.subr.mxu0 %v698
    %2712 = vmatpush1.msra.mxu0 %v697
    %2713 = vmatprep.subr.mxu0 %v694
    %2714 = vmatpush1.msra.mxu0 %v693
    %2715 = vmatprep.subr.mxu0 0.0
    %2716 = vmatpush2.msra.mxu0 0.0
    %2717 = vmatprep.subr.mxu0 0.0
    %2718 = vmatpush2.msra.mxu0 0.0
    %2719 = vmatprep.subr.mxu0 0.0
    %2720 = vmatpush2.msra.mxu0 0.0
    %2721 = vmatprep.subr.mxu0 0.0
    %2722 = vmatpush2.msra.mxu0 0.0
    %2723 = vmatprep.subr.mxu0 0.0
    %2724 = vmatpush2.msra.mxu0 0.0
    %2725 = vmatprep.subr.mxu0 0.0
    %2726 = vmatpush2.msra.mxu0 0.0
    %2727 = vmatprep.subr.mxu0 0.0
    %2728 = vmatpush2.msra.mxu0 0.0
    %2729 = vmatprep.subr.mxu0 0.0
    %2730 = vmatpush2.msra.mxu0 0.0
    %2731 = vmatprep.subr.mxu0 0.0
    %2732 = vmatpush2.msra.mxu0 0.0
    %2733 = vmatprep.subr.mxu0 0.0
    %2734 = vmatpush2.msra.mxu0 0.0
    %2735 = vmatprep.subr.mxu0 0.0
    %2736 = vmatpush2.msra.mxu0 0.0
    %2737 = vmatprep.subr.mxu0 0.0
    %2738 = vmatpush2.msra.mxu0 0.0
    %2739 = vmatprep.subr.mxu0 0.0
    %2740 = vmatpush2.msra.mxu0 0.0
    %2741 = vmatprep.subr.mxu0 0.0
    %2742 = vmatpush2.msra.mxu0 0.0
    %2743 = vmatprep.subr.mxu0 0.0
    %2744 = vmatpush2.msra.mxu0 0.0
    %2745 = vmatprep.subr.mxu0 0.0
    %2746 = vmatpush2.msra.mxu0 0.0
    %2747 = vmatprep.mubr.f32.mxu0 0.0
    %2748 = vmatmul.mubr.f32.gmra.mxu0 %v2577
    %v2749 = vpop.f32.mrf.mxu0
    %v2750 = vadd.f32 0.0, %v2749
    %v2751 = vpop.f32.mrf.mxu0
    %v2752 = vadd.f32 0.0, %v2751
    %2753 = vdwg.mxu0
    %v2754 = vadd.f32 %v2608, %v2679
    %v2755 = vadd.f32 %v2609, %v2681
    %v2756 = vadd.f32 %v2610, %v2750
    %v2757 = vadd.f32 %v2611, %v2752
    %s2758 = smul.addr %s1534, 8
    %s2759 = scalar_lea.vmem [#allocation3], %s2758
    %v2760 = vld [vmem:[%s2759] sm:$0xff]
    %v2761 = vld [vmem:[%s2759 + $0x8] sm:$0xff]
    %v2762 = vld [vmem:[%s2759 + $0x10] sm:$0xff]
    %v2763 = vld [vmem:[%s2759 + $0x18] sm:$0xff]
    %2764 = vmatprep.subr.mxu0 %v816
    %2765 = vmatpush1.msra.mxu0 %v815
    %2766 = vmatprep.subr.mxu0 %v812
    %2767 = vmatpush1.msra.mxu0 %v811
    %2768 = vmatprep.subr.mxu0 %v808
    %2769 = vmatpush1.msra.mxu0 %v807
    %2770 = vmatprep.subr.mxu0 %v804
    %2771 = vmatpush1.msra.mxu0 %v803
    %2772 = vmatprep.subr.mxu0 %v800
    %2773 = vmatpush1.msra.mxu0 %v799
    %2774 = vmatprep.subr.mxu0 %v796
    %2775 = vmatpush1.msra.mxu0 %v795
    %2776 = vmatprep.subr.mxu0 %v792
    %2777 = vmatpush1.msra.mxu0 %v791
    %2778 = vmatprep.subr.mxu0 %v788
    %2779 = vmatpush1.msra.mxu0 %v787
    %2780 = vmatprep.subr.mxu0 %v784
    %2781 = vmatpush1.msra.mxu0 %v783
    %2782 = vmatprep.subr.mxu0 %v780
    %2783 = vmatpush1.msra.mxu0 %v779
    %2784 = vmatprep.subr.mxu0 %v776
    %2785 = vmatpush1.msra.mxu0 %v775
    %2786 = vmatprep.subr.mxu0 %v772
    %2787 = vmatpush1.msra.mxu0 %v771
    %2788 = vmatprep.subr.mxu0 %v768
    %2789 = vmatpush1.msra.mxu0 %v767
    %2790 = vmatprep.subr.mxu0 %v764
    %2791 = vmatpush1.msra.mxu0 %v763
    %2792 = vmatprep.subr.mxu0 %v760
    %2793 = vmatpush1.msra.mxu0 %v759
    %2794 = vmatprep.subr.mxu0 %v756
    %2795 = vmatpush1.msra.mxu0 %v755
    %2796 = vmatprep.subr.mxu0 0.0
    %2797 = vmatpush2.msra.mxu0 0.0
    %2798 = vmatprep.subr.mxu0 0.0
    %2799 = vmatpush2.msra.mxu0 0.0
    %2800 = vmatprep.subr.mxu0 0.0
    %2801 = vmatpush2.msra.mxu0 0.0
    %2802 = vmatprep.subr.mxu0 0.0
    %2803 = vmatpush2.msra.mxu0 0.0
    %2804 = vmatprep.subr.mxu0 0.0
    %2805 = vmatpush2.msra.mxu0 0.0
    %2806 = vmatprep.subr.mxu0 0.0
    %2807 = vmatpush2.msra.mxu0 0.0
    %2808 = vmatprep.subr.mxu0 0.0
    %2809 = vmatpush2.msra.mxu0 0.0
    %2810 = vmatprep.subr.mxu0 0.0
    %2811 = vmatpush2.msra.mxu0 0.0
    %2812 = vmatprep.subr.mxu0 0.0
    %2813 = vmatpush2.msra.mxu0 0.0
    %2814 = vmatprep.subr.mxu0 0.0
    %2815 = vmatpush2.msra.mxu0 0.0
    %2816 = vmatprep.subr.mxu0 0.0
    %2817 = vmatpush2.msra.mxu0 0.0
    %2818 = vmatprep.subr.mxu0 0.0
    %2819 = vmatpush2.msra.mxu0 0.0
    %2820 = vmatprep.subr.mxu0 0.0
    %2821 = vmatpush2.msra.mxu0 0.0
    %2822 = vmatprep.subr.mxu0 0.0
    %2823 = vmatpush2.msra.mxu0 0.0
    %2824 = vmatprep.subr.mxu0 0.0
    %2825 = vmatpush2.msra.mxu0 0.0
    %2826 = vmatprep.subr.mxu0 0.0
    %2827 = vmatpush2.msra.mxu0 0.0
    %2828 = vmatprep.mubr.f32.mxu0 0.0
    %2829 = vmatmul.mubr.f32.gmra.mxu0 %v2601
    %v2830 = vpop.f32.mrf.mxu0
    %v2831 = vadd.f32 0.0, %v2830
    %v2832 = vpop.f32.mrf.mxu0
    %v2833 = vadd.f32 0.0, %v2832
    %2834 = vdwg.mxu0
    %2835 = vmatprep.subr.mxu0 %v818
    %2836 = vmatpush1.msra.mxu0 %v817
    %2837 = vmatprep.subr.mxu0 %v814
    %2838 = vmatpush1.msra.mxu0 %v813
    %2839 = vmatprep.subr.mxu0 %v810
    %2840 = vmatpush1.msra.mxu0 %v809
    %2841 = vmatprep.subr.mxu0 %v806
    %2842 = vmatpush1.msra.mxu0 %v805
    %2843 = vmatprep.subr.mxu0 %v802
    %2844 = vmatpush1.msra.mxu0 %v801
    %2845 = vmatprep.subr.mxu0 %v798
    %2846 = vmatpush1.msra.mxu0 %v797
    %2847 = vmatprep.subr.mxu0 %v794
    %2848 = vmatpush1.msra.mxu0 %v793
    %2849 = vmatprep.subr.mxu0 %v790
    %2850 = vmatpush1.msra.mxu0 %v789
    %2851 = vmatprep.subr.mxu0 %v786
    %2852 = vmatpush1.msra.mxu0 %v785
    %2853 = vmatprep.subr.mxu0 %v782
    %2854 = vmatpush1.msra.mxu0 %v781
    %2855 = vmatprep.subr.mxu0 %v778
    %2856 = vmatpush1.msra.mxu0 %v777
    %2857 = vmatprep.subr.mxu0 %v774
    %2858 = vmatpush1.msra.mxu0 %v773
    %2859 = vmatprep.subr.mxu0 %v770
    %2860 = vmatpush1.msra.mxu0 %v769
    %2861 = vmatprep.subr.mxu0 %v766
    %2862 = vmatpush1.msra.mxu0 %v765
    %2863 = vmatprep.subr.mxu0 %v762
    %2864 = vmatpush1.msra.mxu0 %v761
    %2865 = vmatprep.subr.mxu0 %v758
    %2866 = vmatpush1.msra.mxu0 %v757
    %2867 = vmatprep.subr.mxu0 0.0
    %2868 = vmatpush2.msra.mxu0 0.0
    %2869 = vmatprep.subr.mxu0 0.0
    %2870 = vmatpush2.msra.mxu0 0.0
    %2871 = vmatprep.subr.mxu0 0.0
    %2872 = vmatpush2.msra.mxu0 0.0
    %2873 = vmatprep.subr.mxu0 0.0
    %2874 = vmatpush2.msra.mxu0 0.0
    %2875 = vmatprep.subr.mxu0 0.0
    %2876 = vmatpush2.msra.mxu0 0.0
    %2877 = vmatprep.subr.mxu0 0.0
    %2878 = vmatpush2.msra.mxu0 0.0
    %2879 = vmatprep.subr.mxu0 0.0
    %2880 = vmatpush2.msra.mxu0 0.0
    %2881 = vmatprep.subr.mxu0 0.0
    %2882 = vmatpush2.msra.mxu0 0.0
    %2883 = vmatprep.subr.mxu0 0.0
    %2884 = vmatpush2.msra.mxu0 0.0
    %2885 = vmatprep.subr.mxu0 0.0
    %2886 = vmatpush2.msra.mxu0 0.0
    %2887 = vmatprep.subr.mxu0 0.0
    %2888 = vmatpush2.msra.mxu0 0.0
    %2889 = vmatprep.subr.mxu0 0.0
    %2890 = vmatpush2.msra.mxu0 0.0
    %2891 = vmatprep.subr.mxu0 0.0
    %2892 = vmatpush2.msra.mxu0 0.0
    %2893 = vmatprep.subr.mxu0 0.0
    %2894 = vmatpush2.msra.mxu0 0.0
    %2895 = vmatprep.subr.mxu0 0.0
    %2896 = vmatpush2.msra.mxu0 0.0
    %2897 = vmatprep.subr.mxu0 0.0
    %2898 = vmatpush2.msra.mxu0 0.0
    %2899 = vmatprep.mubr.f32.mxu0 0.0
    %2900 = vmatmul.mubr.f32.gmra.mxu0 %v2601
    %v2901 = vpop.f32.mrf.mxu0
    %v2902 = vadd.f32 0.0, %v2901
    %v2903 = vpop.f32.mrf.mxu0
    %v2904 = vadd.f32 0.0, %v2903
    %2905 = vdwg.mxu0
    %v2906 = vadd.f32 %v2760, %v2831
    %v2907 = vadd.f32 %v2761, %v2833
    %v2908 = vadd.f32 %v2762, %v2902
    %v2909 = vadd.f32 %v2763, %v2904
    %v2910 = vxor.u32 %v2754, 2147483648
    %v2911 = vmul.f32 %v2910, 1.442695
    %v2912 = vpow.pop %v2911
    %v2913 = vadd.f32 %v2912, 1.0
    %v2914 = vrcp.pop %v2913
    %v2915 = vmul.f32 1.0, %v2914
    %v2916 = vxor.u32 %v2755, 2147483648
    %v2917 = vmul.f32 %v2916, 1.442695
    %v2918 = vpow.pop %v2917
    %v2919 = vadd.f32 %v2918, 1.0
    %v2920 = vrcp.pop %v2919
    %v2921 = vmul.f32 1.0, %v2920
    %v2922 = vtanh.pop %v2756
    %v2923 = vxor.u32 %v2757, 2147483648
    %v2924 = vmul.f32 %v2923, 1.442695
    %v2925 = vpow.pop %v2924
    %v2926 = vadd.f32 %v2925, 1.0
    %v2927 = vrcp.pop %v2926
    %v2928 = vmul.f32 1.0, %v2927
    %v2929 = vmul.f32 %v2921, %v2575
    %v2930 = vmul.f32 %v2915, %v2922
    %v2931 = vadd.f32 %v2929, %v2930
    %v2932 = vtanh.pop %v2931
    %v2933 = vmul.f32 %v2928, %v2932
    %v2934 = vxor.u32 %v2906, 2147483648
    %v2935 = vmul.f32 %v2934, 1.442695
    %v2936 = vpow.pop %v2935
    %v2937 = vadd.f32 %v2936, 1.0
    %v2938 = vrcp.pop %v2937
    %v2939 = vmul.f32 1.0, %v2938
    %v2940 = vxor.u32 %v2907, 2147483648
    %v2941 = vmul.f32 %v2940, 1.442695
    %v2942 = vpow.pop %v2941
    %v2943 = vadd.f32 %v2942, 1.0
    %v2944 = vrcp.pop %v2943
    %v2945 = vmul.f32 1.0, %v2944
    %v2946 = vtanh.pop %v2908
    %v2947 = vxor.u32 %v2909, 2147483648
    %v2948 = vmul.f32 %v2947, 1.442695
    %v2949 = vpow.pop %v2948
    %v2950 = vadd.f32 %v2949, 1.0
    %v2951 = vrcp.pop %v2950
    %v2952 = vmul.f32 1.0, %v2951
    %v2953 = vmul.f32 %v2945, %v2599
    %v2954 = vmul.f32 %v2939, %v2946
    %v2955 = vadd.f32 %v2953, %v2954
    %v2956 = vtanh.pop %v2955
    %v2957 = vmul.f32 %v2952, %v2956
    %s2958 = scalar_lea.vmem [#allocation9], 40
    %2959 = vst [vmem:[%s2958] sm:$0xff] %v2933
    %s2960 = scalar_lea.vmem [#allocation10], 16
    %2961 = vst [vmem:[%s2960] sm:$0xff] %v2957
    %s2962 = smul.addr %s1329, 8
    %s2963 = scalar_lea.vmem [#allocation2], %s2962
    %v2964 = vld [vmem:[%s2963] sm:$0xff]
    %v2965 = vld [vmem:[%s2963 + $0x8] sm:$0xff]
    %v2966 = vld [vmem:[%s2963 + $0x10] sm:$0xff]
    %v2967 = vld [vmem:[%s2963 + $0x18] sm:$0xff]
    %2968 = vmatprep.subr.mxu0 %v752
    %2969 = vmatpush1.msra.mxu0 %v751
    %2970 = vmatprep.subr.mxu0 %v748
    %2971 = vmatpush1.msra.mxu0 %v747
    %2972 = vmatprep.subr.mxu0 %v744
    %2973 = vmatpush1.msra.mxu0 %v743
    %2974 = vmatprep.subr.mxu0 %v740
    %2975 = vmatpush1.msra.mxu0 %v739
    %2976 = vmatprep.subr.mxu0 %v736
    %2977 = vmatpush1.msra.mxu0 %v735
    %2978 = vmatprep.subr.mxu0 %v732
    %2979 = vmatpush1.msra.mxu0 %v731
    %2980 = vmatprep.subr.mxu0 %v728
    %2981 = vmatpush1.msra.mxu0 %v727
    %2982 = vmatprep.subr.mxu0 %v724
    %2983 = vmatpush1.msra.mxu0 %v723
    %2984 = vmatprep.subr.mxu0 %v720
    %2985 = vmatpush1.msra.mxu0 %v719
    %2986 = vmatprep.subr.mxu0 %v716
    %2987 = vmatpush1.msra.mxu0 %v715
    %2988 = vmatprep.subr.mxu0 %v712
    %2989 = vmatpush1.msra.mxu0 %v711
    %2990 = vmatprep.subr.mxu0 %v708
    %2991 = vmatpush1.msra.mxu0 %v707
    %2992 = vmatprep.subr.mxu0 %v704
    %2993 = vmatpush1.msra.mxu0 %v703
    %2994 = vmatprep.subr.mxu0 %v700
    %2995 = vmatpush1.msra.mxu0 %v699
    %2996 = vmatprep.subr.mxu0 %v696
    %2997 = vmatpush1.msra.mxu0 %v695
    %2998 = vmatprep.subr.mxu0 %v692
    %2999 = vmatpush1.msra.mxu0 %v691
    %3000 = vmatprep.subr.mxu0 0.0
    %3001 = vmatpush2.msra.mxu0 0.0
    %3002 = vmatprep.subr.mxu0 0.0
    %3003 = vmatpush2.msra.mxu0 0.0
    %3004 = vmatprep.subr.mxu0 0.0
    %3005 = vmatpush2.msra.mxu0 0.0
    %3006 = vmatprep.subr.mxu0 0.0
    %3007 = vmatpush2.msra.mxu0 0.0
    %3008 = vmatprep.subr.mxu0 0.0
    %3009 = vmatpush2.msra.mxu0 0.0
    %3010 = vmatprep.subr.mxu0 0.0
    %3011 = vmatpush2.msra.mxu0 0.0
    %3012 = vmatprep.subr.mxu0 0.0
    %3013 = vmatpush2.msra.mxu0 0.0
    %3014 = vmatprep.subr.mxu0 0.0
    %3015 = vmatpush2.msra.mxu0 0.0
    %3016 = vmatprep.subr.mxu0 0.0
    %3017 = vmatpush2.msra.mxu0 0.0
    %3018 = vmatprep.subr.mxu0 0.0
    %3019 = vmatpush2.msra.mxu0 0.0
    %3020 = vmatprep.subr.mxu0 0.0
    %3021 = vmatpush2.msra.mxu0 0.0
    %3022 = vmatprep.subr.mxu0 0.0
    %3023 = vmatpush2.msra.mxu0 0.0
    %3024 = vmatprep.subr.mxu0 0.0
    %3025 = vmatpush2.msra.mxu0 0.0
    %3026 = vmatprep.subr.mxu0 0.0
    %3027 = vmatpush2.msra.mxu0 0.0
    %3028 = vmatprep.subr.mxu0 0.0
    %3029 = vmatpush2.msra.mxu0 0.0
    %3030 = vmatprep.subr.mxu0 0.0
    %3031 = vmatpush2.msra.mxu0 0.0
    %3032 = vmatprep.mubr.f32.mxu0 0.0
    %3033 = vmatmul.mubr.f32.gmra.mxu0 %v2933
    %v3034 = vpop.f32.mrf.mxu0
    %v3035 = vadd.f32 0.0, %v3034
    %v3036 = vpop.f32.mrf.mxu0
    %v3037 = vadd.f32 0.0, %v3036
    %3038 = vdwg.mxu0
    %3039 = vmatprep.subr.mxu0 %v754
    %3040 = vmatpush1.msra.mxu0 %v753
    %3041 = vmatprep.subr.mxu0 %v750
    %3042 = vmatpush1.msra.mxu0 %v749
    %3043 = vmatprep.subr.mxu0 %v746
    %3044 = vmatpush1.msra.mxu0 %v745
    %3045 = vmatprep.subr.mxu0 %v742
    %3046 = vmatpush1.msra.mxu0 %v741
    %3047 = vmatprep.subr.mxu0 %v738
    %3048 = vmatpush1.msra.mxu0 %v737
    %3049 = vmatprep.subr.mxu0 %v734
    %3050 = vmatpush1.msra.mxu0 %v733
    %3051 = vmatprep.subr.mxu0 %v730
    %3052 = vmatpush1.msra.mxu0 %v729
    %3053 = vmatprep.subr.mxu0 %v726
    %3054 = vmatpush1.msra.mxu0 %v725
    %3055 = vmatprep.subr.mxu0 %v722
    %3056 = vmatpush1.msra.mxu0 %v721
    %3057 = vmatprep.subr.mxu0 %v718
    %3058 = vmatpush1.msra.mxu0 %v717
    %3059 = vmatprep.subr.mxu0 %v714
    %3060 = vmatpush1.msra.mxu0 %v713
    %3061 = vmatprep.subr.mxu0 %v710
    %3062 = vmatpush1.msra.mxu0 %v709
    %3063 = vmatprep.subr.mxu0 %v706
    %3064 = vmatpush1.msra.mxu0 %v705
    %3065 = vmatprep.subr.mxu0 %v702
    %3066 = vmatpush1.msra.mxu0 %v701
    %3067 = vmatprep.subr.mxu0 %v698
    %3068 = vmatpush1.msra.mxu0 %v697
    %3069 = vmatprep.subr.mxu0 %v694
    %3070 = vmatpush1.msra.mxu0 %v693
    %3071 = vmatprep.subr.mxu0 0.0
    %3072 = vmatpush2.msra.mxu0 0.0
    %3073 = vmatprep.subr.mxu0 0.0
    %3074 = vmatpush2.msra.mxu0 0.0
    %3075 = vmatprep.subr.mxu0 0.0
    %3076 = vmatpush2.msra.mxu0 0.0
    %3077 = vmatprep.subr.mxu0 0.0
    %3078 = vmatpush2.msra.mxu0 0.0
    %3079 = vmatprep.subr.mxu0 0.0
    %3080 = vmatpush2.msra.mxu0 0.0
    %3081 = vmatprep.subr.mxu0 0.0
    %3082 = vmatpush2.msra.mxu0 0.0
    %3083 = vmatprep.subr.mxu0 0.0
    %3084 = vmatpush2.msra.mxu0 0.0
    %3085 = vmatprep.subr.mxu0 0.0
    %3086 = vmatpush2.msra.mxu0 0.0
    %3087 = vmatprep.subr.mxu0 0.0
    %3088 = vmatpush2.msra.mxu0 0.0
    %3089 = vmatprep.subr.mxu0 0.0
    %3090 = vmatpush2.msra.mxu0 0.0
    %3091 = vmatprep.subr.mxu0 0.0
    %3092 = vmatpush2.msra.mxu0 0.0
    %3093 = vmatprep.subr.mxu0 0.0
    %3094 = vmatpush2.msra.mxu0 0.0
    %3095 = vmatprep.subr.mxu0 0.0
    %3096 = vmatpush2.msra.mxu0 0.0
    %3097 = vmatprep.subr.mxu0 0.0
    %3098 = vmatpush2.msra.mxu0 0.0
    %3099 = vmatprep.subr.mxu0 0.0
    %3100 = vmatpush2.msra.mxu0 0.0
    %3101 = vmatprep.subr.mxu0 0.0
    %3102 = vmatpush2.msra.mxu0 0.0
    %3103 = vmatprep.mubr.f32.mxu0 0.0
    %3104 = vmatmul.mubr.f32.gmra.mxu0 %v2933
    %v3105 = vpop.f32.mrf.mxu0
    %v3106 = vadd.f32 0.0, %v3105
    %v3107 = vpop.f32.mrf.mxu0
    %v3108 = vadd.f32 0.0, %v3107
    %3109 = vdwg.mxu0
    %v3110 = vadd.f32 %v2964, %v3035
    %v3111 = vadd.f32 %v2965, %v3037
    %v3112 = vadd.f32 %v2966, %v3106
    %v3113 = vadd.f32 %v2967, %v3108
    %s3114 = smul.addr %s1176, 8
    %s3115 = scalar_lea.vmem [#allocation3], %s3114
    %v3116 = vld [vmem:[%s3115] sm:$0xff]
    %v3117 = vld [vmem:[%s3115 + $0x8] sm:$0xff]
    %v3118 = vld [vmem:[%s3115 + $0x10] sm:$0xff]
    %v3119 = vld [vmem:[%s3115 + $0x18] sm:$0xff]
    %3120 = vmatprep.subr.mxu0 %v816
    %3121 = vmatpush1.msra.mxu0 %v815
    %3122 = vmatprep.subr.mxu0 %v812
    %3123 = vmatpush1.msra.mxu0 %v811
    %3124 = vmatprep.subr.mxu0 %v808
    %3125 = vmatpush1.msra.mxu0 %v807
    %3126 = vmatprep.subr.mxu0 %v804
    %3127 = vmatpush1.msra.mxu0 %v803
    %3128 = vmatprep.subr.mxu0 %v800
    %3129 = vmatpush1.msra.mxu0 %v799
    %3130 = vmatprep.subr.mxu0 %v796
    %3131 = vmatpush1.msra.mxu0 %v795
    %3132 = vmatprep.subr.mxu0 %v792
    %3133 = vmatpush1.msra.mxu0 %v791
    %3134 = vmatprep.subr.mxu0 %v788
    %3135 = vmatpush1.msra.mxu0 %v787
    %3136 = vmatprep.subr.mxu0 %v784
    %3137 = vmatpush1.msra.mxu0 %v783
    %3138 = vmatprep.subr.mxu0 %v780
    %3139 = vmatpush1.msra.mxu0 %v779
    %3140 = vmatprep.subr.mxu0 %v776
    %3141 = vmatpush1.msra.mxu0 %v775
    %3142 = vmatprep.subr.mxu0 %v772
    %3143 = vmatpush1.msra.mxu0 %v771
    %3144 = vmatprep.subr.mxu0 %v768
    %3145 = vmatpush1.msra.mxu0 %v767
    %3146 = vmatprep.subr.mxu0 %v764
    %3147 = vmatpush1.msra.mxu0 %v763
    %3148 = vmatprep.subr.mxu0 %v760
    %3149 = vmatpush1.msra.mxu0 %v759
    %3150 = vmatprep.subr.mxu0 %v756
    %3151 = vmatpush1.msra.mxu0 %v755
    %3152 = vmatprep.subr.mxu0 0.0
    %3153 = vmatpush2.msra.mxu0 0.0
    %3154 = vmatprep.subr.mxu0 0.0
    %3155 = vmatpush2.msra.mxu0 0.0
    %3156 = vmatprep.subr.mxu0 0.0
    %3157 = vmatpush2.msra.mxu0 0.0
    %3158 = vmatprep.subr.mxu0 0.0
    %3159 = vmatpush2.msra.mxu0 0.0
    %3160 = vmatprep.subr.mxu0 0.0
    %3161 = vmatpush2.msra.mxu0 0.0
    %3162 = vmatprep.subr.mxu0 0.0
    %3163 = vmatpush2.msra.mxu0 0.0
    %3164 = vmatprep.subr.mxu0 0.0
    %3165 = vmatpush2.msra.mxu0 0.0
    %3166 = vmatprep.subr.mxu0 0.0
    %3167 = vmatpush2.msra.mxu0 0.0
    %3168 = vmatprep.subr.mxu0 0.0
    %3169 = vmatpush2.msra.mxu0 0.0
    %3170 = vmatprep.subr.mxu0 0.0
    %3171 = vmatpush2.msra.mxu0 0.0
    %3172 = vmatprep.subr.mxu0 0.0
    %3173 = vmatpush2.msra.mxu0 0.0
    %3174 = vmatprep.subr.mxu0 0.0
    %3175 = vmatpush2.msra.mxu0 0.0
    %3176 = vmatprep.subr.mxu0 0.0
    %3177 = vmatpush2.msra.mxu0 0.0
    %3178 = vmatprep.subr.mxu0 0.0
    %3179 = vmatpush2.msra.mxu0 0.0
    %3180 = vmatprep.subr.mxu0 0.0
    %3181 = vmatpush2.msra.mxu0 0.0
    %3182 = vmatprep.subr.mxu0 0.0
    %3183 = vmatpush2.msra.mxu0 0.0
    %3184 = vmatprep.mubr.f32.mxu0 0.0
    %3185 = vmatmul.mubr.f32.gmra.mxu0 %v2957
    %v3186 = vpop.f32.mrf.mxu0
    %v3187 = vadd.f32 0.0, %v3186
    %v3188 = vpop.f32.mrf.mxu0
    %v3189 = vadd.f32 0.0, %v3188
    %3190 = vdwg.mxu0
    %3191 = vmatprep.subr.mxu0 %v818
    %3192 = vmatpush1.msra.mxu0 %v817
    %3193 = vmatprep.subr.mxu0 %v814
    %3194 = vmatpush1.msra.mxu0 %v813
    %3195 = vmatprep.subr.mxu0 %v810
    %3196 = vmatpush1.msra.mxu0 %v809
    %3197 = vmatprep.subr.mxu0 %v806
    %3198 = vmatpush1.msra.mxu0 %v805
    %3199 = vmatprep.subr.mxu0 %v802
    %3200 = vmatpush1.msra.mxu0 %v801
    %3201 = vmatprep.subr.mxu0 %v798
    %3202 = vmatpush1.msra.mxu0 %v797
    %3203 = vmatprep.subr.mxu0 %v794
    %3204 = vmatpush1.msra.mxu0 %v793
    %3205 = vmatprep.subr.mxu0 %v790
    %3206 = vmatpush1.msra.mxu0 %v789
    %3207 = vmatprep.subr.mxu0 %v786
    %3208 = vmatpush1.msra.mxu0 %v785
    %3209 = vmatprep.subr.mxu0 %v782
    %3210 = vmatpush1.msra.mxu0 %v781
    %3211 = vmatprep.subr.mxu0 %v778
    %3212 = vmatpush1.msra.mxu0 %v777
    %3213 = vmatprep.subr.mxu0 %v774
    %3214 = vmatpush1.msra.mxu0 %v773
    %3215 = vmatprep.subr.mxu0 %v770
    %3216 = vmatpush1.msra.mxu0 %v769
    %3217 = vmatprep.subr.mxu0 %v766
    %3218 = vmatpush1.msra.mxu0 %v765
    %3219 = vmatprep.subr.mxu0 %v762
    %3220 = vmatpush1.msra.mxu0 %v761
    %3221 = vmatprep.subr.mxu0 %v758
    %3222 = vmatpush1.msra.mxu0 %v757
    %3223 = vmatprep.subr.mxu0 0.0
    %3224 = vmatpush2.msra.mxu0 0.0
    %3225 = vmatprep.subr.mxu0 0.0
    %3226 = vmatpush2.msra.mxu0 0.0
    %3227 = vmatprep.subr.mxu0 0.0
    %3228 = vmatpush2.msra.mxu0 0.0
    %3229 = vmatprep.subr.mxu0 0.0
    %3230 = vmatpush2.msra.mxu0 0.0
    %3231 = vmatprep.subr.mxu0 0.0
    %3232 = vmatpush2.msra.mxu0 0.0
    %3233 = vmatprep.subr.mxu0 0.0
    %3234 = vmatpush2.msra.mxu0 0.0
    %3235 = vmatprep.subr.mxu0 0.0
    %3236 = vmatpush2.msra.mxu0 0.0
    %3237 = vmatprep.subr.mxu0 0.0
    %3238 = vmatpush2.msra.mxu0 0.0
    %3239 = vmatprep.subr.mxu0 0.0
    %3240 = vmatpush2.msra.mxu0 0.0
    %3241 = vmatprep.subr.mxu0 0.0
    %3242 = vmatpush2.msra.mxu0 0.0
    %3243 = vmatprep.subr.mxu0 0.0
    %3244 = vmatpush2.msra.mxu0 0.0
    %3245 = vmatprep.subr.mxu0 0.0
    %3246 = vmatpush2.msra.mxu0 0.0
    %3247 = vmatprep.subr.mxu0 0.0
    %3248 = vmatpush2.msra.mxu0 0.0
    %3249 = vmatprep.subr.mxu0 0.0
    %3250 = vmatpush2.msra.mxu0 0.0
    %3251 = vmatprep.subr.mxu0 0.0
    %3252 = vmatpush2.msra.mxu0 0.0
    %3253 = vmatprep.subr.mxu0 0.0
    %3254 = vmatpush2.msra.mxu0 0.0
    %3255 = vmatprep.mubr.f32.mxu0 0.0
    %3256 = vmatmul.mubr.f32.gmra.mxu0 %v2957
    %v3257 = vpop.f32.mrf.mxu0
    %v3258 = vadd.f32 0.0, %v3257
    %v3259 = vpop.f32.mrf.mxu0
    %v3260 = vadd.f32 0.0, %v3259
    %3261 = vdwg.mxu0
    %v3262 = vadd.f32 %v3116, %v3187
    %v3263 = vadd.f32 %v3117, %v3189
    %v3264 = vadd.f32 %v3118, %v3258
    %v3265 = vadd.f32 %v3119, %v3260
    %v3266 = vxor.u32 %v3110, 2147483648
    %v3267 = vmul.f32 %v3266, 1.442695
    %v3268 = vpow.pop %v3267
    %v3269 = vadd.f32 %v3268, 1.0
    %v3270 = vrcp.pop %v3269
    %v3271 = vmul.f32 1.0, %v3270
    %v3272 = vxor.u32 %v3111, 2147483648
    %v3273 = vmul.f32 %v3272, 1.442695
    %v3274 = vpow.pop %v3273
    %v3275 = vadd.f32 %v3274, 1.0
    %v3276 = vrcp.pop %v3275
    %v3277 = vmul.f32 1.0, %v3276
    %v3278 = vtanh.pop %v3112
    %v3279 = vxor.u32 %v3113, 2147483648
    %v3280 = vmul.f32 %v3279, 1.442695
    %v3281 = vpow.pop %v3280
    %v3282 = vadd.f32 %v3281, 1.0
    %v3283 = vrcp.pop %v3282
    %v3284 = vmul.f32 1.0, %v3283
    %v3285 = vmul.f32 %v3277, %v2931
    %v3286 = vmul.f32 %v3271, %v3278
    %v3287 = vadd.f32 %v3285, %v3286
    %v3288 = vtanh.pop %v3287
    %v3289 = vmul.f32 %v3284, %v3288
    %v3290 = vxor.u32 %v3262, 2147483648
    %v3291 = vmul.f32 %v3290, 1.442695
    %v3292 = vpow.pop %v3291
    %v3293 = vadd.f32 %v3292, 1.0
    %v3294 = vrcp.pop %v3293
    %v3295 = vmul.f32 1.0, %v3294
    %v3296 = vxor.u32 %v3263, 2147483648
    %v3297 = vmul.f32 %v3296, 1.442695
    %v3298 = vpow.pop %v3297
    %v3299 = vadd.f32 %v3298, 1.0
    %v3300 = vrcp.pop %v3299
    %v3301 = vmul.f32 1.0, %v3300
    %v3302 = vtanh.pop %v3264
    %v3303 = vxor.u32 %v3265, 2147483648
    %v3304 = vmul.f32 %v3303, 1.442695
    %v3305 = vpow.pop %v3304
    %v3306 = vadd.f32 %v3305, 1.0
    %v3307 = vrcp.pop %v3306
    %v3308 = vmul.f32 1.0, %v3307
    %v3309 = vmul.f32 %v3301, %v2955
    %v3310 = vmul.f32 %v3295, %v3302
    %v3311 = vadd.f32 %v3309, %v3310
    %v3312 = vtanh.pop %v3311
    %v3313 = vmul.f32 %v3308, %v3312
    %s3314 = scalar_lea.vmem [#allocation9], 48
    %3315 = vst [vmem:[%s3314] sm:$0xff] %v3289
    %s3316 = scalar_lea.vmem [#allocation10], 8
    %3317 = vst [vmem:[%s3316] sm:$0xff] %v3313
    %s3318 = smul.addr %s972, 8
    %s3319 = scalar_lea.vmem [#allocation2], %s3318
    %v3320 = vld [vmem:[%s3319] sm:$0xff]
    %v3321 = vld [vmem:[%s3319 + $0x8] sm:$0xff]
    %v3322 = vld [vmem:[%s3319 + $0x10] sm:$0xff]
    %v3323 = vld [vmem:[%s3319 + $0x18] sm:$0xff]
    %3324 = vmatprep.subr.mxu0 %v752
    %3325 = vmatpush1.msra.mxu0 %v751
    %3326 = vmatprep.subr.mxu0 %v748
    %3327 = vmatpush1.msra.mxu0 %v747
    %3328 = vmatprep.subr.mxu0 %v744
    %3329 = vmatpush1.msra.mxu0 %v743
    %3330 = vmatprep.subr.mxu0 %v740
    %3331 = vmatpush1.msra.mxu0 %v739
    %3332 = vmatprep.subr.mxu0 %v736
    %3333 = vmatpush1.msra.mxu0 %v735
    %3334 = vmatprep.subr.mxu0 %v732
    %3335 = vmatpush1.msra.mxu0 %v731
    %3336 = vmatprep.subr.mxu0 %v728
    %3337 = vmatpush1.msra.mxu0 %v727
    %3338 = vmatprep.subr.mxu0 %v724
    %3339 = vmatpush1.msra.mxu0 %v723
    %3340 = vmatprep.subr.mxu0 %v720
    %3341 = vmatpush1.msra.mxu0 %v719
    %3342 = vmatprep.subr.mxu0 %v716
    %3343 = vmatpush1.msra.mxu0 %v715
    %3344 = vmatprep.subr.mxu0 %v712
    %3345 = vmatpush1.msra.mxu0 %v711
    %3346 = vmatprep.subr.mxu0 %v708
    %3347 = vmatpush1.msra.mxu0 %v707
    %3348 = vmatprep.subr.mxu0 %v704
    %3349 = vmatpush1.msra.mxu0 %v703
    %3350 = vmatprep.subr.mxu0 %v700
    %3351 = vmatpush1.msra.mxu0 %v699
    %3352 = vmatprep.subr.mxu0 %v696
    %3353 = vmatpush1.msra.mxu0 %v695
    %3354 = vmatprep.subr.mxu0 %v692
    %3355 = vmatpush1.msra.mxu0 %v691
    %3356 = vmatprep.subr.mxu0 0.0
    %3357 = vmatpush2.msra.mxu0 0.0
    %3358 = vmatprep.subr.mxu0 0.0
    %3359 = vmatpush2.msra.mxu0 0.0
    %3360 = vmatprep.subr.mxu0 0.0
    %3361 = vmatpush2.msra.mxu0 0.0
    %3362 = vmatprep.subr.mxu0 0.0
    %3363 = vmatpush2.msra.mxu0 0.0
    %3364 = vmatprep.subr.mxu0 0.0
    %3365 = vmatpush2.msra.mxu0 0.0
    %3366 = vmatprep.subr.mxu0 0.0
    %3367 = vmatpush2.msra.mxu0 0.0
    %3368 = vmatprep.subr.mxu0 0.0
    %3369 = vmatpush2.msra.mxu0 0.0
    %3370 = vmatprep.subr.mxu0 0.0
    %3371 = vmatpush2.msra.mxu0 0.0
    %3372 = vmatprep.subr.mxu0 0.0
    %3373 = vmatpush2.msra.mxu0 0.0
    %3374 = vmatprep.subr.mxu0 0.0
    %3375 = vmatpush2.msra.mxu0 0.0
    %3376 = vmatprep.subr.mxu0 0.0
    %3377 = vmatpush2.msra.mxu0 0.0
    %3378 = vmatprep.subr.mxu0 0.0
    %3379 = vmatpush2.msra.mxu0 0.0
    %3380 = vmatprep.subr.mxu0 0.0
    %3381 = vmatpush2.msra.mxu0 0.0
    %3382 = vmatprep.subr.mxu0 0.0
    %3383 = vmatpush2.msra.mxu0 0.0
    %3384 = vmatprep.subr.mxu0 0.0
    %3385 = vmatpush2.msra.mxu0 0.0
    %3386 = vmatprep.subr.mxu0 0.0
    %3387 = vmatpush2.msra.mxu0 0.0
    %3388 = vmatprep.mubr.f32.mxu0 0.0
    %3389 = vmatmul.mubr.f32.gmra.mxu0 %v3289
    %v3390 = vpop.f32.mrf.mxu0
    %v3391 = vadd.f32 0.0, %v3390
    %v3392 = vpop.f32.mrf.mxu0
    %v3393 = vadd.f32 0.0, %v3392
    %3394 = vdwg.mxu0
    %3395 = vmatprep.subr.mxu0 %v754
    %3396 = vmatpush1.msra.mxu0 %v753
    %3397 = vmatprep.subr.mxu0 %v750
    %3398 = vmatpush1.msra.mxu0 %v749
    %3399 = vmatprep.subr.mxu0 %v746
    %3400 = vmatpush1.msra.mxu0 %v745
    %3401 = vmatprep.subr.mxu0 %v742
    %3402 = vmatpush1.msra.mxu0 %v741
    %3403 = vmatprep.subr.mxu0 %v738
    %3404 = vmatpush1.msra.mxu0 %v737
    %3405 = vmatprep.subr.mxu0 %v734
    %3406 = vmatpush1.msra.mxu0 %v733
    %3407 = vmatprep.subr.mxu0 %v730
    %3408 = vmatpush1.msra.mxu0 %v729
    %3409 = vmatprep.subr.mxu0 %v726
    %3410 = vmatpush1.msra.mxu0 %v725
    %3411 = vmatprep.subr.mxu0 %v722
    %3412 = vmatpush1.msra.mxu0 %v721
    %3413 = vmatprep.subr.mxu0 %v718
    %3414 = vmatpush1.msra.mxu0 %v717
    %3415 = vmatprep.subr.mxu0 %v714
    %3416 = vmatpush1.msra.mxu0 %v713
    %3417 = vmatprep.subr.mxu0 %v710
    %3418 = vmatpush1.msra.mxu0 %v709
    %3419 = vmatprep.subr.mxu0 %v706
    %3420 = vmatpush1.msra.mxu0 %v705
    %3421 = vmatprep.subr.mxu0 %v702
    %3422 = vmatpush1.msra.mxu0 %v701
    %3423 = vmatprep.subr.mxu0 %v698
    %3424 = vmatpush1.msra.mxu0 %v697
    %3425 = vmatprep.subr.mxu0 %v694
    %3426 = vmatpush1.msra.mxu0 %v693
    %3427 = vmatprep.subr.mxu0 0.0
    %3428 = vmatpush2.msra.mxu0 0.0
    %3429 = vmatprep.subr.mxu0 0.0
    %3430 = vmatpush2.msra.mxu0 0.0
    %3431 = vmatprep.subr.mxu0 0.0
    %3432 = vmatpush2.msra.mxu0 0.0
    %3433 = vmatprep.subr.mxu0 0.0
    %3434 = vmatpush2.msra.mxu0 0.0
    %3435 = vmatprep.subr.mxu0 0.0
    %3436 = vmatpush2.msra.mxu0 0.0
    %3437 = vmatprep.subr.mxu0 0.0
    %3438 = vmatpush2.msra.mxu0 0.0
    %3439 = vmatprep.subr.mxu0 0.0
    %3440 = vmatpush2.msra.mxu0 0.0
    %3441 = vmatprep.subr.mxu0 0.0
    %3442 = vmatpush2.msra.mxu0 0.0
    %3443 = vmatprep.subr.mxu0 0.0
    %3444 = vmatpush2.msra.mxu0 0.0
    %3445 = vmatprep.subr.mxu0 0.0
    %3446 = vmatpush2.msra.mxu0 0.0
    %3447 = vmatprep.subr.mxu0 0.0
    %3448 = vmatpush2.msra.mxu0 0.0
    %3449 = vmatprep.subr.mxu0 0.0
    %3450 = vmatpush2.msra.mxu0 0.0
    %3451 = vmatprep.subr.mxu0 0.0
    %3452 = vmatpush2.msra.mxu0 0.0
    %3453 = vmatprep.subr.mxu0 0.0
    %3454 = vmatpush2.msra.mxu0 0.0
    %3455 = vmatprep.subr.mxu0 0.0
    %3456 = vmatpush2.msra.mxu0 0.0
    %3457 = vmatprep.subr.mxu0 0.0
    %3458 = vmatpush2.msra.mxu0 0.0
    %3459 = vmatprep.mubr.f32.mxu0 0.0
    %3460 = vmatmul.mubr.f32.gmra.mxu0 %v3289
    %v3461 = vpop.f32.mrf.mxu0
    %v3462 = vadd.f32 0.0, %v3461
    %v3463 = vpop.f32.mrf.mxu0
    %v3464 = vadd.f32 0.0, %v3463
    %3465 = vdwg.mxu0
    %v3466 = vadd.f32 %v3320, %v3391
    %v3467 = vadd.f32 %v3321, %v3393
    %v3468 = vadd.f32 %v3322, %v3462
    %v3469 = vadd.f32 %v3323, %v3464
    %s3470 = smul.addr %s819, 8
    %s3471 = scalar_lea.vmem [#allocation3], %s3470
    %v3472 = vld [vmem:[%s3471] sm:$0xff]
    %v3473 = vld [vmem:[%s3471 + $0x8] sm:$0xff]
    %v3474 = vld [vmem:[%s3471 + $0x10] sm:$0xff]
    %v3475 = vld [vmem:[%s3471 + $0x18] sm:$0xff]
    %3476 = vmatprep.subr.mxu0 %v816
    %3477 = vmatpush1.msra.mxu0 %v815
    %3478 = vmatprep.subr.mxu0 %v812
    %3479 = vmatpush1.msra.mxu0 %v811
    %3480 = vmatprep.subr.mxu0 %v808
    %3481 = vmatpush1.msra.mxu0 %v807
    %3482 = vmatprep.subr.mxu0 %v804
    %3483 = vmatpush1.msra.mxu0 %v803
    %3484 = vmatprep.subr.mxu0 %v800
    %3485 = vmatpush1.msra.mxu0 %v799
    %3486 = vmatprep.subr.mxu0 %v796
    %3487 = vmatpush1.msra.mxu0 %v795
    %3488 = vmatprep.subr.mxu0 %v792
    %3489 = vmatpush1.msra.mxu0 %v791
    %3490 = vmatprep.subr.mxu0 %v788
    %3491 = vmatpush1.msra.mxu0 %v787
    %3492 = vmatprep.subr.mxu0 %v784
    %3493 = vmatpush1.msra.mxu0 %v783
    %3494 = vmatprep.subr.mxu0 %v780
    %3495 = vmatpush1.msra.mxu0 %v779
    %3496 = vmatprep.subr.mxu0 %v776
    %3497 = vmatpush1.msra.mxu0 %v775
    %3498 = vmatprep.subr.mxu0 %v772
    %3499 = vmatpush1.msra.mxu0 %v771
    %3500 = vmatprep.subr.mxu0 %v768
    %3501 = vmatpush1.msra.mxu0 %v767
    %3502 = vmatprep.subr.mxu0 %v764
    %3503 = vmatpush1.msra.mxu0 %v763
    %3504 = vmatprep.subr.mxu0 %v760
    %3505 = vmatpush1.msra.mxu0 %v759
    %3506 = vmatprep.subr.mxu0 %v756
    %3507 = vmatpush1.msra.mxu0 %v755
    %3508 = vmatprep.subr.mxu0 0.0
    %3509 = vmatpush2.msra.mxu0 0.0
    %3510 = vmatprep.subr.mxu0 0.0
    %3511 = vmatpush2.msra.mxu0 0.0
    %3512 = vmatprep.subr.mxu0 0.0
    %3513 = vmatpush2.msra.mxu0 0.0
    %3514 = vmatprep.subr.mxu0 0.0
    %3515 = vmatpush2.msra.mxu0 0.0
    %3516 = vmatprep.subr.mxu0 0.0
    %3517 = vmatpush2.msra.mxu0 0.0
    %3518 = vmatprep.subr.mxu0 0.0
    %3519 = vmatpush2.msra.mxu0 0.0
    %3520 = vmatprep.subr.mxu0 0.0
    %3521 = vmatpush2.msra.mxu0 0.0
    %3522 = vmatprep.subr.mxu0 0.0
    %3523 = vmatpush2.msra.mxu0 0.0
    %3524 = vmatprep.subr.mxu0 0.0
    %3525 = vmatpush2.msra.mxu0 0.0
    %3526 = vmatprep.subr.mxu0 0.0
    %3527 = vmatpush2.msra.mxu0 0.0
    %3528 = vmatprep.subr.mxu0 0.0
    %3529 = vmatpush2.msra.mxu0 0.0
    %3530 = vmatprep.subr.mxu0 0.0
    %3531 = vmatpush2.msra.mxu0 0.0
    %3532 = vmatprep.subr.mxu0 0.0
    %3533 = vmatpush2.msra.mxu0 0.0
    %3534 = vmatprep.subr.mxu0 0.0
    %3535 = vmatpush2.msra.mxu0 0.0
    %3536 = vmatprep.subr.mxu0 0.0
    %3537 = vmatpush2.msra.mxu0 0.0
    %3538 = vmatprep.subr.mxu0 0.0
    %3539 = vmatpush2.msra.mxu0 0.0
    %3540 = vmatprep.mubr.f32.mxu0 0.0
    %3541 = vmatmul.mubr.f32.gmra.mxu0 %v3313
    %v3542 = vpop.f32.mrf.mxu0
    %v3543 = vadd.f32 0.0, %v3542
    %v3544 = vpop.f32.mrf.mxu0
    %v3545 = vadd.f32 0.0, %v3544
    %3546 = vdwg.mxu0
    %3547 = vmatprep.subr.mxu0 %v818
    %3548 = vmatpush1.msra.mxu0 %v817
    %3549 = vmatprep.subr.mxu0 %v814
    %3550 = vmatpush1.msra.mxu0 %v813
    %3551 = vmatprep.subr.mxu0 %v810
    %3552 = vmatpush1.msra.mxu0 %v809
    %3553 = vmatprep.subr.mxu0 %v806
    %3554 = vmatpush1.msra.mxu0 %v805
    %3555 = vmatprep.subr.mxu0 %v802
    %3556 = vmatpush1.msra.mxu0 %v801
    %3557 = vmatprep.subr.mxu0 %v798
    %3558 = vmatpush1.msra.mxu0 %v797
    %3559 = vmatprep.subr.mxu0 %v794
    %3560 = vmatpush1.msra.mxu0 %v793
    %3561 = vmatprep.subr.mxu0 %v790
    %3562 = vmatpush1.msra.mxu0 %v789
    %3563 = vmatprep.subr.mxu0 %v786
    %3564 = vmatpush1.msra.mxu0 %v785
    %3565 = vmatprep.subr.mxu0 %v782
    %3566 = vmatpush1.msra.mxu0 %v781
    %3567 = vmatprep.subr.mxu0 %v778
    %3568 = vmatpush1.msra.mxu0 %v777
    %3569 = vmatprep.subr.mxu0 %v774
    %3570 = vmatpush1.msra.mxu0 %v773
    %3571 = vmatprep.subr.mxu0 %v770
    %3572 = vmatpush1.msra.mxu0 %v769
    %3573 = vmatprep.subr.mxu0 %v766
    %3574 = vmatpush1.msra.mxu0 %v765
    %3575 = vmatprep.subr.mxu0 %v762
    %3576 = vmatpush1.msra.mxu0 %v761
    %3577 = vmatprep.subr.mxu0 %v758
    %3578 = vmatpush1.msra.mxu0 %v757
    %3579 = vmatprep.subr.mxu0 0.0
    %3580 = vmatpush2.msra.mxu0 0.0
    %3581 = vmatprep.subr.mxu0 0.0
    %3582 = vmatpush2.msra.mxu0 0.0
    %3583 = vmatprep.subr.mxu0 0.0
    %3584 = vmatpush2.msra.mxu0 0.0
    %3585 = vmatprep.subr.mxu0 0.0
    %3586 = vmatpush2.msra.mxu0 0.0
    %3587 = vmatprep.subr.mxu0 0.0
    %3588 = vmatpush2.msra.mxu0 0.0
    %3589 = vmatprep.subr.mxu0 0.0
    %3590 = vmatpush2.msra.mxu0 0.0
    %3591 = vmatprep.subr.mxu0 0.0
    %3592 = vmatpush2.msra.mxu0 0.0
    %3593 = vmatprep.subr.mxu0 0.0
    %3594 = vmatpush2.msra.mxu0 0.0
    %3595 = vmatprep.subr.mxu0 0.0
    %3596 = vmatpush2.msra.mxu0 0.0
    %3597 = vmatprep.subr.mxu0 0.0
    %3598 = vmatpush2.msra.mxu0 0.0
    %3599 = vmatprep.subr.mxu0 0.0
    %3600 = vmatpush2.msra.mxu0 0.0
    %3601 = vmatprep.subr.mxu0 0.0
    %3602 = vmatpush2.msra.mxu0 0.0
    %3603 = vmatprep.subr.mxu0 0.0
    %3604 = vmatpush2.msra.mxu0 0.0
    %3605 = vmatprep.subr.mxu0 0.0
    %3606 = vmatpush2.msra.mxu0 0.0
    %3607 = vmatprep.subr.mxu0 0.0
    %3608 = vmatpush2.msra.mxu0 0.0
    %3609 = vmatprep.subr.mxu0 0.0
    %3610 = vmatpush2.msra.mxu0 0.0
    %3611 = vmatprep.mubr.f32.mxu0 0.0
    %3612 = vmatmul.mubr.f32.gmra.mxu0 %v3313
    %v3613 = vpop.f32.mrf.mxu0
    %v3614 = vadd.f32 0.0, %v3613
    %v3615 = vpop.f32.mrf.mxu0
    %v3616 = vadd.f32 0.0, %v3615
    %3617 = vdwg.mxu0
    %v3618 = vadd.f32 %v3472, %v3543
    %v3619 = vadd.f32 %v3473, %v3545
    %v3620 = vadd.f32 %v3474, %v3614
    %v3621 = vadd.f32 %v3475, %v3616
    %v3622 = vxor.u32 %v3466, 2147483648
    %v3623 = vmul.f32 %v3622, 1.442695
    %v3624 = vpow.pop %v3623
    %v3625 = vadd.f32 %v3624, 1.0
    %v3626 = vrcp.pop %v3625
    %v3627 = vmul.f32 1.0, %v3626
    %v3628 = vxor.u32 %v3467, 2147483648
    %v3629 = vmul.f32 %v3628, 1.442695
    %v3630 = vpow.pop %v3629
    %v3631 = vadd.f32 %v3630, 1.0
    %v3632 = vrcp.pop %v3631
    %v3633 = vmul.f32 1.0, %v3632
    %v3634 = vtanh.pop %v3468
    %v3635 = vxor.u32 %v3469, 2147483648
    %v3636 = vmul.f32 %v3635, 1.442695
    %v3637 = vpow.pop %v3636
    %v3638 = vadd.f32 %v3637, 1.0
    %v3639 = vrcp.pop %v3638
    %v3640 = vmul.f32 1.0, %v3639
    %v3641 = vmul.f32 %v3633, %v3287
    %v3642 = vmul.f32 %v3627, %v3634
    %v3643 = vadd.f32 %v3641, %v3642
    %v3644 = vtanh.pop %v3643
    %v3645 = vmul.f32 %v3640, %v3644
    %v3646 = vxor.u32 %v3618, 2147483648
    %v3647 = vmul.f32 %v3646, 1.442695
    %v3648 = vpow.pop %v3647
    %v3649 = vadd.f32 %v3648, 1.0
    %v3650 = vrcp.pop %v3649
    %v3651 = vmul.f32 1.0, %v3650
    %v3652 = vxor.u32 %v3619, 2147483648
    %v3653 = vmul.f32 %v3652, 1.442695
    %v3654 = vpow.pop %v3653
    %v3655 = vadd.f32 %v3654, 1.0
    %v3656 = vrcp.pop %v3655
    %v3657 = vmul.f32 1.0, %v3656
    %v3658 = vtanh.pop %v3620
    %v3659 = vxor.u32 %v3621, 2147483648
    %v3660 = vmul.f32 %v3659, 1.442695
    %v3661 = vpow.pop %v3660
    %v3662 = vadd.f32 %v3661, 1.0
    %v3663 = vrcp.pop %v3662
    %v3664 = vmul.f32 1.0, %v3663
    %v3665 = vmul.f32 %v3657, %v3311
    %v3666 = vmul.f32 %v3651, %v3658
    %v3667 = vadd.f32 %v3665, %v3666
    %v3668 = vtanh.pop %v3667
    %v3669 = vmul.f32 %v3664, %v3668
    %s3670 = scalar_lea.vmem [#allocation9], 56
    %3671 = vst [vmem:[%s3670] sm:$0xff] %v3645
    %3672 = vst [vmem:[#allocation10] sm:$0xff] %v3669
    // Predicated region
    $region38: #{tpu_custom_call.1} parent=1 // pred_check
      _
    $region39: #{tpu_custom_call.1} parent=1 // pred_check_branch
      %3674 = sbr.rel (0) target = $region41
    $region40: #{tpu_custom_call.1} parent=1 // pred_region
      %s3676 = ssub.s32 1024, 1024
      %3677 = vsyncadd [#allocation6], %s3676
      %s3678 = sshll.u32 [#allocation9], 4
      %s3679 = int_to_ptr.vmem [resolvable:$true] %s3678
      %3684 = dma.vmem_to_hbm [thread:$0]  %s3679, 1024, %s7, [#allocation6], 128, 128, 8
    $region41: #{tpu_custom_call.1} parent=1 // pred_fallthru
      _
    // Predicated region
    $region42: #{tpu_custom_call.1} parent=1 // pred_check
      _
    $region43: #{tpu_custom_call.1} parent=1 // pred_check_branch
      %3686 = sbr.rel (0) target = $region45
    $region44: #{tpu_custom_call.1} parent=1 // pred_region
      %s3688 = ssub.s32 1024, 1024
      %3689 = vsyncadd [#allocation11], %s3688
      %s3690 = sshll.u32 [#allocation10], 4
      %s3691 = int_to_ptr.vmem [resolvable:$true] %s3690
      %3696 = dma.vmem_to_hbm [thread:$0]  %s3691, 1024, %s8, [#allocation11], 128, 128, 8
    $region45: #{tpu_custom_call.1} parent=1 // pred_fallthru
      _
    // Predicated region
    $region46: #{tpu_custom_call.1} parent=1 // pred_check
      _
    $region47: #{tpu_custom_call.1} parent=1 // pred_check_branch
      %3698 = sbr.rel (0) target = $region49
    $region48: #{tpu_custom_call.1} parent=1 // pred_region
      %3699 = dma.done [#allocation6], 1024
    $region49: #{tpu_custom_call.1} parent=1 // pred_fallthru
      _
    // Predicated region
    $region50: #{tpu_custom_call.1} parent=1 // pred_check
      _
    $region51: #{tpu_custom_call.1} parent=1 // pred_check_branch
      %3701 = sbr.rel (0) target = $region53
    $region52: #{tpu_custom_call.1} parent=1 // pred_region
      %3702 = dma.done [#allocation11], 1024
    $region53: #{tpu_custom_call.1} parent=1 // pred_fallthru
      _
    %3703 = vsyncpa [#allocation5], 1
    %3704 = vsyncpa [#allocation8], 1
    %3705 = vsyncpa [#allocation6], 1
    %3706 = vsyncpa [#allocation11], 1

</llo_original>
